<compile_context>
chip_gen: v7x
topology: tpu7x:2x2x1
jax: 0.10.0
libtpu: 0.0.40
codegen_flags: <defaults>
</compile_context>

<pallas_src>
import math

import jax
import jax.numpy as jnp
import numpy as np
from jax.experimental import pallas as pl
from jax.experimental.pallas import tpu as pltpu


def _round_up(x, m):
    return ((x + m - 1) // m) * m


# ----------------------------------------------------------------------------
# Pallas kernel (built per static model configuration)
# ----------------------------------------------------------------------------
def make_wilson_kernel(expo_static, taylor_static, nc):
    expo_list = [float(e) for e in np.asarray(expo_static).reshape(-1)]
    if taylor_static is None:
        taylor_list = [1.0] * len(expo_list)
    else:
        taylor_list = [float(t) for t in np.asarray(taylor_static).reshape(-1)]
    M = len(expo_list)
    n_pairs = nc * nc
    R = 2 * M + 4                      # rows in the per-pair table

    def kernel(pid_ref, dat_ref, tbl_ref, out_ref):
        pid = pid_ref[...]             # (8, L) int32, pair id = i*NC + j
        invT = dat_ref[0]              # (8, L)
        r = dat_ref[1]
        NAa = dat_ref[2]
        NAd = dat_ref[3]
        rhoAap = dat_ref[4]
        rhoAdp = dat_ref[5]
        rhoBam = dat_ref[6]
        rhoBdm = dat_ref[7]

        # ---- gather the 2M+4 per-pair constants: static select loop over
        # the nc*nc class pairs (jnp.where form, initialized from pair 0).
        zero = jnp.zeros_like(invT)
        accs = [tbl_ref[rw, 0] + zero for rw in range(R)]
        for p in range(1, n_pairs):
            sel = pid == p
            for rw in range(R):
                accs[rw] = jnp.where(sel, tbl_ref[rw, p], accs[rw])
        gij = accs[0:M]
        gji = accs[M:2 * M]
        dAaAd, dBaBd, dAaBd, dAdBa = accs[2 * M:2 * M + 4]

        # ---- Wilson residual term (K/M parameter work already folded) -------
        int_ok = [float(e).is_integer() and 0.0 <= e <= 8.0 for e in expo_list]
        max_p = max([int(e) for e, ok in zip(expo_list, int_ok) if ok] or [0])
        pows = [None]                                  # invT**0 == 1
        cur = None
        for _ in range(max_p):
            cur = invT if cur is None else cur * invT  # shared repeated mults
            pows.append(cur)

        u_ij = None
        u_ji = None
        for m in range(M):
            e, tc = expo_list[m], taylor_list[m]
            if int_ok[m]:
                pe = pows[int(e)]
                w = tc if pe is None else tc * pe
            else:
                w = tc * (invT ** e)                   # general fall-back (EUP)
            t_ij = gij[m] * w
            t_ji = gji[m] * w
            u_ij = t_ij if u_ij is None else u_ij + t_ij
            u_ji = t_ji if u_ji is None else u_ji + t_ji
        result = r * (1.0 + u_ji - jnp.exp(-u_ij))

        # ---- Wertheim association term ---------------------------------------
        dref = 0.034 * (jnp.exp(1960.0 * invT) - 1.0)
        D_AaAd = dAaAd * dref
        D_BaBd = dBaBd * dref
        D_AaBd = dAaBd * dref
        D_AdBa = dAdBa * dref

        def pair_x(Dpair, rho_a, rho_d):
            mask_a = rho_a == 0.0
            mask_d = rho_d == 0.0
            a = Dpair * rho_a
            d = Dpair * rho_d
            adj_a = jnp.where(mask_a, 1.0, a)
            adj_d = jnp.where(mask_d, 1.0, d)
            inv2a = 0.5 / adj_a                        # single divide per X
            inv2d = 0.5 / adj_d
            sa = jnp.sqrt(adj_a * adj_a - 2.0 * adj_a * (adj_d - 1.0)
                          + (adj_d + 1.0) ** 2)
            sd = jnp.sqrt(adj_d * adj_d - 2.0 * adj_d * (adj_a - 1.0)
                          + (adj_a + 1.0) ** 2)
            # rho_d/(2 rho_a) == d/(2 adj_a) on unmasked lanes (Dpair cancels);
            # masked lanes are overwritten by the where below.
            Xa_tmp = 0.5 + inv2a * (sa - d - 1.0)
            Xd_tmp = 0.5 + inv2d * (sd - a - 1.0)
            Xa = jnp.where(mask_d, 1.0, jnp.where(mask_a, 2.0 * inv2d, Xa_tmp))
            Xd = jnp.where(mask_a, 1.0, jnp.where(mask_d, 2.0 * inv2a, Xd_tmp))
            return Xa, Xd

        XaBm, XdBm = pair_x(D_BaBd, rhoBam, rhoBdm)
        XaAp, XdAp = pair_x(D_AaAd, rhoAap, rhoAdp)

        # log(XaAm / XaAp) with XaAm = 1/(1 + t)  ==>  -log((1 + t) * XaAp)
        den_a = (1.0 + D_AaBd * rhoBdm * XdBm) * XaAp
        den_d = (1.0 + D_AdBa * rhoBam * XaBm) * XdAp
        termAa = jnp.where(NAa == 0.0, 0.0,
                           NAa * ((XaAp - 1.0) * 0.5 - jnp.log(den_a)))
        termAd = jnp.where(NAd == 0.0, 0.0,
                           NAd * ((XdAp - 1.0) * 0.5 - jnp.log(den_d)))
        termB = r * (rhoBam * (1.0 - XaBm) * 0.5 + rhoBdm * (1.0 - XdBm) * 0.5)

        out_ref[...] = termAa + termAd + termB + result

    return kernel


# ----------------------------------------------------------------------------
# Wrapper: parameter preprocessing, batch layout, grid + pallas_call
# ----------------------------------------------------------------------------
def wilson_forward(params, i, j, invT, r, qA, qB, N, rho, *, tile_b=4096):
    A, T, O, D, expo, taylor = params
    del qA, qB   # present in the torch signature but unused by the forward math
    A = jnp.asarray(A, jnp.float32)
    T = jnp.asarray(T, jnp.float32)
    O = jnp.asarray(O, jnp.float32)
    D = jnp.asarray(D, jnp.float32)
    B = int(jnp.shape(i)[0])
    NC, K = A.shape
    M = T.shape[1]

    # ---- grid-invariant parameter preprocessing (hoisted out of the kernel) -
    smO = jax.nn.softmax(O, axis=1)                    # (K, 2)
    smT = jax.nn.softmax(T, axis=1)                    # (K, M)
    Dsp = jax.nn.softplus(D)                           # (NC, 2)

    hi = jax.lax.Precision.HIGHEST
    Ai = A[:, None, :]                                 # (NC, 1, K)
    Aj = A[None, :, :]                                 # (1, NC, K)
    Ai_c = jnp.maximum(Ai, 0.0)
    Aj_c = jnp.maximum(Aj, 0.0)
    A_comb = Ai_c * Aj_c * smO[:, 0] + (Ai - Aj) ** 2 * smO[:, 1]   # (NC,NC,K)
    A_self = jnp.maximum(A, 0.0) ** 2 * smO[:, 0]                    # (NC, K)
    Act = jnp.einsum('ijk,km->ijm', A_comb, smT, precision=hi)       # (NC,NC,M)
    Pself = jnp.dot(A_self, smT, precision=hi)                       # (NC, M)
    Gij = Act - Pself[None, :, :]       # subtracts p_j (j = second class index)
    Gji = Act - Pself[:, None, :]       # subtracts p_i

    dprod = Dsp[:, 0] * Dsp[:, 1]                                    # (NC,)
    rows = [Gij[:, :, m].reshape(-1) for m in range(M)]
    rows += [Gji[:, :, m].reshape(-1) for m in range(M)]
    rows.append(jnp.broadcast_to(dprod[:, None], (NC, NC)).reshape(-1))  # D[i,0]D[i,1]
    rows.append(jnp.broadcast_to(dprod[None, :], (NC, NC)).reshape(-1))  # D[j,0]D[j,1]
    rows.append((Dsp[:, 0][:, None] * Dsp[:, 1][None, :]).reshape(-1))   # D[i,0]D[j,1]
    rows.append((Dsp[:, 1][:, None] * Dsp[:, 0][None, :]).reshape(-1))   # D[j,0]D[i,1]
    tbl = jnp.stack(rows, axis=0).astype(jnp.float32)                # (2M+4, NC*NC)

    # ---- batch layout: samples on sublanes AND lanes ((8, TB/8) blocks) -----
    TB = max(1024, (int(tile_b) // 1024) * 1024)       # multiple of 8*128
    B_pad = _round_up(B, 1024)
    if B_pad <= TB:
        if B_pad >= 2048 and B_pad % 2048 == 0:
            TB = B_pad // 2          # keep >= 2 blocks for the two v7x TCs
        else:
            TB = B_pad
    else:
        B_pad = _round_up(B_pad, TB)
    n_blk = B_pad // TB
    L = TB // 8
    cols = B_pad // 8

    def lay(x, dtype):
        x = jnp.asarray(x, dtype).reshape(-1)
        x = jnp.pad(x, (0, B_pad - B))
        return x.reshape(8, cols)

    pid = jnp.asarray(i, jnp.int32) * NC + jnp.asarray(j, jnp.int32)
    pid2 = lay(pid, jnp.int32)

    invT_f = jnp.asarray(invT, jnp.float32).reshape(B)
    r_f = jnp.asarray(r, jnp.float32).reshape(B)
    N_f = jnp.asarray(N, jnp.float32).reshape(B, 2)
    rho_f = jnp.asarray(rho, jnp.float32).reshape(B, 4)
    fields = [invT_f, r_f, N_f[:, 0], N_f[:, 1],
              rho_f[:, 0], rho_f[:, 1], rho_f[:, 2], rho_f[:, 3]]
    dat = jnp.stack([lay(f, jnp.float32) for f in fields], axis=0)   # (8,8,cols)

    kernel = make_wilson_kernel(expo, taylor, NC)

    out = pl.pallas_call(
        kernel,
        out_shape=jax.ShapeDtypeStruct((8, cols), jnp.float32),
        grid=(n_blk,),
        in_specs=[
            pl.BlockSpec((8, L), lambda b: (0, b)),             # pair ids
            pl.BlockSpec((8, 8, L), lambda b: (0, 0, b)),       # packed samples
            pl.BlockSpec(memory_space=pltpu.MemorySpace.SMEM),  # pair table
        ],
        out_specs=pl.BlockSpec((8, L), lambda b: (0, b)),
        compiler_params=pltpu.CompilerParams(
            dimension_semantics=("parallel",)),
    )(pid2, dat, tbl)

    return out.reshape(B_pad)[:B].reshape(B, 1)


# ----------------------------------------------------------------------------
# Pure-JAX reference (mirrors the PyTorch module) for validation
# ----------------------------------------------------------------------------
def wilson_reference(params, i, j, invT, r, qA, qB, N, rho):
    A, T, O, D, expo, taylor = params
    A_i, A_j = A[i], A[j]
    smO = jax.nn.softmax(O, axis=1)                    # (K, 2)
    smT = jax.nn.softmax(T, axis=1)                    # (K, M)

    A_i_c, A_j_c = jnp.maximum(A_i, 0.0), jnp.maximum(A_j, 0.0)
    A_comb = A_i_c * A_j_c * smO[:, 0] + (A_i - A_j) ** 2 * smO[:, 1]
    A_i_comb = A_i_c * A_i_c * smO[:, 0]
    A_j_comb = A_j_c * A_j_c * smO[:, 0]

    dot = lambda x, w: jnp.dot(x, w, precision=jax.lax.Precision.HIGHEST)
    Act, p_i, p_j = dot(A_comb, smT), dot(A_i_comb, smT), dot(A_j_comb, smT)

    Tmat = invT ** jnp.asarray(expo, jnp.float32)
    if taylor is not None:
        Tmat = Tmat * jnp.asarray(taylor, jnp.float32)
    u_ij = jnp.sum((Act - p_j) * Tmat, axis=1, keepdims=True)
    u_ji = jnp.sum((Act - p_i) * Tmat, axis=1, keepdims=True)
    result = r * (1.0 + u_ji - jnp.exp(-u_ij))

    # Wertheim
    invT_f, r_f = invT[:, 0], r[:, 0]
    rhoAap, rhoAdp, rhoBam, rhoBdm = rho[:, 0], rho[:, 1], rho[:, 2], rho[:, 3]
    NAa, NAd = N[:, 0], N[:, 1]
    dref = 0.034 * (jnp.exp(1960.0 * invT_f) - 1.0)
    Dsp = jax.nn.softplus(D)
    D_AaAd = Dsp[i, 0] * Dsp[i, 1] * dref
    D_BaBd = Dsp[j, 0] * Dsp[j, 1] * dref
    D_AaBd = Dsp[i, 0] * Dsp[j, 1] * dref
    D_AdBa = Dsp[j, 0] * Dsp[i, 1] * dref

    def pair_X(Dpair, ra, rd):
        a, d = Dpair * ra, Dpair * rd
        ma, md = ra == 0, rd == 0
        aa, ad = jnp.where(ma, 1.0, a), jnp.where(md, 1.0, d)
        Xa_t = (jnp.sqrt(aa**2 - 2 * aa * (ad - 1) + (ad + 1) ** 2) / (2 * aa)
                + 0.5 - rd / (2 * ra) - 1 / (2 * aa))
        Xd_t = (jnp.sqrt(ad**2 - 2 * ad * (aa - 1) + (aa + 1) ** 2) / (2 * ad)
                + 0.5 - ra / (2 * rd) - 1 / (2 * ad))
        Xa = jnp.where(md, 1.0, jnp.where(ma, 1.0 / ad, Xa_t))
        Xd = jnp.where(ma, 1.0, jnp.where(md, 1.0 / aa, Xd_t))
        return Xa, Xd

    XaBm, XdBm = pair_X(D_BaBd, rhoBam, rhoBdm)
    XaAp, XdAp = pair_X(D_AaAd, rhoAap, rhoAdp)
    XaAm = 1.0 / (1.0 + D_AaBd * rhoBdm * XdBm)
    XdAm = 1.0 / (1.0 + D_AdBa * rhoBam * XaBm)
    termAa = jnp.where(NAa == 0, 0.0,
                       NAa * (jnp.log(XaAm / XaAp) + (XaAp - 1) / 2))
    termAd = jnp.where(NAd == 0, 0.0,
                       NAd * (jnp.log(XdAm / XdAp) + (XdAp - 1) / 2))
    termB = r_f * (rhoBam * (1 - XaBm) / 2 + rhoBdm * (1 - XdBm) / 2)
    asc = (termAa + termAd + termB)[:, None]
    return asc + result


# ----------------------------------------------------------------------------
if __name__ == "__main__":
    NC, K, M = 6, 8, 4   # components, features, temperature terms

    key = jax.random.PRNGKey(0)
    kp = jax.random.split(key, 4)

    # Deterministic "parameters" (shapes implied by Wilson.__init__).
    A = 0.5 * jax.random.normal(kp[0], (NC, K), jnp.float32)      # A_initial
    T = 0.5 * jax.random.normal(kp[1], (K, M), jnp.float32)       # T_initial
    O = 0.5 * jax.random.normal(kp[2], (K, 2), jnp.float32)       # O_initial
    D = 0.5 * jax.random.normal(kp[3], (NC, 2), jnp.float32)      # D_initial

    # temp_exponents with min==0, max>0  -> Taylor-coefficient branch.
    temp_exponents = np.array([0, 1, 2, 3], dtype=np.float32)
    expo = temp_exponents[None, :]                                 # (1, M) static
    taylor = (1.0 / np.array([math.factorial(int(abs(e))) for e in temp_exponents],
                             dtype=np.float32))[None, :]           # (1, M) static
    params = (A, T, O, D, expo, taylor)

    # B=200 -> single (8, 128) padded block; B=1500 -> 2-block parallel grid.
    for B in (200, 1500):
        ks = jax.random.split(jax.random.fold_in(key, B), 8)
        i = jax.random.randint(ks[0], (B,), 0, NC)
        j = jax.random.randint(ks[1], (B,), 0, NC)
        invT = 1.0 / (300.0 + 100.0 * jax.random.uniform(ks[2], (B, 1), jnp.float32))
        r = 1.0 + 2.0 * jax.random.uniform(ks[3], (B, 1), jnp.float32)
        qA = jax.random.uniform(ks[4], (B, 1), jnp.float32)
        qB = jax.random.uniform(ks[5], (B, 1), jnp.float32)
        N = jax.random.randint(ks[6], (B, 2), 0, 3).astype(jnp.float32)
        rho = 0.05 * jax.random.uniform(ks[7], (B, 4), jnp.float32)
        # exercise the zero masks in the Wertheim term
        rho = (rho.at[0, 2].set(0.0).at[1, 3].set(0.0)
                  .at[2, 0].set(0.0).at[3, 1].set(0.0)
                  .at[4, 2].set(0.0).at[4, 3].set(0.0))

        out = wilson_forward(params, i, j, invT, r, qA, qB, N, rho)
        out = jax.block_until_ready(out)

        ref = wilson_reference(params, i, j, invT, r, qA, qB, N, rho)
        np.testing.assert_allclose(np.asarray(out), np.asarray(ref),
                                   rtol=1e-3, atol=2e-4)

    print("KERNEL_OK")
</pallas_src>

<mosaic_0001>
module attributes {stable_mosaic.version = 11 : i64} {
  func.func @kernel(%arg0: i32, %arg1: memref<8x128xi32, #tpu.memory_space<vmem>>, %arg2: memref<8x8x128xf32, #tpu.memory_space<vmem>>, %arg3: memref<12x36xf32, #tpu.memory_space<smem>>, %arg4: memref<8x128xf32, #tpu.memory_space<vmem>>) attributes {dimension_semantics = [#tpu.dimension_semantics<parallel>], iteration_bounds = array<i64: 1>, scalar_prefetch = 0 : i64, scratch_operands = 0 : i64, tpu.core_type = #tpu.core_type<tc>, window_params = [{transform_indices = @transform_0, window_bounds = array<i64: 8, 128>}, {transform_indices = @transform_1, window_bounds = array<i64: 8, 8, 128>}, {transform_indices = @transform_2, window_bounds = array<i64: 12, 36>}, {transform_indices = @transform_3, window_bounds = array<i64: 8, 128>}]} {
    %c0 = arith.constant 0 : index
    %c0_0 = arith.constant 0 : index
    %0 = vector.load %arg1[%c0, %c0_0] : memref<8x128xi32, #tpu.memory_space<vmem>>, vector<8x128xi32>
    %c0_1 = arith.constant 0 : index
    %c0_2 = arith.constant 0 : index
    %c0_3 = arith.constant 0 : index
    %1 = vector.load %arg2[%c0_1, %c0_2, %c0_3] : memref<8x8x128xf32, #tpu.memory_space<vmem>>, vector<1x8x128xf32>
    %2 = vector.shape_cast %1 : vector<1x8x128xf32> to vector<8x128xf32>
    %c1 = arith.constant 1 : index
    %c0_4 = arith.constant 0 : index
    %c0_5 = arith.constant 0 : index
    %3 = vector.load %arg2[%c1, %c0_4, %c0_5] : memref<8x8x128xf32, #tpu.memory_space<vmem>>, vector<1x8x128xf32>
    %4 = vector.shape_cast %3 : vector<1x8x128xf32> to vector<8x128xf32>
    %c2 = arith.constant 2 : index
    %c0_6 = arith.constant 0 : index
    %c0_7 = arith.constant 0 : index
    %5 = vector.load %arg2[%c2, %c0_6, %c0_7] : memref<8x8x128xf32, #tpu.memory_space<vmem>>, vector<1x8x128xf32>
    %6 = vector.shape_cast %5 : vector<1x8x128xf32> to vector<8x128xf32>
    %c3 = arith.constant 3 : index
    %c0_8 = arith.constant 0 : index
    %c0_9 = arith.constant 0 : index
    %7 = vector.load %arg2[%c3, %c0_8, %c0_9] : memref<8x8x128xf32, #tpu.memory_space<vmem>>, vector<1x8x128xf32>
    %8 = vector.shape_cast %7 : vector<1x8x128xf32> to vector<8x128xf32>
    %c4 = arith.constant 4 : index
    %c0_10 = arith.constant 0 : index
    %c0_11 = arith.constant 0 : index
    %9 = vector.load %arg2[%c4, %c0_10, %c0_11] : memref<8x8x128xf32, #tpu.memory_space<vmem>>, vector<1x8x128xf32>
    %10 = vector.shape_cast %9 : vector<1x8x128xf32> to vector<8x128xf32>
    %c5 = arith.constant 5 : index
    %c0_12 = arith.constant 0 : index
    %c0_13 = arith.constant 0 : index
    %11 = vector.load %arg2[%c5, %c0_12, %c0_13] : memref<8x8x128xf32, #tpu.memory_space<vmem>>, vector<1x8x128xf32>
    %12 = vector.shape_cast %11 : vector<1x8x128xf32> to vector<8x128xf32>
    %c6 = arith.constant 6 : index
    %c0_14 = arith.constant 0 : index
    %c0_15 = arith.constant 0 : index
    %13 = vector.load %arg2[%c6, %c0_14, %c0_15] : memref<8x8x128xf32, #tpu.memory_space<vmem>>, vector<1x8x128xf32>
    %14 = vector.shape_cast %13 : vector<1x8x128xf32> to vector<8x128xf32>
    %c7 = arith.constant 7 : index
    %c0_16 = arith.constant 0 : index
    %c0_17 = arith.constant 0 : index
    %15 = vector.load %arg2[%c7, %c0_16, %c0_17] : memref<8x8x128xf32, #tpu.memory_space<vmem>>, vector<1x8x128xf32>
    %16 = vector.shape_cast %15 : vector<1x8x128xf32> to vector<8x128xf32>
    %cst = arith.constant 0.000000e+00 : f32
    %17 = vector.broadcast %cst : f32 to vector<8x128xf32>
    %c0_18 = arith.constant 0 : index
    %c0_19 = arith.constant 0 : index
    %18 = memref.load %arg3[%c0_18, %c0_19] : memref<12x36xf32, #tpu.memory_space<smem>>
    %19 = vector.broadcast %18 : f32 to vector<8x128xf32>
    %20 = arith.addf %19, %17 : vector<8x128xf32>
    %c1_20 = arith.constant 1 : index
    %c0_21 = arith.constant 0 : index
    %21 = memref.load %arg3[%c1_20, %c0_21] : memref<12x36xf32, #tpu.memory_space<smem>>
    %22 = vector.broadcast %21 : f32 to vector<8x128xf32>
    %23 = arith.addf %22, %17 : vector<8x128xf32>
    %c2_22 = arith.constant 2 : index
    %c0_23 = arith.constant 0 : index
    %24 = memref.load %arg3[%c2_22, %c0_23] : memref<12x36xf32, #tpu.memory_space<smem>>
    %25 = vector.broadcast %24 : f32 to vector<8x128xf32>
    %26 = arith.addf %25, %17 : vector<8x128xf32>
    %c3_24 = arith.constant 3 : index
    %c0_25 = arith.constant 0 : index
    %27 = memref.load %arg3[%c3_24, %c0_25] : memref<12x36xf32, #tpu.memory_space<smem>>
    %28 = vector.broadcast %27 : f32 to vector<8x128xf32>
    %29 = arith.addf %28, %17 : vector<8x128xf32>
    %c4_26 = arith.constant 4 : index
    %c0_27 = arith.constant 0 : index
    %30 = memref.load %arg3[%c4_26, %c0_27] : memref<12x36xf32, #tpu.memory_space<smem>>
    %31 = vector.broadcast %30 : f32 to vector<8x128xf32>
    %32 = arith.addf %31, %17 : vector<8x128xf32>
    %c5_28 = arith.constant 5 : index
    %c0_29 = arith.constant 0 : index
    %33 = memref.load %arg3[%c5_28, %c0_29] : memref<12x36xf32, #tpu.memory_space<smem>>
    %34 = vector.broadcast %33 : f32 to vector<8x128xf32>
    %35 = arith.addf %34, %17 : vector<8x128xf32>
    %c6_30 = arith.constant 6 : index
    %c0_31 = arith.constant 0 : index
    %36 = memref.load %arg3[%c6_30, %c0_31] : memref<12x36xf32, #tpu.memory_space<smem>>
    %37 = vector.broadcast %36 : f32 to vector<8x128xf32>
    %38 = arith.addf %37, %17 : vector<8x128xf32>
    %c7_32 = arith.constant 7 : index
    %c0_33 = arith.constant 0 : index
    %39 = memref.load %arg3[%c7_32, %c0_33] : memref<12x36xf32, #tpu.memory_space<smem>>
    %40 = vector.broadcast %39 : f32 to vector<8x128xf32>
    %41 = arith.addf %40, %17 : vector<8x128xf32>
    %c8 = arith.constant 8 : index
    %c0_34 = arith.constant 0 : index
    %42 = memref.load %arg3[%c8, %c0_34] : memref<12x36xf32, #tpu.memory_space<smem>>
    %43 = vector.broadcast %42 : f32 to vector<8x128xf32>
    %44 = arith.addf %43, %17 : vector<8x128xf32>
    %c9 = arith.constant 9 : index
    %c0_35 = arith.constant 0 : index
    %45 = memref.load %arg3[%c9, %c0_35] : memref<12x36xf32, #tpu.memory_space<smem>>
    %46 = vector.broadcast %45 : f32 to vector<8x128xf32>
    %47 = arith.addf %46, %17 : vector<8x128xf32>
    %c10 = arith.constant 10 : index
    %c0_36 = arith.constant 0 : index
    %48 = memref.load %arg3[%c10, %c0_36] : memref<12x36xf32, #tpu.memory_space<smem>>
    %49 = vector.broadcast %48 : f32 to vector<8x128xf32>
    %50 = arith.addf %49, %17 : vector<8x128xf32>
    %c11 = arith.constant 11 : index
    %c0_37 = arith.constant 0 : index
    %51 = memref.load %arg3[%c11, %c0_37] : memref<12x36xf32, #tpu.memory_space<smem>>
    %52 = vector.broadcast %51 : f32 to vector<8x128xf32>
    %53 = arith.addf %52, %17 : vector<8x128xf32>
    %c1_i32 = arith.constant 1 : i32
    %54 = vector.broadcast %c1_i32 : i32 to vector<8x128xi32>
    %55 = arith.cmpi eq, %0, %54 : vector<8x128xi32>
    %c0_38 = arith.constant 0 : index
    %c1_39 = arith.constant 1 : index
    %56 = memref.load %arg3[%c0_38, %c1_39] : memref<12x36xf32, #tpu.memory_space<smem>>
    %57 = vector.broadcast %56 : f32 to vector<8x128xf32>
    %58 = arith.select %55, %57, %20 : vector<8x128xi1>, vector<8x128xf32>
    %c1_40 = arith.constant 1 : index
    %c1_41 = arith.constant 1 : index
    %59 = memref.load %arg3[%c1_40, %c1_41] : memref<12x36xf32, #tpu.memory_space<smem>>
    %60 = vector.broadcast %59 : f32 to vector<8x128xf32>
    %61 = arith.select %55, %60, %23 : vector<8x128xi1>, vector<8x128xf32>
    %c2_42 = arith.constant 2 : index
    %c1_43 = arith.constant 1 : index
    %62 = memref.load %arg3[%c2_42, %c1_43] : memref<12x36xf32, #tpu.memory_space<smem>>
    %63 = vector.broadcast %62 : f32 to vector<8x128xf32>
    %64 = arith.select %55, %63, %26 : vector<8x128xi1>, vector<8x128xf32>
    %c3_44 = arith.constant 3 : index
    %c1_45 = arith.constant 1 : index
    %65 = memref.load %arg3[%c3_44, %c1_45] : memref<12x36xf32, #tpu.memory_space<smem>>
    %66 = vector.broadcast %65 : f32 to vector<8x128xf32>
    %67 = arith.select %55, %66, %29 : vector<8x128xi1>, vector<8x128xf32>
    %c4_46 = arith.constant 4 : index
    %c1_47 = arith.constant 1 : index
    %68 = memref.load %arg3[%c4_46, %c1_47] : memref<12x36xf32, #tpu.memory_space<smem>>
    %69 = vector.broadcast %68 : f32 to vector<8x128xf32>
    %70 = arith.select %55, %69, %32 : vector<8x128xi1>, vector<8x128xf32>
    %c5_48 = arith.constant 5 : index
    %c1_49 = arith.constant 1 : index
    %71 = memref.load %arg3[%c5_48, %c1_49] : memref<12x36xf32, #tpu.memory_space<smem>>
    %72 = vector.broadcast %71 : f32 to vector<8x128xf32>
    %73 = arith.select %55, %72, %35 : vector<8x128xi1>, vector<8x128xf32>
    %c6_50 = arith.constant 6 : index
    %c1_51 = arith.constant 1 : index
    %74 = memref.load %arg3[%c6_50, %c1_51] : memref<12x36xf32, #tpu.memory_space<smem>>
    %75 = vector.broadcast %74 : f32 to vector<8x128xf32>
    %76 = arith.select %55, %75, %38 : vector<8x128xi1>, vector<8x128xf32>
    %c7_52 = arith.constant 7 : index
    %c1_53 = arith.constant 1 : index
    %77 = memref.load %arg3[%c7_52, %c1_53] : memref<12x36xf32, #tpu.memory_space<smem>>
    %78 = vector.broadcast %77 : f32 to vector<8x128xf32>
    %79 = arith.select %55, %78, %41 : vector<8x128xi1>, vector<8x128xf32>
    %c8_54 = arith.constant 8 : index
    %c1_55 = arith.constant 1 : index
    %80 = memref.load %arg3[%c8_54, %c1_55] : memref<12x36xf32, #tpu.memory_space<smem>>
    %81 = vector.broadcast %80 : f32 to vector<8x128xf32>
    %82 = arith.select %55, %81, %44 : vector<8x128xi1>, vector<8x128xf32>
    %c9_56 = arith.constant 9 : index
    %c1_57 = arith.constant 1 : index
    %83 = memref.load %arg3[%c9_56, %c1_57] : memref<12x36xf32, #tpu.memory_space<smem>>
    %84 = vector.broadcast %83 : f32 to vector<8x128xf32>
    %85 = arith.select %55, %84, %47 : vector<8x128xi1>, vector<8x128xf32>
    %c10_58 = arith.constant 10 : index
    %c1_59 = arith.constant 1 : index
    %86 = memref.load %arg3[%c10_58, %c1_59] : memref<12x36xf32, #tpu.memory_space<smem>>
    %87 = vector.broadcast %86 : f32 to vector<8x128xf32>
    %88 = arith.select %55, %87, %50 : vector<8x128xi1>, vector<8x128xf32>
    %c11_60 = arith.constant 11 : index
    %c1_61 = arith.constant 1 : index
    %89 = memref.load %arg3[%c11_60, %c1_61] : memref<12x36xf32, #tpu.memory_space<smem>>
    %90 = vector.broadcast %89 : f32 to vector<8x128xf32>
    %91 = arith.select %55, %90, %53 : vector<8x128xi1>, vector<8x128xf32>
    %c2_i32 = arith.constant 2 : i32
    %92 = vector.broadcast %c2_i32 : i32 to vector<8x128xi32>
    %93 = arith.cmpi eq, %0, %92 : vector<8x128xi32>
    %c0_62 = arith.constant 0 : index
    %c2_63 = arith.constant 2 : index
    %94 = memref.load %arg3[%c0_62, %c2_63] : memref<12x36xf32, #tpu.memory_space<smem>>
    %95 = vector.broadcast %94 : f32 to vector<8x128xf32>
    %96 = arith.select %93, %95, %58 : vector<8x128xi1>, vector<8x128xf32>
    %c1_64 = arith.constant 1 : index
    %c2_65 = arith.constant 2 : index
    %97 = memref.load %arg3[%c1_64, %c2_65] : memref<12x36xf32, #tpu.memory_space<smem>>
    %98 = vector.broadcast %97 : f32 to vector<8x128xf32>
    %99 = arith.select %93, %98, %61 : vector<8x128xi1>, vector<8x128xf32>
    %c2_66 = arith.constant 2 : index
    %c2_67 = arith.constant 2 : index
    %100 = memref.load %arg3[%c2_66, %c2_67] : memref<12x36xf32, #tpu.memory_space<smem>>
    %101 = vector.broadcast %100 : f32 to vector<8x128xf32>
    %102 = arith.select %93, %101, %64 : vector<8x128xi1>, vector<8x128xf32>
    %c3_68 = arith.constant 3 : index
    %c2_69 = arith.constant 2 : index
    %103 = memref.load %arg3[%c3_68, %c2_69] : memref<12x36xf32, #tpu.memory_space<smem>>
    %104 = vector.broadcast %103 : f32 to vector<8x128xf32>
    %105 = arith.select %93, %104, %67 : vector<8x128xi1>, vector<8x128xf32>
    %c4_70 = arith.constant 4 : index
    %c2_71 = arith.constant 2 : index
    %106 = memref.load %arg3[%c4_70, %c2_71] : memref<12x36xf32, #tpu.memory_space<smem>>
    %107 = vector.broadcast %106 : f32 to vector<8x128xf32>
    %108 = arith.select %93, %107, %70 : vector<8x128xi1>, vector<8x128xf32>
    %c5_72 = arith.constant 5 : index
    %c2_73 = arith.constant 2 : index
    %109 = memref.load %arg3[%c5_72, %c2_73] : memref<12x36xf32, #tpu.memory_space<smem>>
    %110 = vector.broadcast %109 : f32 to vector<8x128xf32>
    %111 = arith.select %93, %110, %73 : vector<8x128xi1>, vector<8x128xf32>
    %c6_74 = arith.constant 6 : index
    %c2_75 = arith.constant 2 : index
    %112 = memref.load %arg3[%c6_74, %c2_75] : memref<12x36xf32, #tpu.memory_space<smem>>
    %113 = vector.broadcast %112 : f32 to vector<8x128xf32>
    %114 = arith.select %93, %113, %76 : vector<8x128xi1>, vector<8x128xf32>
    %c7_76 = arith.constant 7 : index
    %c2_77 = arith.constant 2 : index
    %115 = memref.load %arg3[%c7_76, %c2_77] : memref<12x36xf32, #tpu.memory_space<smem>>
    %116 = vector.broadcast %115 : f32 to vector<8x128xf32>
    %117 = arith.select %93, %116, %79 : vector<8x128xi1>, vector<8x128xf32>
    %c8_78 = arith.constant 8 : index
    %c2_79 = arith.constant 2 : index
    %118 = memref.load %arg3[%c8_78, %c2_79] : memref<12x36xf32, #tpu.memory_space<smem>>
    %119 = vector.broadcast %118 : f32 to vector<8x128xf32>
    %120 = arith.select %93, %119, %82 : vector<8x128xi1>, vector<8x128xf32>
    %c9_80 = arith.constant 9 : index
    %c2_81 = arith.constant 2 : index
    %121 = memref.load %arg3[%c9_80, %c2_81] : memref<12x36xf32, #tpu.memory_space<smem>>
    %122 = vector.broadcast %121 : f32 to vector<8x128xf32>
    %123 = arith.select %93, %122, %85 : vector<8x128xi1>, vector<8x128xf32>
    %c10_82 = arith.constant 10 : index
    %c2_83 = arith.constant 2 : index
    %124 = memref.load %arg3[%c10_82, %c2_83] : memref<12x36xf32, #tpu.memory_space<smem>>
    %125 = vector.broadcast %124 : f32 to vector<8x128xf32>
    %126 = arith.select %93, %125, %88 : vector<8x128xi1>, vector<8x128xf32>
    %c11_84 = arith.constant 11 : index
    %c2_85 = arith.constant 2 : index
    %127 = memref.load %arg3[%c11_84, %c2_85] : memref<12x36xf32, #tpu.memory_space<smem>>
    %128 = vector.broadcast %127 : f32 to vector<8x128xf32>
    %129 = arith.select %93, %128, %91 : vector<8x128xi1>, vector<8x128xf32>
    %c3_i32 = arith.constant 3 : i32
    %130 = vector.broadcast %c3_i32 : i32 to vector<8x128xi32>
    %131 = arith.cmpi eq, %0, %130 : vector<8x128xi32>
    %c0_86 = arith.constant 0 : index
    %c3_87 = arith.constant 3 : index
    %132 = memref.load %arg3[%c0_86, %c3_87] : memref<12x36xf32, #tpu.memory_space<smem>>
    %133 = vector.broadcast %132 : f32 to vector<8x128xf32>
    %134 = arith.select %131, %133, %96 : vector<8x128xi1>, vector<8x128xf32>
    %c1_88 = arith.constant 1 : index
    %c3_89 = arith.constant 3 : index
    %135 = memref.load %arg3[%c1_88, %c3_89] : memref<12x36xf32, #tpu.memory_space<smem>>
    %136 = vector.broadcast %135 : f32 to vector<8x128xf32>
    %137 = arith.select %131, %136, %99 : vector<8x128xi1>, vector<8x128xf32>
    %c2_90 = arith.constant 2 : index
    %c3_91 = arith.constant 3 : index
    %138 = memref.load %arg3[%c2_90, %c3_91] : memref<12x36xf32, #tpu.memory_space<smem>>
    %139 = vector.broadcast %138 : f32 to vector<8x128xf32>
    %140 = arith.select %131, %139, %102 : vector<8x128xi1>, vector<8x128xf32>
    %c3_92 = arith.constant 3 : index
    %c3_93 = arith.constant 3 : index
    %141 = memref.load %arg3[%c3_92, %c3_93] : memref<12x36xf32, #tpu.memory_space<smem>>
    %142 = vector.broadcast %141 : f32 to vector<8x128xf32>
    %143 = arith.select %131, %142, %105 : vector<8x128xi1>, vector<8x128xf32>
    %c4_94 = arith.constant 4 : index
    %c3_95 = arith.constant 3 : index
    %144 = memref.load %arg3[%c4_94, %c3_95] : memref<12x36xf32, #tpu.memory_space<smem>>
    %145 = vector.broadcast %144 : f32 to vector<8x128xf32>
    %146 = arith.select %131, %145, %108 : vector<8x128xi1>, vector<8x128xf32>
    %c5_96 = arith.constant 5 : index
    %c3_97 = arith.constant 3 : index
    %147 = memref.load %arg3[%c5_96, %c3_97] : memref<12x36xf32, #tpu.memory_space<smem>>
    %148 = vector.broadcast %147 : f32 to vector<8x128xf32>
    %149 = arith.select %131, %148, %111 : vector<8x128xi1>, vector<8x128xf32>
    %c6_98 = arith.constant 6 : index
    %c3_99 = arith.constant 3 : index
    %150 = memref.load %arg3[%c6_98, %c3_99] : memref<12x36xf32, #tpu.memory_space<smem>>
    %151 = vector.broadcast %150 : f32 to vector<8x128xf32>
    %152 = arith.select %131, %151, %114 : vector<8x128xi1>, vector<8x128xf32>
    %c7_100 = arith.constant 7 : index
    %c3_101 = arith.constant 3 : index
    %153 = memref.load %arg3[%c7_100, %c3_101] : memref<12x36xf32, #tpu.memory_space<smem>>
    %154 = vector.broadcast %153 : f32 to vector<8x128xf32>
    %155 = arith.select %131, %154, %117 : vector<8x128xi1>, vector<8x128xf32>
    %c8_102 = arith.constant 8 : index
    %c3_103 = arith.constant 3 : index
    %156 = memref.load %arg3[%c8_102, %c3_103] : memref<12x36xf32, #tpu.memory_space<smem>>
    %157 = vector.broadcast %156 : f32 to vector<8x128xf32>
    %158 = arith.select %131, %157, %120 : vector<8x128xi1>, vector<8x128xf32>
    %c9_104 = arith.constant 9 : index
    %c3_105 = arith.constant 3 : index
    %159 = memref.load %arg3[%c9_104, %c3_105] : memref<12x36xf32, #tpu.memory_space<smem>>
    %160 = vector.broadcast %159 : f32 to vector<8x128xf32>
    %161 = arith.select %131, %160, %123 : vector<8x128xi1>, vector<8x128xf32>
    %c10_106 = arith.constant 10 : index
    %c3_107 = arith.constant 3 : index
    %162 = memref.load %arg3[%c10_106, %c3_107] : memref<12x36xf32, #tpu.memory_space<smem>>
    %163 = vector.broadcast %162 : f32 to vector<8x128xf32>
    %164 = arith.select %131, %163, %126 : vector<8x128xi1>, vector<8x128xf32>
    %c11_108 = arith.constant 11 : index
    %c3_109 = arith.constant 3 : index
    %165 = memref.load %arg3[%c11_108, %c3_109] : memref<12x36xf32, #tpu.memory_space<smem>>
    %166 = vector.broadcast %165 : f32 to vector<8x128xf32>
    %167 = arith.select %131, %166, %129 : vector<8x128xi1>, vector<8x128xf32>
    %c4_i32 = arith.constant 4 : i32
    %168 = vector.broadcast %c4_i32 : i32 to vector<8x128xi32>
    %169 = arith.cmpi eq, %0, %168 : vector<8x128xi32>
    %c0_110 = arith.constant 0 : index
    %c4_111 = arith.constant 4 : index
    %170 = memref.load %arg3[%c0_110, %c4_111] : memref<12x36xf32, #tpu.memory_space<smem>>
    %171 = vector.broadcast %170 : f32 to vector<8x128xf32>
    %172 = arith.select %169, %171, %134 : vector<8x128xi1>, vector<8x128xf32>
    %c1_112 = arith.constant 1 : index
    %c4_113 = arith.constant 4 : index
    %173 = memref.load %arg3[%c1_112, %c4_113] : memref<12x36xf32, #tpu.memory_space<smem>>
    %174 = vector.broadcast %173 : f32 to vector<8x128xf32>
    %175 = arith.select %169, %174, %137 : vector<8x128xi1>, vector<8x128xf32>
    %c2_114 = arith.constant 2 : index
    %c4_115 = arith.constant 4 : index
    %176 = memref.load %arg3[%c2_114, %c4_115] : memref<12x36xf32, #tpu.memory_space<smem>>
    %177 = vector.broadcast %176 : f32 to vector<8x128xf32>
    %178 = arith.select %169, %177, %140 : vector<8x128xi1>, vector<8x128xf32>
    %c3_116 = arith.constant 3 : index
    %c4_117 = arith.constant 4 : index
    %179 = memref.load %arg3[%c3_116, %c4_117] : memref<12x36xf32, #tpu.memory_space<smem>>
    %180 = vector.broadcast %179 : f32 to vector<8x128xf32>
    %181 = arith.select %169, %180, %143 : vector<8x128xi1>, vector<8x128xf32>
    %c4_118 = arith.constant 4 : index
    %c4_119 = arith.constant 4 : index
    %182 = memref.load %arg3[%c4_118, %c4_119] : memref<12x36xf32, #tpu.memory_space<smem>>
    %183 = vector.broadcast %182 : f32 to vector<8x128xf32>
    %184 = arith.select %169, %183, %146 : vector<8x128xi1>, vector<8x128xf32>
    %c5_120 = arith.constant 5 : index
    %c4_121 = arith.constant 4 : index
    %185 = memref.load %arg3[%c5_120, %c4_121] : memref<12x36xf32, #tpu.memory_space<smem>>
    %186 = vector.broadcast %185 : f32 to vector<8x128xf32>
    %187 = arith.select %169, %186, %149 : vector<8x128xi1>, vector<8x128xf32>
    %c6_122 = arith.constant 6 : index
    %c4_123 = arith.constant 4 : index
    %188 = memref.load %arg3[%c6_122, %c4_123] : memref<12x36xf32, #tpu.memory_space<smem>>
    %189 = vector.broadcast %188 : f32 to vector<8x128xf32>
    %190 = arith.select %169, %189, %152 : vector<8x128xi1>, vector<8x128xf32>
    %c7_124 = arith.constant 7 : index
    %c4_125 = arith.constant 4 : index
    %191 = memref.load %arg3[%c7_124, %c4_125] : memref<12x36xf32, #tpu.memory_space<smem>>
    %192 = vector.broadcast %191 : f32 to vector<8x128xf32>
    %193 = arith.select %169, %192, %155 : vector<8x128xi1>, vector<8x128xf32>
    %c8_126 = arith.constant 8 : index
    %c4_127 = arith.constant 4 : index
    %194 = memref.load %arg3[%c8_126, %c4_127] : memref<12x36xf32, #tpu.memory_space<smem>>
    %195 = vector.broadcast %194 : f32 to vector<8x128xf32>
    %196 = arith.select %169, %195, %158 : vector<8x128xi1>, vector<8x128xf32>
    %c9_128 = arith.constant 9 : index
    %c4_129 = arith.constant 4 : index
    %197 = memref.load %arg3[%c9_128, %c4_129] : memref<12x36xf32, #tpu.memory_space<smem>>
    %198 = vector.broadcast %197 : f32 to vector<8x128xf32>
    %199 = arith.select %169, %198, %161 : vector<8x128xi1>, vector<8x128xf32>
    %c10_130 = arith.constant 10 : index
    %c4_131 = arith.constant 4 : index
    %200 = memref.load %arg3[%c10_130, %c4_131] : memref<12x36xf32, #tpu.memory_space<smem>>
    %201 = vector.broadcast %200 : f32 to vector<8x128xf32>
    %202 = arith.select %169, %201, %164 : vector<8x128xi1>, vector<8x128xf32>
    %c11_132 = arith.constant 11 : index
    %c4_133 = arith.constant 4 : index
    %203 = memref.load %arg3[%c11_132, %c4_133] : memref<12x36xf32, #tpu.memory_space<smem>>
    %204 = vector.broadcast %203 : f32 to vector<8x128xf32>
    %205 = arith.select %169, %204, %167 : vector<8x128xi1>, vector<8x128xf32>
    %c5_i32 = arith.constant 5 : i32
    %206 = vector.broadcast %c5_i32 : i32 to vector<8x128xi32>
    %207 = arith.cmpi eq, %0, %206 : vector<8x128xi32>
    %c0_134 = arith.constant 0 : index
    %c5_135 = arith.constant 5 : index
    %208 = memref.load %arg3[%c0_134, %c5_135] : memref<12x36xf32, #tpu.memory_space<smem>>
    %209 = vector.broadcast %208 : f32 to vector<8x128xf32>
    %210 = arith.select %207, %209, %172 : vector<8x128xi1>, vector<8x128xf32>
    %c1_136 = arith.constant 1 : index
    %c5_137 = arith.constant 5 : index
    %211 = memref.load %arg3[%c1_136, %c5_137] : memref<12x36xf32, #tpu.memory_space<smem>>
    %212 = vector.broadcast %211 : f32 to vector<8x128xf32>
    %213 = arith.select %207, %212, %175 : vector<8x128xi1>, vector<8x128xf32>
    %c2_138 = arith.constant 2 : index
    %c5_139 = arith.constant 5 : index
    %214 = memref.load %arg3[%c2_138, %c5_139] : memref<12x36xf32, #tpu.memory_space<smem>>
    %215 = vector.broadcast %214 : f32 to vector<8x128xf32>
    %216 = arith.select %207, %215, %178 : vector<8x128xi1>, vector<8x128xf32>
    %c3_140 = arith.constant 3 : index
    %c5_141 = arith.constant 5 : index
    %217 = memref.load %arg3[%c3_140, %c5_141] : memref<12x36xf32, #tpu.memory_space<smem>>
    %218 = vector.broadcast %217 : f32 to vector<8x128xf32>
    %219 = arith.select %207, %218, %181 : vector<8x128xi1>, vector<8x128xf32>
    %c4_142 = arith.constant 4 : index
    %c5_143 = arith.constant 5 : index
    %220 = memref.load %arg3[%c4_142, %c5_143] : memref<12x36xf32, #tpu.memory_space<smem>>
    %221 = vector.broadcast %220 : f32 to vector<8x128xf32>
    %222 = arith.select %207, %221, %184 : vector<8x128xi1>, vector<8x128xf32>
    %c5_144 = arith.constant 5 : index
    %c5_145 = arith.constant 5 : index
    %223 = memref.load %arg3[%c5_144, %c5_145] : memref<12x36xf32, #tpu.memory_space<smem>>
    %224 = vector.broadcast %223 : f32 to vector<8x128xf32>
    %225 = arith.select %207, %224, %187 : vector<8x128xi1>, vector<8x128xf32>
    %c6_146 = arith.constant 6 : index
    %c5_147 = arith.constant 5 : index
    %226 = memref.load %arg3[%c6_146, %c5_147] : memref<12x36xf32, #tpu.memory_space<smem>>
    %227 = vector.broadcast %226 : f32 to vector<8x128xf32>
    %228 = arith.select %207, %227, %190 : vector<8x128xi1>, vector<8x128xf32>
    %c7_148 = arith.constant 7 : index
    %c5_149 = arith.constant 5 : index
    %229 = memref.load %arg3[%c7_148, %c5_149] : memref<12x36xf32, #tpu.memory_space<smem>>
    %230 = vector.broadcast %229 : f32 to vector<8x128xf32>
    %231 = arith.select %207, %230, %193 : vector<8x128xi1>, vector<8x128xf32>
    %c8_150 = arith.constant 8 : index
    %c5_151 = arith.constant 5 : index
    %232 = memref.load %arg3[%c8_150, %c5_151] : memref<12x36xf32, #tpu.memory_space<smem>>
    %233 = vector.broadcast %232 : f32 to vector<8x128xf32>
    %234 = arith.select %207, %233, %196 : vector<8x128xi1>, vector<8x128xf32>
    %c9_152 = arith.constant 9 : index
    %c5_153 = arith.constant 5 : index
    %235 = memref.load %arg3[%c9_152, %c5_153] : memref<12x36xf32, #tpu.memory_space<smem>>
    %236 = vector.broadcast %235 : f32 to vector<8x128xf32>
    %237 = arith.select %207, %236, %199 : vector<8x128xi1>, vector<8x128xf32>
    %c10_154 = arith.constant 10 : index
    %c5_155 = arith.constant 5 : index
    %238 = memref.load %arg3[%c10_154, %c5_155] : memref<12x36xf32, #tpu.memory_space<smem>>
    %239 = vector.broadcast %238 : f32 to vector<8x128xf32>
    %240 = arith.select %207, %239, %202 : vector<8x128xi1>, vector<8x128xf32>
    %c11_156 = arith.constant 11 : index
    %c5_157 = arith.constant 5 : index
    %241 = memref.load %arg3[%c11_156, %c5_157] : memref<12x36xf32, #tpu.memory_space<smem>>
    %242 = vector.broadcast %241 : f32 to vector<8x128xf32>
    %243 = arith.select %207, %242, %205 : vector<8x128xi1>, vector<8x128xf32>
    %c6_i32 = arith.constant 6 : i32
    %244 = vector.broadcast %c6_i32 : i32 to vector<8x128xi32>
    %245 = arith.cmpi eq, %0, %244 : vector<8x128xi32>
    %c0_158 = arith.constant 0 : index
    %c6_159 = arith.constant 6 : index
    %246 = memref.load %arg3[%c0_158, %c6_159] : memref<12x36xf32, #tpu.memory_space<smem>>
    %247 = vector.broadcast %246 : f32 to vector<8x128xf32>
    %248 = arith.select %245, %247, %210 : vector<8x128xi1>, vector<8x128xf32>
    %c1_160 = arith.constant 1 : index
    %c6_161 = arith.constant 6 : index
    %249 = memref.load %arg3[%c1_160, %c6_161] : memref<12x36xf32, #tpu.memory_space<smem>>
    %250 = vector.broadcast %249 : f32 to vector<8x128xf32>
    %251 = arith.select %245, %250, %213 : vector<8x128xi1>, vector<8x128xf32>
    %c2_162 = arith.constant 2 : index
    %c6_163 = arith.constant 6 : index
    %252 = memref.load %arg3[%c2_162, %c6_163] : memref<12x36xf32, #tpu.memory_space<smem>>
    %253 = vector.broadcast %252 : f32 to vector<8x128xf32>
    %254 = arith.select %245, %253, %216 : vector<8x128xi1>, vector<8x128xf32>
    %c3_164 = arith.constant 3 : index
    %c6_165 = arith.constant 6 : index
    %255 = memref.load %arg3[%c3_164, %c6_165] : memref<12x36xf32, #tpu.memory_space<smem>>
    %256 = vector.broadcast %255 : f32 to vector<8x128xf32>
    %257 = arith.select %245, %256, %219 : vector<8x128xi1>, vector<8x128xf32>
    %c4_166 = arith.constant 4 : index
    %c6_167 = arith.constant 6 : index
    %258 = memref.load %arg3[%c4_166, %c6_167] : memref<12x36xf32, #tpu.memory_space<smem>>
    %259 = vector.broadcast %258 : f32 to vector<8x128xf32>
    %260 = arith.select %245, %259, %222 : vector<8x128xi1>, vector<8x128xf32>
    %c5_168 = arith.constant 5 : index
    %c6_169 = arith.constant 6 : index
    %261 = memref.load %arg3[%c5_168, %c6_169] : memref<12x36xf32, #tpu.memory_space<smem>>
    %262 = vector.broadcast %261 : f32 to vector<8x128xf32>
    %263 = arith.select %245, %262, %225 : vector<8x128xi1>, vector<8x128xf32>
    %c6_170 = arith.constant 6 : index
    %c6_171 = arith.constant 6 : index
    %264 = memref.load %arg3[%c6_170, %c6_171] : memref<12x36xf32, #tpu.memory_space<smem>>
    %265 = vector.broadcast %264 : f32 to vector<8x128xf32>
    %266 = arith.select %245, %265, %228 : vector<8x128xi1>, vector<8x128xf32>
    %c7_172 = arith.constant 7 : index
    %c6_173 = arith.constant 6 : index
    %267 = memref.load %arg3[%c7_172, %c6_173] : memref<12x36xf32, #tpu.memory_space<smem>>
    %268 = vector.broadcast %267 : f32 to vector<8x128xf32>
    %269 = arith.select %245, %268, %231 : vector<8x128xi1>, vector<8x128xf32>
    %c8_174 = arith.constant 8 : index
    %c6_175 = arith.constant 6 : index
    %270 = memref.load %arg3[%c8_174, %c6_175] : memref<12x36xf32, #tpu.memory_space<smem>>
    %271 = vector.broadcast %270 : f32 to vector<8x128xf32>
    %272 = arith.select %245, %271, %234 : vector<8x128xi1>, vector<8x128xf32>
    %c9_176 = arith.constant 9 : index
    %c6_177 = arith.constant 6 : index
    %273 = memref.load %arg3[%c9_176, %c6_177] : memref<12x36xf32, #tpu.memory_space<smem>>
    %274 = vector.broadcast %273 : f32 to vector<8x128xf32>
    %275 = arith.select %245, %274, %237 : vector<8x128xi1>, vector<8x128xf32>
    %c10_178 = arith.constant 10 : index
    %c6_179 = arith.constant 6 : index
    %276 = memref.load %arg3[%c10_178, %c6_179] : memref<12x36xf32, #tpu.memory_space<smem>>
    %277 = vector.broadcast %276 : f32 to vector<8x128xf32>
    %278 = arith.select %245, %277, %240 : vector<8x128xi1>, vector<8x128xf32>
    %c11_180 = arith.constant 11 : index
    %c6_181 = arith.constant 6 : index
    %279 = memref.load %arg3[%c11_180, %c6_181] : memref<12x36xf32, #tpu.memory_space<smem>>
    %280 = vector.broadcast %279 : f32 to vector<8x128xf32>
    %281 = arith.select %245, %280, %243 : vector<8x128xi1>, vector<8x128xf32>
    %c7_i32 = arith.constant 7 : i32
    %282 = vector.broadcast %c7_i32 : i32 to vector<8x128xi32>
    %283 = arith.cmpi eq, %0, %282 : vector<8x128xi32>
    %c0_182 = arith.constant 0 : index
    %c7_183 = arith.constant 7 : index
    %284 = memref.load %arg3[%c0_182, %c7_183] : memref<12x36xf32, #tpu.memory_space<smem>>
    %285 = vector.broadcast %284 : f32 to vector<8x128xf32>
    %286 = arith.select %283, %285, %248 : vector<8x128xi1>, vector<8x128xf32>
    %c1_184 = arith.constant 1 : index
    %c7_185 = arith.constant 7 : index
    %287 = memref.load %arg3[%c1_184, %c7_185] : memref<12x36xf32, #tpu.memory_space<smem>>
    %288 = vector.broadcast %287 : f32 to vector<8x128xf32>
    %289 = arith.select %283, %288, %251 : vector<8x128xi1>, vector<8x128xf32>
    %c2_186 = arith.constant 2 : index
    %c7_187 = arith.constant 7 : index
    %290 = memref.load %arg3[%c2_186, %c7_187] : memref<12x36xf32, #tpu.memory_space<smem>>
    %291 = vector.broadcast %290 : f32 to vector<8x128xf32>
    %292 = arith.select %283, %291, %254 : vector<8x128xi1>, vector<8x128xf32>
    %c3_188 = arith.constant 3 : index
    %c7_189 = arith.constant 7 : index
    %293 = memref.load %arg3[%c3_188, %c7_189] : memref<12x36xf32, #tpu.memory_space<smem>>
    %294 = vector.broadcast %293 : f32 to vector<8x128xf32>
    %295 = arith.select %283, %294, %257 : vector<8x128xi1>, vector<8x128xf32>
    %c4_190 = arith.constant 4 : index
    %c7_191 = arith.constant 7 : index
    %296 = memref.load %arg3[%c4_190, %c7_191] : memref<12x36xf32, #tpu.memory_space<smem>>
    %297 = vector.broadcast %296 : f32 to vector<8x128xf32>
    %298 = arith.select %283, %297, %260 : vector<8x128xi1>, vector<8x128xf32>
    %c5_192 = arith.constant 5 : index
    %c7_193 = arith.constant 7 : index
    %299 = memref.load %arg3[%c5_192, %c7_193] : memref<12x36xf32, #tpu.memory_space<smem>>
    %300 = vector.broadcast %299 : f32 to vector<8x128xf32>
    %301 = arith.select %283, %300, %263 : vector<8x128xi1>, vector<8x128xf32>
    %c6_194 = arith.constant 6 : index
    %c7_195 = arith.constant 7 : index
    %302 = memref.load %arg3[%c6_194, %c7_195] : memref<12x36xf32, #tpu.memory_space<smem>>
    %303 = vector.broadcast %302 : f32 to vector<8x128xf32>
    %304 = arith.select %283, %303, %266 : vector<8x128xi1>, vector<8x128xf32>
    %c7_196 = arith.constant 7 : index
    %c7_197 = arith.constant 7 : index
    %305 = memref.load %arg3[%c7_196, %c7_197] : memref<12x36xf32, #tpu.memory_space<smem>>
    %306 = vector.broadcast %305 : f32 to vector<8x128xf32>
    %307 = arith.select %283, %306, %269 : vector<8x128xi1>, vector<8x128xf32>
    %c8_198 = arith.constant 8 : index
    %c7_199 = arith.constant 7 : index
    %308 = memref.load %arg3[%c8_198, %c7_199] : memref<12x36xf32, #tpu.memory_space<smem>>
    %309 = vector.broadcast %308 : f32 to vector<8x128xf32>
    %310 = arith.select %283, %309, %272 : vector<8x128xi1>, vector<8x128xf32>
    %c9_200 = arith.constant 9 : index
    %c7_201 = arith.constant 7 : index
    %311 = memref.load %arg3[%c9_200, %c7_201] : memref<12x36xf32, #tpu.memory_space<smem>>
    %312 = vector.broadcast %311 : f32 to vector<8x128xf32>
    %313 = arith.select %283, %312, %275 : vector<8x128xi1>, vector<8x128xf32>
    %c10_202 = arith.constant 10 : index
    %c7_203 = arith.constant 7 : index
    %314 = memref.load %arg3[%c10_202, %c7_203] : memref<12x36xf32, #tpu.memory_space<smem>>
    %315 = vector.broadcast %314 : f32 to vector<8x128xf32>
    %316 = arith.select %283, %315, %278 : vector<8x128xi1>, vector<8x128xf32>
    %c11_204 = arith.constant 11 : index
    %c7_205 = arith.constant 7 : index
    %317 = memref.load %arg3[%c11_204, %c7_205] : memref<12x36xf32, #tpu.memory_space<smem>>
    %318 = vector.broadcast %317 : f32 to vector<8x128xf32>
    %319 = arith.select %283, %318, %281 : vector<8x128xi1>, vector<8x128xf32>
    %c8_i32 = arith.constant 8 : i32
    %320 = vector.broadcast %c8_i32 : i32 to vector<8x128xi32>
    %321 = arith.cmpi eq, %0, %320 : vector<8x128xi32>
    %c0_206 = arith.constant 0 : index
    %c8_207 = arith.constant 8 : index
    %322 = memref.load %arg3[%c0_206, %c8_207] : memref<12x36xf32, #tpu.memory_space<smem>>
    %323 = vector.broadcast %322 : f32 to vector<8x128xf32>
    %324 = arith.select %321, %323, %286 : vector<8x128xi1>, vector<8x128xf32>
    %c1_208 = arith.constant 1 : index
    %c8_209 = arith.constant 8 : index
    %325 = memref.load %arg3[%c1_208, %c8_209] : memref<12x36xf32, #tpu.memory_space<smem>>
    %326 = vector.broadcast %325 : f32 to vector<8x128xf32>
    %327 = arith.select %321, %326, %289 : vector<8x128xi1>, vector<8x128xf32>
    %c2_210 = arith.constant 2 : index
    %c8_211 = arith.constant 8 : index
    %328 = memref.load %arg3[%c2_210, %c8_211] : memref<12x36xf32, #tpu.memory_space<smem>>
    %329 = vector.broadcast %328 : f32 to vector<8x128xf32>
    %330 = arith.select %321, %329, %292 : vector<8x128xi1>, vector<8x128xf32>
    %c3_212 = arith.constant 3 : index
    %c8_213 = arith.constant 8 : index
    %331 = memref.load %arg3[%c3_212, %c8_213] : memref<12x36xf32, #tpu.memory_space<smem>>
    %332 = vector.broadcast %331 : f32 to vector<8x128xf32>
    %333 = arith.select %321, %332, %295 : vector<8x128xi1>, vector<8x128xf32>
    %c4_214 = arith.constant 4 : index
    %c8_215 = arith.constant 8 : index
    %334 = memref.load %arg3[%c4_214, %c8_215] : memref<12x36xf32, #tpu.memory_space<smem>>
    %335 = vector.broadcast %334 : f32 to vector<8x128xf32>
    %336 = arith.select %321, %335, %298 : vector<8x128xi1>, vector<8x128xf32>
    %c5_216 = arith.constant 5 : index
    %c8_217 = arith.constant 8 : index
    %337 = memref.load %arg3[%c5_216, %c8_217] : memref<12x36xf32, #tpu.memory_space<smem>>
    %338 = vector.broadcast %337 : f32 to vector<8x128xf32>
    %339 = arith.select %321, %338, %301 : vector<8x128xi1>, vector<8x128xf32>
    %c6_218 = arith.constant 6 : index
    %c8_219 = arith.constant 8 : index
    %340 = memref.load %arg3[%c6_218, %c8_219] : memref<12x36xf32, #tpu.memory_space<smem>>
    %341 = vector.broadcast %340 : f32 to vector<8x128xf32>
    %342 = arith.select %321, %341, %304 : vector<8x128xi1>, vector<8x128xf32>
    %c7_220 = arith.constant 7 : index
    %c8_221 = arith.constant 8 : index
    %343 = memref.load %arg3[%c7_220, %c8_221] : memref<12x36xf32, #tpu.memory_space<smem>>
    %344 = vector.broadcast %343 : f32 to vector<8x128xf32>
    %345 = arith.select %321, %344, %307 : vector<8x128xi1>, vector<8x128xf32>
    %c8_222 = arith.constant 8 : index
    %c8_223 = arith.constant 8 : index
    %346 = memref.load %arg3[%c8_222, %c8_223] : memref<12x36xf32, #tpu.memory_space<smem>>
    %347 = vector.broadcast %346 : f32 to vector<8x128xf32>
    %348 = arith.select %321, %347, %310 : vector<8x128xi1>, vector<8x128xf32>
    %c9_224 = arith.constant 9 : index
    %c8_225 = arith.constant 8 : index
    %349 = memref.load %arg3[%c9_224, %c8_225] : memref<12x36xf32, #tpu.memory_space<smem>>
    %350 = vector.broadcast %349 : f32 to vector<8x128xf32>
    %351 = arith.select %321, %350, %313 : vector<8x128xi1>, vector<8x128xf32>
    %c10_226 = arith.constant 10 : index
    %c8_227 = arith.constant 8 : index
    %352 = memref.load %arg3[%c10_226, %c8_227] : memref<12x36xf32, #tpu.memory_space<smem>>
    %353 = vector.broadcast %352 : f32 to vector<8x128xf32>
    %354 = arith.select %321, %353, %316 : vector<8x128xi1>, vector<8x128xf32>
    %c11_228 = arith.constant 11 : index
    %c8_229 = arith.constant 8 : index
    %355 = memref.load %arg3[%c11_228, %c8_229] : memref<12x36xf32, #tpu.memory_space<smem>>
    %356 = vector.broadcast %355 : f32 to vector<8x128xf32>
    %357 = arith.select %321, %356, %319 : vector<8x128xi1>, vector<8x128xf32>
    %c9_i32 = arith.constant 9 : i32
    %358 = vector.broadcast %c9_i32 : i32 to vector<8x128xi32>
    %359 = arith.cmpi eq, %0, %358 : vector<8x128xi32>
    %c0_230 = arith.constant 0 : index
    %c9_231 = arith.constant 9 : index
    %360 = memref.load %arg3[%c0_230, %c9_231] : memref<12x36xf32, #tpu.memory_space<smem>>
    %361 = vector.broadcast %360 : f32 to vector<8x128xf32>
    %362 = arith.select %359, %361, %324 : vector<8x128xi1>, vector<8x128xf32>
    %c1_232 = arith.constant 1 : index
    %c9_233 = arith.constant 9 : index
    %363 = memref.load %arg3[%c1_232, %c9_233] : memref<12x36xf32, #tpu.memory_space<smem>>
    %364 = vector.broadcast %363 : f32 to vector<8x128xf32>
    %365 = arith.select %359, %364, %327 : vector<8x128xi1>, vector<8x128xf32>
    %c2_234 = arith.constant 2 : index
    %c9_235 = arith.constant 9 : index
    %366 = memref.load %arg3[%c2_234, %c9_235] : memref<12x36xf32, #tpu.memory_space<smem>>
    %367 = vector.broadcast %366 : f32 to vector<8x128xf32>
    %368 = arith.select %359, %367, %330 : vector<8x128xi1>, vector<8x128xf32>
    %c3_236 = arith.constant 3 : index
    %c9_237 = arith.constant 9 : index
    %369 = memref.load %arg3[%c3_236, %c9_237] : memref<12x36xf32, #tpu.memory_space<smem>>
    %370 = vector.broadcast %369 : f32 to vector<8x128xf32>
    %371 = arith.select %359, %370, %333 : vector<8x128xi1>, vector<8x128xf32>
    %c4_238 = arith.constant 4 : index
    %c9_239 = arith.constant 9 : index
    %372 = memref.load %arg3[%c4_238, %c9_239] : memref<12x36xf32, #tpu.memory_space<smem>>
    %373 = vector.broadcast %372 : f32 to vector<8x128xf32>
    %374 = arith.select %359, %373, %336 : vector<8x128xi1>, vector<8x128xf32>
    %c5_240 = arith.constant 5 : index
    %c9_241 = arith.constant 9 : index
    %375 = memref.load %arg3[%c5_240, %c9_241] : memref<12x36xf32, #tpu.memory_space<smem>>
    %376 = vector.broadcast %375 : f32 to vector<8x128xf32>
    %377 = arith.select %359, %376, %339 : vector<8x128xi1>, vector<8x128xf32>
    %c6_242 = arith.constant 6 : index
    %c9_243 = arith.constant 9 : index
    %378 = memref.load %arg3[%c6_242, %c9_243] : memref<12x36xf32, #tpu.memory_space<smem>>
    %379 = vector.broadcast %378 : f32 to vector<8x128xf32>
    %380 = arith.select %359, %379, %342 : vector<8x128xi1>, vector<8x128xf32>
    %c7_244 = arith.constant 7 : index
    %c9_245 = arith.constant 9 : index
    %381 = memref.load %arg3[%c7_244, %c9_245] : memref<12x36xf32, #tpu.memory_space<smem>>
    %382 = vector.broadcast %381 : f32 to vector<8x128xf32>
    %383 = arith.select %359, %382, %345 : vector<8x128xi1>, vector<8x128xf32>
    %c8_246 = arith.constant 8 : index
    %c9_247 = arith.constant 9 : index
    %384 = memref.load %arg3[%c8_246, %c9_247] : memref<12x36xf32, #tpu.memory_space<smem>>
    %385 = vector.broadcast %384 : f32 to vector<8x128xf32>
    %386 = arith.select %359, %385, %348 : vector<8x128xi1>, vector<8x128xf32>
    %c9_248 = arith.constant 9 : index
    %c9_249 = arith.constant 9 : index
    %387 = memref.load %arg3[%c9_248, %c9_249] : memref<12x36xf32, #tpu.memory_space<smem>>
    %388 = vector.broadcast %387 : f32 to vector<8x128xf32>
    %389 = arith.select %359, %388, %351 : vector<8x128xi1>, vector<8x128xf32>
    %c10_250 = arith.constant 10 : index
    %c9_251 = arith.constant 9 : index
    %390 = memref.load %arg3[%c10_250, %c9_251] : memref<12x36xf32, #tpu.memory_space<smem>>
    %391 = vector.broadcast %390 : f32 to vector<8x128xf32>
    %392 = arith.select %359, %391, %354 : vector<8x128xi1>, vector<8x128xf32>
    %c11_252 = arith.constant 11 : index
    %c9_253 = arith.constant 9 : index
    %393 = memref.load %arg3[%c11_252, %c9_253] : memref<12x36xf32, #tpu.memory_space<smem>>
    %394 = vector.broadcast %393 : f32 to vector<8x128xf32>
    %395 = arith.select %359, %394, %357 : vector<8x128xi1>, vector<8x128xf32>
    %c10_i32 = arith.constant 10 : i32
    %396 = vector.broadcast %c10_i32 : i32 to vector<8x128xi32>
    %397 = arith.cmpi eq, %0, %396 : vector<8x128xi32>
    %c0_254 = arith.constant 0 : index
    %c10_255 = arith.constant 10 : index
    %398 = memref.load %arg3[%c0_254, %c10_255] : memref<12x36xf32, #tpu.memory_space<smem>>
    %399 = vector.broadcast %398 : f32 to vector<8x128xf32>
    %400 = arith.select %397, %399, %362 : vector<8x128xi1>, vector<8x128xf32>
    %c1_256 = arith.constant 1 : index
    %c10_257 = arith.constant 10 : index
    %401 = memref.load %arg3[%c1_256, %c10_257] : memref<12x36xf32, #tpu.memory_space<smem>>
    %402 = vector.broadcast %401 : f32 to vector<8x128xf32>
    %403 = arith.select %397, %402, %365 : vector<8x128xi1>, vector<8x128xf32>
    %c2_258 = arith.constant 2 : index
    %c10_259 = arith.constant 10 : index
    %404 = memref.load %arg3[%c2_258, %c10_259] : memref<12x36xf32, #tpu.memory_space<smem>>
    %405 = vector.broadcast %404 : f32 to vector<8x128xf32>
    %406 = arith.select %397, %405, %368 : vector<8x128xi1>, vector<8x128xf32>
    %c3_260 = arith.constant 3 : index
    %c10_261 = arith.constant 10 : index
    %407 = memref.load %arg3[%c3_260, %c10_261] : memref<12x36xf32, #tpu.memory_space<smem>>
    %408 = vector.broadcast %407 : f32 to vector<8x128xf32>
    %409 = arith.select %397, %408, %371 : vector<8x128xi1>, vector<8x128xf32>
    %c4_262 = arith.constant 4 : index
    %c10_263 = arith.constant 10 : index
    %410 = memref.load %arg3[%c4_262, %c10_263] : memref<12x36xf32, #tpu.memory_space<smem>>
    %411 = vector.broadcast %410 : f32 to vector<8x128xf32>
    %412 = arith.select %397, %411, %374 : vector<8x128xi1>, vector<8x128xf32>
    %c5_264 = arith.constant 5 : index
    %c10_265 = arith.constant 10 : index
    %413 = memref.load %arg3[%c5_264, %c10_265] : memref<12x36xf32, #tpu.memory_space<smem>>
    %414 = vector.broadcast %413 : f32 to vector<8x128xf32>
    %415 = arith.select %397, %414, %377 : vector<8x128xi1>, vector<8x128xf32>
    %c6_266 = arith.constant 6 : index
    %c10_267 = arith.constant 10 : index
    %416 = memref.load %arg3[%c6_266, %c10_267] : memref<12x36xf32, #tpu.memory_space<smem>>
    %417 = vector.broadcast %416 : f32 to vector<8x128xf32>
    %418 = arith.select %397, %417, %380 : vector<8x128xi1>, vector<8x128xf32>
    %c7_268 = arith.constant 7 : index
    %c10_269 = arith.constant 10 : index
    %419 = memref.load %arg3[%c7_268, %c10_269] : memref<12x36xf32, #tpu.memory_space<smem>>
    %420 = vector.broadcast %419 : f32 to vector<8x128xf32>
    %421 = arith.select %397, %420, %383 : vector<8x128xi1>, vector<8x128xf32>
    %c8_270 = arith.constant 8 : index
    %c10_271 = arith.constant 10 : index
    %422 = memref.load %arg3[%c8_270, %c10_271] : memref<12x36xf32, #tpu.memory_space<smem>>
    %423 = vector.broadcast %422 : f32 to vector<8x128xf32>
    %424 = arith.select %397, %423, %386 : vector<8x128xi1>, vector<8x128xf32>
    %c9_272 = arith.constant 9 : index
    %c10_273 = arith.constant 10 : index
    %425 = memref.load %arg3[%c9_272, %c10_273] : memref<12x36xf32, #tpu.memory_space<smem>>
    %426 = vector.broadcast %425 : f32 to vector<8x128xf32>
    %427 = arith.select %397, %426, %389 : vector<8x128xi1>, vector<8x128xf32>
    %c10_274 = arith.constant 10 : index
    %c10_275 = arith.constant 10 : index
    %428 = memref.load %arg3[%c10_274, %c10_275] : memref<12x36xf32, #tpu.memory_space<smem>>
    %429 = vector.broadcast %428 : f32 to vector<8x128xf32>
    %430 = arith.select %397, %429, %392 : vector<8x128xi1>, vector<8x128xf32>
    %c11_276 = arith.constant 11 : index
    %c10_277 = arith.constant 10 : index
    %431 = memref.load %arg3[%c11_276, %c10_277] : memref<12x36xf32, #tpu.memory_space<smem>>
    %432 = vector.broadcast %431 : f32 to vector<8x128xf32>
    %433 = arith.select %397, %432, %395 : vector<8x128xi1>, vector<8x128xf32>
    %c11_i32 = arith.constant 11 : i32
    %434 = vector.broadcast %c11_i32 : i32 to vector<8x128xi32>
    %435 = arith.cmpi eq, %0, %434 : vector<8x128xi32>
    %c0_278 = arith.constant 0 : index
    %c11_279 = arith.constant 11 : index
    %436 = memref.load %arg3[%c0_278, %c11_279] : memref<12x36xf32, #tpu.memory_space<smem>>
    %437 = vector.broadcast %436 : f32 to vector<8x128xf32>
    %438 = arith.select %435, %437, %400 : vector<8x128xi1>, vector<8x128xf32>
    %c1_280 = arith.constant 1 : index
    %c11_281 = arith.constant 11 : index
    %439 = memref.load %arg3[%c1_280, %c11_281] : memref<12x36xf32, #tpu.memory_space<smem>>
    %440 = vector.broadcast %439 : f32 to vector<8x128xf32>
    %441 = arith.select %435, %440, %403 : vector<8x128xi1>, vector<8x128xf32>
    %c2_282 = arith.constant 2 : index
    %c11_283 = arith.constant 11 : index
    %442 = memref.load %arg3[%c2_282, %c11_283] : memref<12x36xf32, #tpu.memory_space<smem>>
    %443 = vector.broadcast %442 : f32 to vector<8x128xf32>
    %444 = arith.select %435, %443, %406 : vector<8x128xi1>, vector<8x128xf32>
    %c3_284 = arith.constant 3 : index
    %c11_285 = arith.constant 11 : index
    %445 = memref.load %arg3[%c3_284, %c11_285] : memref<12x36xf32, #tpu.memory_space<smem>>
    %446 = vector.broadcast %445 : f32 to vector<8x128xf32>
    %447 = arith.select %435, %446, %409 : vector<8x128xi1>, vector<8x128xf32>
    %c4_286 = arith.constant 4 : index
    %c11_287 = arith.constant 11 : index
    %448 = memref.load %arg3[%c4_286, %c11_287] : memref<12x36xf32, #tpu.memory_space<smem>>
    %449 = vector.broadcast %448 : f32 to vector<8x128xf32>
    %450 = arith.select %435, %449, %412 : vector<8x128xi1>, vector<8x128xf32>
    %c5_288 = arith.constant 5 : index
    %c11_289 = arith.constant 11 : index
    %451 = memref.load %arg3[%c5_288, %c11_289] : memref<12x36xf32, #tpu.memory_space<smem>>
    %452 = vector.broadcast %451 : f32 to vector<8x128xf32>
    %453 = arith.select %435, %452, %415 : vector<8x128xi1>, vector<8x128xf32>
    %c6_290 = arith.constant 6 : index
    %c11_291 = arith.constant 11 : index
    %454 = memref.load %arg3[%c6_290, %c11_291] : memref<12x36xf32, #tpu.memory_space<smem>>
    %455 = vector.broadcast %454 : f32 to vector<8x128xf32>
    %456 = arith.select %435, %455, %418 : vector<8x128xi1>, vector<8x128xf32>
    %c7_292 = arith.constant 7 : index
    %c11_293 = arith.constant 11 : index
    %457 = memref.load %arg3[%c7_292, %c11_293] : memref<12x36xf32, #tpu.memory_space<smem>>
    %458 = vector.broadcast %457 : f32 to vector<8x128xf32>
    %459 = arith.select %435, %458, %421 : vector<8x128xi1>, vector<8x128xf32>
    %c8_294 = arith.constant 8 : index
    %c11_295 = arith.constant 11 : index
    %460 = memref.load %arg3[%c8_294, %c11_295] : memref<12x36xf32, #tpu.memory_space<smem>>
    %461 = vector.broadcast %460 : f32 to vector<8x128xf32>
    %462 = arith.select %435, %461, %424 : vector<8x128xi1>, vector<8x128xf32>
    %c9_296 = arith.constant 9 : index
    %c11_297 = arith.constant 11 : index
    %463 = memref.load %arg3[%c9_296, %c11_297] : memref<12x36xf32, #tpu.memory_space<smem>>
    %464 = vector.broadcast %463 : f32 to vector<8x128xf32>
    %465 = arith.select %435, %464, %427 : vector<8x128xi1>, vector<8x128xf32>
    %c10_298 = arith.constant 10 : index
    %c11_299 = arith.constant 11 : index
    %466 = memref.load %arg3[%c10_298, %c11_299] : memref<12x36xf32, #tpu.memory_space<smem>>
    %467 = vector.broadcast %466 : f32 to vector<8x128xf32>
    %468 = arith.select %435, %467, %430 : vector<8x128xi1>, vector<8x128xf32>
    %c11_300 = arith.constant 11 : index
    %c11_301 = arith.constant 11 : index
    %469 = memref.load %arg3[%c11_300, %c11_301] : memref<12x36xf32, #tpu.memory_space<smem>>
    %470 = vector.broadcast %469 : f32 to vector<8x128xf32>
    %471 = arith.select %435, %470, %433 : vector<8x128xi1>, vector<8x128xf32>
    %c12_i32 = arith.constant 12 : i32
    %472 = vector.broadcast %c12_i32 : i32 to vector<8x128xi32>
    %473 = arith.cmpi eq, %0, %472 : vector<8x128xi32>
    %c0_302 = arith.constant 0 : index
    %c12 = arith.constant 12 : index
    %474 = memref.load %arg3[%c0_302, %c12] : memref<12x36xf32, #tpu.memory_space<smem>>
    %475 = vector.broadcast %474 : f32 to vector<8x128xf32>
    %476 = arith.select %473, %475, %438 : vector<8x128xi1>, vector<8x128xf32>
    %c1_303 = arith.constant 1 : index
    %c12_304 = arith.constant 12 : index
    %477 = memref.load %arg3[%c1_303, %c12_304] : memref<12x36xf32, #tpu.memory_space<smem>>
    %478 = vector.broadcast %477 : f32 to vector<8x128xf32>
    %479 = arith.select %473, %478, %441 : vector<8x128xi1>, vector<8x128xf32>
    %c2_305 = arith.constant 2 : index
    %c12_306 = arith.constant 12 : index
    %480 = memref.load %arg3[%c2_305, %c12_306] : memref<12x36xf32, #tpu.memory_space<smem>>
    %481 = vector.broadcast %480 : f32 to vector<8x128xf32>
    %482 = arith.select %473, %481, %444 : vector<8x128xi1>, vector<8x128xf32>
    %c3_307 = arith.constant 3 : index
    %c12_308 = arith.constant 12 : index
    %483 = memref.load %arg3[%c3_307, %c12_308] : memref<12x36xf32, #tpu.memory_space<smem>>
    %484 = vector.broadcast %483 : f32 to vector<8x128xf32>
    %485 = arith.select %473, %484, %447 : vector<8x128xi1>, vector<8x128xf32>
    %c4_309 = arith.constant 4 : index
    %c12_310 = arith.constant 12 : index
    %486 = memref.load %arg3[%c4_309, %c12_310] : memref<12x36xf32, #tpu.memory_space<smem>>
    %487 = vector.broadcast %486 : f32 to vector<8x128xf32>
    %488 = arith.select %473, %487, %450 : vector<8x128xi1>, vector<8x128xf32>
    %c5_311 = arith.constant 5 : index
    %c12_312 = arith.constant 12 : index
    %489 = memref.load %arg3[%c5_311, %c12_312] : memref<12x36xf32, #tpu.memory_space<smem>>
    %490 = vector.broadcast %489 : f32 to vector<8x128xf32>
    %491 = arith.select %473, %490, %453 : vector<8x128xi1>, vector<8x128xf32>
    %c6_313 = arith.constant 6 : index
    %c12_314 = arith.constant 12 : index
    %492 = memref.load %arg3[%c6_313, %c12_314] : memref<12x36xf32, #tpu.memory_space<smem>>
    %493 = vector.broadcast %492 : f32 to vector<8x128xf32>
    %494 = arith.select %473, %493, %456 : vector<8x128xi1>, vector<8x128xf32>
    %c7_315 = arith.constant 7 : index
    %c12_316 = arith.constant 12 : index
    %495 = memref.load %arg3[%c7_315, %c12_316] : memref<12x36xf32, #tpu.memory_space<smem>>
    %496 = vector.broadcast %495 : f32 to vector<8x128xf32>
    %497 = arith.select %473, %496, %459 : vector<8x128xi1>, vector<8x128xf32>
    %c8_317 = arith.constant 8 : index
    %c12_318 = arith.constant 12 : index
    %498 = memref.load %arg3[%c8_317, %c12_318] : memref<12x36xf32, #tpu.memory_space<smem>>
    %499 = vector.broadcast %498 : f32 to vector<8x128xf32>
    %500 = arith.select %473, %499, %462 : vector<8x128xi1>, vector<8x128xf32>
    %c9_319 = arith.constant 9 : index
    %c12_320 = arith.constant 12 : index
    %501 = memref.load %arg3[%c9_319, %c12_320] : memref<12x36xf32, #tpu.memory_space<smem>>
    %502 = vector.broadcast %501 : f32 to vector<8x128xf32>
    %503 = arith.select %473, %502, %465 : vector<8x128xi1>, vector<8x128xf32>
    %c10_321 = arith.constant 10 : index
    %c12_322 = arith.constant 12 : index
    %504 = memref.load %arg3[%c10_321, %c12_322] : memref<12x36xf32, #tpu.memory_space<smem>>
    %505 = vector.broadcast %504 : f32 to vector<8x128xf32>
    %506 = arith.select %473, %505, %468 : vector<8x128xi1>, vector<8x128xf32>
    %c11_323 = arith.constant 11 : index
    %c12_324 = arith.constant 12 : index
    %507 = memref.load %arg3[%c11_323, %c12_324] : memref<12x36xf32, #tpu.memory_space<smem>>
    %508 = vector.broadcast %507 : f32 to vector<8x128xf32>
    %509 = arith.select %473, %508, %471 : vector<8x128xi1>, vector<8x128xf32>
    %c13_i32 = arith.constant 13 : i32
    %510 = vector.broadcast %c13_i32 : i32 to vector<8x128xi32>
    %511 = arith.cmpi eq, %0, %510 : vector<8x128xi32>
    %c0_325 = arith.constant 0 : index
    %c13 = arith.constant 13 : index
    %512 = memref.load %arg3[%c0_325, %c13] : memref<12x36xf32, #tpu.memory_space<smem>>
    %513 = vector.broadcast %512 : f32 to vector<8x128xf32>
    %514 = arith.select %511, %513, %476 : vector<8x128xi1>, vector<8x128xf32>
    %c1_326 = arith.constant 1 : index
    %c13_327 = arith.constant 13 : index
    %515 = memref.load %arg3[%c1_326, %c13_327] : memref<12x36xf32, #tpu.memory_space<smem>>
    %516 = vector.broadcast %515 : f32 to vector<8x128xf32>
    %517 = arith.select %511, %516, %479 : vector<8x128xi1>, vector<8x128xf32>
    %c2_328 = arith.constant 2 : index
    %c13_329 = arith.constant 13 : index
    %518 = memref.load %arg3[%c2_328, %c13_329] : memref<12x36xf32, #tpu.memory_space<smem>>
    %519 = vector.broadcast %518 : f32 to vector<8x128xf32>
    %520 = arith.select %511, %519, %482 : vector<8x128xi1>, vector<8x128xf32>
    %c3_330 = arith.constant 3 : index
    %c13_331 = arith.constant 13 : index
    %521 = memref.load %arg3[%c3_330, %c13_331] : memref<12x36xf32, #tpu.memory_space<smem>>
    %522 = vector.broadcast %521 : f32 to vector<8x128xf32>
    %523 = arith.select %511, %522, %485 : vector<8x128xi1>, vector<8x128xf32>
    %c4_332 = arith.constant 4 : index
    %c13_333 = arith.constant 13 : index
    %524 = memref.load %arg3[%c4_332, %c13_333] : memref<12x36xf32, #tpu.memory_space<smem>>
    %525 = vector.broadcast %524 : f32 to vector<8x128xf32>
    %526 = arith.select %511, %525, %488 : vector<8x128xi1>, vector<8x128xf32>
    %c5_334 = arith.constant 5 : index
    %c13_335 = arith.constant 13 : index
    %527 = memref.load %arg3[%c5_334, %c13_335] : memref<12x36xf32, #tpu.memory_space<smem>>
    %528 = vector.broadcast %527 : f32 to vector<8x128xf32>
    %529 = arith.select %511, %528, %491 : vector<8x128xi1>, vector<8x128xf32>
    %c6_336 = arith.constant 6 : index
    %c13_337 = arith.constant 13 : index
    %530 = memref.load %arg3[%c6_336, %c13_337] : memref<12x36xf32, #tpu.memory_space<smem>>
    %531 = vector.broadcast %530 : f32 to vector<8x128xf32>
    %532 = arith.select %511, %531, %494 : vector<8x128xi1>, vector<8x128xf32>
    %c7_338 = arith.constant 7 : index
    %c13_339 = arith.constant 13 : index
    %533 = memref.load %arg3[%c7_338, %c13_339] : memref<12x36xf32, #tpu.memory_space<smem>>
    %534 = vector.broadcast %533 : f32 to vector<8x128xf32>
    %535 = arith.select %511, %534, %497 : vector<8x128xi1>, vector<8x128xf32>
    %c8_340 = arith.constant 8 : index
    %c13_341 = arith.constant 13 : index
    %536 = memref.load %arg3[%c8_340, %c13_341] : memref<12x36xf32, #tpu.memory_space<smem>>
    %537 = vector.broadcast %536 : f32 to vector<8x128xf32>
    %538 = arith.select %511, %537, %500 : vector<8x128xi1>, vector<8x128xf32>
    %c9_342 = arith.constant 9 : index
    %c13_343 = arith.constant 13 : index
    %539 = memref.load %arg3[%c9_342, %c13_343] : memref<12x36xf32, #tpu.memory_space<smem>>
    %540 = vector.broadcast %539 : f32 to vector<8x128xf32>
    %541 = arith.select %511, %540, %503 : vector<8x128xi1>, vector<8x128xf32>
    %c10_344 = arith.constant 10 : index
    %c13_345 = arith.constant 13 : index
    %542 = memref.load %arg3[%c10_344, %c13_345] : memref<12x36xf32, #tpu.memory_space<smem>>
    %543 = vector.broadcast %542 : f32 to vector<8x128xf32>
    %544 = arith.select %511, %543, %506 : vector<8x128xi1>, vector<8x128xf32>
    %c11_346 = arith.constant 11 : index
    %c13_347 = arith.constant 13 : index
    %545 = memref.load %arg3[%c11_346, %c13_347] : memref<12x36xf32, #tpu.memory_space<smem>>
    %546 = vector.broadcast %545 : f32 to vector<8x128xf32>
    %547 = arith.select %511, %546, %509 : vector<8x128xi1>, vector<8x128xf32>
    %c14_i32 = arith.constant 14 : i32
    %548 = vector.broadcast %c14_i32 : i32 to vector<8x128xi32>
    %549 = arith.cmpi eq, %0, %548 : vector<8x128xi32>
    %c0_348 = arith.constant 0 : index
    %c14 = arith.constant 14 : index
    %550 = memref.load %arg3[%c0_348, %c14] : memref<12x36xf32, #tpu.memory_space<smem>>
    %551 = vector.broadcast %550 : f32 to vector<8x128xf32>
    %552 = arith.select %549, %551, %514 : vector<8x128xi1>, vector<8x128xf32>
    %c1_349 = arith.constant 1 : index
    %c14_350 = arith.constant 14 : index
    %553 = memref.load %arg3[%c1_349, %c14_350] : memref<12x36xf32, #tpu.memory_space<smem>>
    %554 = vector.broadcast %553 : f32 to vector<8x128xf32>
    %555 = arith.select %549, %554, %517 : vector<8x128xi1>, vector<8x128xf32>
    %c2_351 = arith.constant 2 : index
    %c14_352 = arith.constant 14 : index
    %556 = memref.load %arg3[%c2_351, %c14_352] : memref<12x36xf32, #tpu.memory_space<smem>>
    %557 = vector.broadcast %556 : f32 to vector<8x128xf32>
    %558 = arith.select %549, %557, %520 : vector<8x128xi1>, vector<8x128xf32>
    %c3_353 = arith.constant 3 : index
    %c14_354 = arith.constant 14 : index
    %559 = memref.load %arg3[%c3_353, %c14_354] : memref<12x36xf32, #tpu.memory_space<smem>>
    %560 = vector.broadcast %559 : f32 to vector<8x128xf32>
    %561 = arith.select %549, %560, %523 : vector<8x128xi1>, vector<8x128xf32>
    %c4_355 = arith.constant 4 : index
    %c14_356 = arith.constant 14 : index
    %562 = memref.load %arg3[%c4_355, %c14_356] : memref<12x36xf32, #tpu.memory_space<smem>>
    %563 = vector.broadcast %562 : f32 to vector<8x128xf32>
    %564 = arith.select %549, %563, %526 : vector<8x128xi1>, vector<8x128xf32>
    %c5_357 = arith.constant 5 : index
    %c14_358 = arith.constant 14 : index
    %565 = memref.load %arg3[%c5_357, %c14_358] : memref<12x36xf32, #tpu.memory_space<smem>>
    %566 = vector.broadcast %565 : f32 to vector<8x128xf32>
    %567 = arith.select %549, %566, %529 : vector<8x128xi1>, vector<8x128xf32>
    %c6_359 = arith.constant 6 : index
    %c14_360 = arith.constant 14 : index
    %568 = memref.load %arg3[%c6_359, %c14_360] : memref<12x36xf32, #tpu.memory_space<smem>>
    %569 = vector.broadcast %568 : f32 to vector<8x128xf32>
    %570 = arith.select %549, %569, %532 : vector<8x128xi1>, vector<8x128xf32>
    %c7_361 = arith.constant 7 : index
    %c14_362 = arith.constant 14 : index
    %571 = memref.load %arg3[%c7_361, %c14_362] : memref<12x36xf32, #tpu.memory_space<smem>>
    %572 = vector.broadcast %571 : f32 to vector<8x128xf32>
    %573 = arith.select %549, %572, %535 : vector<8x128xi1>, vector<8x128xf32>
    %c8_363 = arith.constant 8 : index
    %c14_364 = arith.constant 14 : index
    %574 = memref.load %arg3[%c8_363, %c14_364] : memref<12x36xf32, #tpu.memory_space<smem>>
    %575 = vector.broadcast %574 : f32 to vector<8x128xf32>
    %576 = arith.select %549, %575, %538 : vector<8x128xi1>, vector<8x128xf32>
    %c9_365 = arith.constant 9 : index
    %c14_366 = arith.constant 14 : index
    %577 = memref.load %arg3[%c9_365, %c14_366] : memref<12x36xf32, #tpu.memory_space<smem>>
    %578 = vector.broadcast %577 : f32 to vector<8x128xf32>
    %579 = arith.select %549, %578, %541 : vector<8x128xi1>, vector<8x128xf32>
    %c10_367 = arith.constant 10 : index
    %c14_368 = arith.constant 14 : index
    %580 = memref.load %arg3[%c10_367, %c14_368] : memref<12x36xf32, #tpu.memory_space<smem>>
    %581 = vector.broadcast %580 : f32 to vector<8x128xf32>
    %582 = arith.select %549, %581, %544 : vector<8x128xi1>, vector<8x128xf32>
    %c11_369 = arith.constant 11 : index
    %c14_370 = arith.constant 14 : index
    %583 = memref.load %arg3[%c11_369, %c14_370] : memref<12x36xf32, #tpu.memory_space<smem>>
    %584 = vector.broadcast %583 : f32 to vector<8x128xf32>
    %585 = arith.select %549, %584, %547 : vector<8x128xi1>, vector<8x128xf32>
    %c15_i32 = arith.constant 15 : i32
    %586 = vector.broadcast %c15_i32 : i32 to vector<8x128xi32>
    %587 = arith.cmpi eq, %0, %586 : vector<8x128xi32>
    %c0_371 = arith.constant 0 : index
    %c15 = arith.constant 15 : index
    %588 = memref.load %arg3[%c0_371, %c15] : memref<12x36xf32, #tpu.memory_space<smem>>
    %589 = vector.broadcast %588 : f32 to vector<8x128xf32>
    %590 = arith.select %587, %589, %552 : vector<8x128xi1>, vector<8x128xf32>
    %c1_372 = arith.constant 1 : index
    %c15_373 = arith.constant 15 : index
    %591 = memref.load %arg3[%c1_372, %c15_373] : memref<12x36xf32, #tpu.memory_space<smem>>
    %592 = vector.broadcast %591 : f32 to vector<8x128xf32>
    %593 = arith.select %587, %592, %555 : vector<8x128xi1>, vector<8x128xf32>
    %c2_374 = arith.constant 2 : index
    %c15_375 = arith.constant 15 : index
    %594 = memref.load %arg3[%c2_374, %c15_375] : memref<12x36xf32, #tpu.memory_space<smem>>
    %595 = vector.broadcast %594 : f32 to vector<8x128xf32>
    %596 = arith.select %587, %595, %558 : vector<8x128xi1>, vector<8x128xf32>
    %c3_376 = arith.constant 3 : index
    %c15_377 = arith.constant 15 : index
    %597 = memref.load %arg3[%c3_376, %c15_377] : memref<12x36xf32, #tpu.memory_space<smem>>
    %598 = vector.broadcast %597 : f32 to vector<8x128xf32>
    %599 = arith.select %587, %598, %561 : vector<8x128xi1>, vector<8x128xf32>
    %c4_378 = arith.constant 4 : index
    %c15_379 = arith.constant 15 : index
    %600 = memref.load %arg3[%c4_378, %c15_379] : memref<12x36xf32, #tpu.memory_space<smem>>
    %601 = vector.broadcast %600 : f32 to vector<8x128xf32>
    %602 = arith.select %587, %601, %564 : vector<8x128xi1>, vector<8x128xf32>
    %c5_380 = arith.constant 5 : index
    %c15_381 = arith.constant 15 : index
    %603 = memref.load %arg3[%c5_380, %c15_381] : memref<12x36xf32, #tpu.memory_space<smem>>
    %604 = vector.broadcast %603 : f32 to vector<8x128xf32>
    %605 = arith.select %587, %604, %567 : vector<8x128xi1>, vector<8x128xf32>
    %c6_382 = arith.constant 6 : index
    %c15_383 = arith.constant 15 : index
    %606 = memref.load %arg3[%c6_382, %c15_383] : memref<12x36xf32, #tpu.memory_space<smem>>
    %607 = vector.broadcast %606 : f32 to vector<8x128xf32>
    %608 = arith.select %587, %607, %570 : vector<8x128xi1>, vector<8x128xf32>
    %c7_384 = arith.constant 7 : index
    %c15_385 = arith.constant 15 : index
    %609 = memref.load %arg3[%c7_384, %c15_385] : memref<12x36xf32, #tpu.memory_space<smem>>
    %610 = vector.broadcast %609 : f32 to vector<8x128xf32>
    %611 = arith.select %587, %610, %573 : vector<8x128xi1>, vector<8x128xf32>
    %c8_386 = arith.constant 8 : index
    %c15_387 = arith.constant 15 : index
    %612 = memref.load %arg3[%c8_386, %c15_387] : memref<12x36xf32, #tpu.memory_space<smem>>
    %613 = vector.broadcast %612 : f32 to vector<8x128xf32>
    %614 = arith.select %587, %613, %576 : vector<8x128xi1>, vector<8x128xf32>
    %c9_388 = arith.constant 9 : index
    %c15_389 = arith.constant 15 : index
    %615 = memref.load %arg3[%c9_388, %c15_389] : memref<12x36xf32, #tpu.memory_space<smem>>
    %616 = vector.broadcast %615 : f32 to vector<8x128xf32>
    %617 = arith.select %587, %616, %579 : vector<8x128xi1>, vector<8x128xf32>
    %c10_390 = arith.constant 10 : index
    %c15_391 = arith.constant 15 : index
    %618 = memref.load %arg3[%c10_390, %c15_391] : memref<12x36xf32, #tpu.memory_space<smem>>
    %619 = vector.broadcast %618 : f32 to vector<8x128xf32>
    %620 = arith.select %587, %619, %582 : vector<8x128xi1>, vector<8x128xf32>
    %c11_392 = arith.constant 11 : index
    %c15_393 = arith.constant 15 : index
    %621 = memref.load %arg3[%c11_392, %c15_393] : memref<12x36xf32, #tpu.memory_space<smem>>
    %622 = vector.broadcast %621 : f32 to vector<8x128xf32>
    %623 = arith.select %587, %622, %585 : vector<8x128xi1>, vector<8x128xf32>
    %c16_i32 = arith.constant 16 : i32
    %624 = vector.broadcast %c16_i32 : i32 to vector<8x128xi32>
    %625 = arith.cmpi eq, %0, %624 : vector<8x128xi32>
    %c0_394 = arith.constant 0 : index
    %c16 = arith.constant 16 : index
    %626 = memref.load %arg3[%c0_394, %c16] : memref<12x36xf32, #tpu.memory_space<smem>>
    %627 = vector.broadcast %626 : f32 to vector<8x128xf32>
    %628 = arith.select %625, %627, %590 : vector<8x128xi1>, vector<8x128xf32>
    %c1_395 = arith.constant 1 : index
    %c16_396 = arith.constant 16 : index
    %629 = memref.load %arg3[%c1_395, %c16_396] : memref<12x36xf32, #tpu.memory_space<smem>>
    %630 = vector.broadcast %629 : f32 to vector<8x128xf32>
    %631 = arith.select %625, %630, %593 : vector<8x128xi1>, vector<8x128xf32>
    %c2_397 = arith.constant 2 : index
    %c16_398 = arith.constant 16 : index
    %632 = memref.load %arg3[%c2_397, %c16_398] : memref<12x36xf32, #tpu.memory_space<smem>>
    %633 = vector.broadcast %632 : f32 to vector<8x128xf32>
    %634 = arith.select %625, %633, %596 : vector<8x128xi1>, vector<8x128xf32>
    %c3_399 = arith.constant 3 : index
    %c16_400 = arith.constant 16 : index
    %635 = memref.load %arg3[%c3_399, %c16_400] : memref<12x36xf32, #tpu.memory_space<smem>>
    %636 = vector.broadcast %635 : f32 to vector<8x128xf32>
    %637 = arith.select %625, %636, %599 : vector<8x128xi1>, vector<8x128xf32>
    %c4_401 = arith.constant 4 : index
    %c16_402 = arith.constant 16 : index
    %638 = memref.load %arg3[%c4_401, %c16_402] : memref<12x36xf32, #tpu.memory_space<smem>>
    %639 = vector.broadcast %638 : f32 to vector<8x128xf32>
    %640 = arith.select %625, %639, %602 : vector<8x128xi1>, vector<8x128xf32>
    %c5_403 = arith.constant 5 : index
    %c16_404 = arith.constant 16 : index
    %641 = memref.load %arg3[%c5_403, %c16_404] : memref<12x36xf32, #tpu.memory_space<smem>>
    %642 = vector.broadcast %641 : f32 to vector<8x128xf32>
    %643 = arith.select %625, %642, %605 : vector<8x128xi1>, vector<8x128xf32>
    %c6_405 = arith.constant 6 : index
    %c16_406 = arith.constant 16 : index
    %644 = memref.load %arg3[%c6_405, %c16_406] : memref<12x36xf32, #tpu.memory_space<smem>>
    %645 = vector.broadcast %644 : f32 to vector<8x128xf32>
    %646 = arith.select %625, %645, %608 : vector<8x128xi1>, vector<8x128xf32>
    %c7_407 = arith.constant 7 : index
    %c16_408 = arith.constant 16 : index
    %647 = memref.load %arg3[%c7_407, %c16_408] : memref<12x36xf32, #tpu.memory_space<smem>>
    %648 = vector.broadcast %647 : f32 to vector<8x128xf32>
    %649 = arith.select %625, %648, %611 : vector<8x128xi1>, vector<8x128xf32>
    %c8_409 = arith.constant 8 : index
    %c16_410 = arith.constant 16 : index
    %650 = memref.load %arg3[%c8_409, %c16_410] : memref<12x36xf32, #tpu.memory_space<smem>>
    %651 = vector.broadcast %650 : f32 to vector<8x128xf32>
    %652 = arith.select %625, %651, %614 : vector<8x128xi1>, vector<8x128xf32>
    %c9_411 = arith.constant 9 : index
    %c16_412 = arith.constant 16 : index
    %653 = memref.load %arg3[%c9_411, %c16_412] : memref<12x36xf32, #tpu.memory_space<smem>>
    %654 = vector.broadcast %653 : f32 to vector<8x128xf32>
    %655 = arith.select %625, %654, %617 : vector<8x128xi1>, vector<8x128xf32>
    %c10_413 = arith.constant 10 : index
    %c16_414 = arith.constant 16 : index
    %656 = memref.load %arg3[%c10_413, %c16_414] : memref<12x36xf32, #tpu.memory_space<smem>>
    %657 = vector.broadcast %656 : f32 to vector<8x128xf32>
    %658 = arith.select %625, %657, %620 : vector<8x128xi1>, vector<8x128xf32>
    %c11_415 = arith.constant 11 : index
    %c16_416 = arith.constant 16 : index
    %659 = memref.load %arg3[%c11_415, %c16_416] : memref<12x36xf32, #tpu.memory_space<smem>>
    %660 = vector.broadcast %659 : f32 to vector<8x128xf32>
    %661 = arith.select %625, %660, %623 : vector<8x128xi1>, vector<8x128xf32>
    %c17_i32 = arith.constant 17 : i32
    %662 = vector.broadcast %c17_i32 : i32 to vector<8x128xi32>
    %663 = arith.cmpi eq, %0, %662 : vector<8x128xi32>
    %c0_417 = arith.constant 0 : index
    %c17 = arith.constant 17 : index
    %664 = memref.load %arg3[%c0_417, %c17] : memref<12x36xf32, #tpu.memory_space<smem>>
    %665 = vector.broadcast %664 : f32 to vector<8x128xf32>
    %666 = arith.select %663, %665, %628 : vector<8x128xi1>, vector<8x128xf32>
    %c1_418 = arith.constant 1 : index
    %c17_419 = arith.constant 17 : index
    %667 = memref.load %arg3[%c1_418, %c17_419] : memref<12x36xf32, #tpu.memory_space<smem>>
    %668 = vector.broadcast %667 : f32 to vector<8x128xf32>
    %669 = arith.select %663, %668, %631 : vector<8x128xi1>, vector<8x128xf32>
    %c2_420 = arith.constant 2 : index
    %c17_421 = arith.constant 17 : index
    %670 = memref.load %arg3[%c2_420, %c17_421] : memref<12x36xf32, #tpu.memory_space<smem>>
    %671 = vector.broadcast %670 : f32 to vector<8x128xf32>
    %672 = arith.select %663, %671, %634 : vector<8x128xi1>, vector<8x128xf32>
    %c3_422 = arith.constant 3 : index
    %c17_423 = arith.constant 17 : index
    %673 = memref.load %arg3[%c3_422, %c17_423] : memref<12x36xf32, #tpu.memory_space<smem>>
    %674 = vector.broadcast %673 : f32 to vector<8x128xf32>
    %675 = arith.select %663, %674, %637 : vector<8x128xi1>, vector<8x128xf32>
    %c4_424 = arith.constant 4 : index
    %c17_425 = arith.constant 17 : index
    %676 = memref.load %arg3[%c4_424, %c17_425] : memref<12x36xf32, #tpu.memory_space<smem>>
    %677 = vector.broadcast %676 : f32 to vector<8x128xf32>
    %678 = arith.select %663, %677, %640 : vector<8x128xi1>, vector<8x128xf32>
    %c5_426 = arith.constant 5 : index
    %c17_427 = arith.constant 17 : index
    %679 = memref.load %arg3[%c5_426, %c17_427] : memref<12x36xf32, #tpu.memory_space<smem>>
    %680 = vector.broadcast %679 : f32 to vector<8x128xf32>
    %681 = arith.select %663, %680, %643 : vector<8x128xi1>, vector<8x128xf32>
    %c6_428 = arith.constant 6 : index
    %c17_429 = arith.constant 17 : index
    %682 = memref.load %arg3[%c6_428, %c17_429] : memref<12x36xf32, #tpu.memory_space<smem>>
    %683 = vector.broadcast %682 : f32 to vector<8x128xf32>
    %684 = arith.select %663, %683, %646 : vector<8x128xi1>, vector<8x128xf32>
    %c7_430 = arith.constant 7 : index
    %c17_431 = arith.constant 17 : index
    %685 = memref.load %arg3[%c7_430, %c17_431] : memref<12x36xf32, #tpu.memory_space<smem>>
    %686 = vector.broadcast %685 : f32 to vector<8x128xf32>
    %687 = arith.select %663, %686, %649 : vector<8x128xi1>, vector<8x128xf32>
    %c8_432 = arith.constant 8 : index
    %c17_433 = arith.constant 17 : index
    %688 = memref.load %arg3[%c8_432, %c17_433] : memref<12x36xf32, #tpu.memory_space<smem>>
    %689 = vector.broadcast %688 : f32 to vector<8x128xf32>
    %690 = arith.select %663, %689, %652 : vector<8x128xi1>, vector<8x128xf32>
    %c9_434 = arith.constant 9 : index
    %c17_435 = arith.constant 17 : index
    %691 = memref.load %arg3[%c9_434, %c17_435] : memref<12x36xf32, #tpu.memory_space<smem>>
    %692 = vector.broadcast %691 : f32 to vector<8x128xf32>
    %693 = arith.select %663, %692, %655 : vector<8x128xi1>, vector<8x128xf32>
    %c10_436 = arith.constant 10 : index
    %c17_437 = arith.constant 17 : index
    %694 = memref.load %arg3[%c10_436, %c17_437] : memref<12x36xf32, #tpu.memory_space<smem>>
    %695 = vector.broadcast %694 : f32 to vector<8x128xf32>
    %696 = arith.select %663, %695, %658 : vector<8x128xi1>, vector<8x128xf32>
    %c11_438 = arith.constant 11 : index
    %c17_439 = arith.constant 17 : index
    %697 = memref.load %arg3[%c11_438, %c17_439] : memref<12x36xf32, #tpu.memory_space<smem>>
    %698 = vector.broadcast %697 : f32 to vector<8x128xf32>
    %699 = arith.select %663, %698, %661 : vector<8x128xi1>, vector<8x128xf32>
    %c18_i32 = arith.constant 18 : i32
    %700 = vector.broadcast %c18_i32 : i32 to vector<8x128xi32>
    %701 = arith.cmpi eq, %0, %700 : vector<8x128xi32>
    %c0_440 = arith.constant 0 : index
    %c18 = arith.constant 18 : index
    %702 = memref.load %arg3[%c0_440, %c18] : memref<12x36xf32, #tpu.memory_space<smem>>
    %703 = vector.broadcast %702 : f32 to vector<8x128xf32>
    %704 = arith.select %701, %703, %666 : vector<8x128xi1>, vector<8x128xf32>
    %c1_441 = arith.constant 1 : index
    %c18_442 = arith.constant 18 : index
    %705 = memref.load %arg3[%c1_441, %c18_442] : memref<12x36xf32, #tpu.memory_space<smem>>
    %706 = vector.broadcast %705 : f32 to vector<8x128xf32>
    %707 = arith.select %701, %706, %669 : vector<8x128xi1>, vector<8x128xf32>
    %c2_443 = arith.constant 2 : index
    %c18_444 = arith.constant 18 : index
    %708 = memref.load %arg3[%c2_443, %c18_444] : memref<12x36xf32, #tpu.memory_space<smem>>
    %709 = vector.broadcast %708 : f32 to vector<8x128xf32>
    %710 = arith.select %701, %709, %672 : vector<8x128xi1>, vector<8x128xf32>
    %c3_445 = arith.constant 3 : index
    %c18_446 = arith.constant 18 : index
    %711 = memref.load %arg3[%c3_445, %c18_446] : memref<12x36xf32, #tpu.memory_space<smem>>
    %712 = vector.broadcast %711 : f32 to vector<8x128xf32>
    %713 = arith.select %701, %712, %675 : vector<8x128xi1>, vector<8x128xf32>
    %c4_447 = arith.constant 4 : index
    %c18_448 = arith.constant 18 : index
    %714 = memref.load %arg3[%c4_447, %c18_448] : memref<12x36xf32, #tpu.memory_space<smem>>
    %715 = vector.broadcast %714 : f32 to vector<8x128xf32>
    %716 = arith.select %701, %715, %678 : vector<8x128xi1>, vector<8x128xf32>
    %c5_449 = arith.constant 5 : index
    %c18_450 = arith.constant 18 : index
    %717 = memref.load %arg3[%c5_449, %c18_450] : memref<12x36xf32, #tpu.memory_space<smem>>
    %718 = vector.broadcast %717 : f32 to vector<8x128xf32>
    %719 = arith.select %701, %718, %681 : vector<8x128xi1>, vector<8x128xf32>
    %c6_451 = arith.constant 6 : index
    %c18_452 = arith.constant 18 : index
    %720 = memref.load %arg3[%c6_451, %c18_452] : memref<12x36xf32, #tpu.memory_space<smem>>
    %721 = vector.broadcast %720 : f32 to vector<8x128xf32>
    %722 = arith.select %701, %721, %684 : vector<8x128xi1>, vector<8x128xf32>
    %c7_453 = arith.constant 7 : index
    %c18_454 = arith.constant 18 : index
    %723 = memref.load %arg3[%c7_453, %c18_454] : memref<12x36xf32, #tpu.memory_space<smem>>
    %724 = vector.broadcast %723 : f32 to vector<8x128xf32>
    %725 = arith.select %701, %724, %687 : vector<8x128xi1>, vector<8x128xf32>
    %c8_455 = arith.constant 8 : index
    %c18_456 = arith.constant 18 : index
    %726 = memref.load %arg3[%c8_455, %c18_456] : memref<12x36xf32, #tpu.memory_space<smem>>
    %727 = vector.broadcast %726 : f32 to vector<8x128xf32>
    %728 = arith.select %701, %727, %690 : vector<8x128xi1>, vector<8x128xf32>
    %c9_457 = arith.constant 9 : index
    %c18_458 = arith.constant 18 : index
    %729 = memref.load %arg3[%c9_457, %c18_458] : memref<12x36xf32, #tpu.memory_space<smem>>
    %730 = vector.broadcast %729 : f32 to vector<8x128xf32>
    %731 = arith.select %701, %730, %693 : vector<8x128xi1>, vector<8x128xf32>
    %c10_459 = arith.constant 10 : index
    %c18_460 = arith.constant 18 : index
    %732 = memref.load %arg3[%c10_459, %c18_460] : memref<12x36xf32, #tpu.memory_space<smem>>
    %733 = vector.broadcast %732 : f32 to vector<8x128xf32>
    %734 = arith.select %701, %733, %696 : vector<8x128xi1>, vector<8x128xf32>
    %c11_461 = arith.constant 11 : index
    %c18_462 = arith.constant 18 : index
    %735 = memref.load %arg3[%c11_461, %c18_462] : memref<12x36xf32, #tpu.memory_space<smem>>
    %736 = vector.broadcast %735 : f32 to vector<8x128xf32>
    %737 = arith.select %701, %736, %699 : vector<8x128xi1>, vector<8x128xf32>
    %c19_i32 = arith.constant 19 : i32
    %738 = vector.broadcast %c19_i32 : i32 to vector<8x128xi32>
    %739 = arith.cmpi eq, %0, %738 : vector<8x128xi32>
    %c0_463 = arith.constant 0 : index
    %c19 = arith.constant 19 : index
    %740 = memref.load %arg3[%c0_463, %c19] : memref<12x36xf32, #tpu.memory_space<smem>>
    %741 = vector.broadcast %740 : f32 to vector<8x128xf32>
    %742 = arith.select %739, %741, %704 : vector<8x128xi1>, vector<8x128xf32>
    %c1_464 = arith.constant 1 : index
    %c19_465 = arith.constant 19 : index
    %743 = memref.load %arg3[%c1_464, %c19_465] : memref<12x36xf32, #tpu.memory_space<smem>>
    %744 = vector.broadcast %743 : f32 to vector<8x128xf32>
    %745 = arith.select %739, %744, %707 : vector<8x128xi1>, vector<8x128xf32>
    %c2_466 = arith.constant 2 : index
    %c19_467 = arith.constant 19 : index
    %746 = memref.load %arg3[%c2_466, %c19_467] : memref<12x36xf32, #tpu.memory_space<smem>>
    %747 = vector.broadcast %746 : f32 to vector<8x128xf32>
    %748 = arith.select %739, %747, %710 : vector<8x128xi1>, vector<8x128xf32>
    %c3_468 = arith.constant 3 : index
    %c19_469 = arith.constant 19 : index
    %749 = memref.load %arg3[%c3_468, %c19_469] : memref<12x36xf32, #tpu.memory_space<smem>>
    %750 = vector.broadcast %749 : f32 to vector<8x128xf32>
    %751 = arith.select %739, %750, %713 : vector<8x128xi1>, vector<8x128xf32>
    %c4_470 = arith.constant 4 : index
    %c19_471 = arith.constant 19 : index
    %752 = memref.load %arg3[%c4_470, %c19_471] : memref<12x36xf32, #tpu.memory_space<smem>>
    %753 = vector.broadcast %752 : f32 to vector<8x128xf32>
    %754 = arith.select %739, %753, %716 : vector<8x128xi1>, vector<8x128xf32>
    %c5_472 = arith.constant 5 : index
    %c19_473 = arith.constant 19 : index
    %755 = memref.load %arg3[%c5_472, %c19_473] : memref<12x36xf32, #tpu.memory_space<smem>>
    %756 = vector.broadcast %755 : f32 to vector<8x128xf32>
    %757 = arith.select %739, %756, %719 : vector<8x128xi1>, vector<8x128xf32>
    %c6_474 = arith.constant 6 : index
    %c19_475 = arith.constant 19 : index
    %758 = memref.load %arg3[%c6_474, %c19_475] : memref<12x36xf32, #tpu.memory_space<smem>>
    %759 = vector.broadcast %758 : f32 to vector<8x128xf32>
    %760 = arith.select %739, %759, %722 : vector<8x128xi1>, vector<8x128xf32>
    %c7_476 = arith.constant 7 : index
    %c19_477 = arith.constant 19 : index
    %761 = memref.load %arg3[%c7_476, %c19_477] : memref<12x36xf32, #tpu.memory_space<smem>>
    %762 = vector.broadcast %761 : f32 to vector<8x128xf32>
    %763 = arith.select %739, %762, %725 : vector<8x128xi1>, vector<8x128xf32>
    %c8_478 = arith.constant 8 : index
    %c19_479 = arith.constant 19 : index
    %764 = memref.load %arg3[%c8_478, %c19_479] : memref<12x36xf32, #tpu.memory_space<smem>>
    %765 = vector.broadcast %764 : f32 to vector<8x128xf32>
    %766 = arith.select %739, %765, %728 : vector<8x128xi1>, vector<8x128xf32>
    %c9_480 = arith.constant 9 : index
    %c19_481 = arith.constant 19 : index
    %767 = memref.load %arg3[%c9_480, %c19_481] : memref<12x36xf32, #tpu.memory_space<smem>>
    %768 = vector.broadcast %767 : f32 to vector<8x128xf32>
    %769 = arith.select %739, %768, %731 : vector<8x128xi1>, vector<8x128xf32>
    %c10_482 = arith.constant 10 : index
    %c19_483 = arith.constant 19 : index
    %770 = memref.load %arg3[%c10_482, %c19_483] : memref<12x36xf32, #tpu.memory_space<smem>>
    %771 = vector.broadcast %770 : f32 to vector<8x128xf32>
    %772 = arith.select %739, %771, %734 : vector<8x128xi1>, vector<8x128xf32>
    %c11_484 = arith.constant 11 : index
    %c19_485 = arith.constant 19 : index
    %773 = memref.load %arg3[%c11_484, %c19_485] : memref<12x36xf32, #tpu.memory_space<smem>>
    %774 = vector.broadcast %773 : f32 to vector<8x128xf32>
    %775 = arith.select %739, %774, %737 : vector<8x128xi1>, vector<8x128xf32>
    %c20_i32 = arith.constant 20 : i32
    %776 = vector.broadcast %c20_i32 : i32 to vector<8x128xi32>
    %777 = arith.cmpi eq, %0, %776 : vector<8x128xi32>
    %c0_486 = arith.constant 0 : index
    %c20 = arith.constant 20 : index
    %778 = memref.load %arg3[%c0_486, %c20] : memref<12x36xf32, #tpu.memory_space<smem>>
    %779 = vector.broadcast %778 : f32 to vector<8x128xf32>
    %780 = arith.select %777, %779, %742 : vector<8x128xi1>, vector<8x128xf32>
    %c1_487 = arith.constant 1 : index
    %c20_488 = arith.constant 20 : index
    %781 = memref.load %arg3[%c1_487, %c20_488] : memref<12x36xf32, #tpu.memory_space<smem>>
    %782 = vector.broadcast %781 : f32 to vector<8x128xf32>
    %783 = arith.select %777, %782, %745 : vector<8x128xi1>, vector<8x128xf32>
    %c2_489 = arith.constant 2 : index
    %c20_490 = arith.constant 20 : index
    %784 = memref.load %arg3[%c2_489, %c20_490] : memref<12x36xf32, #tpu.memory_space<smem>>
    %785 = vector.broadcast %784 : f32 to vector<8x128xf32>
    %786 = arith.select %777, %785, %748 : vector<8x128xi1>, vector<8x128xf32>
    %c3_491 = arith.constant 3 : index
    %c20_492 = arith.constant 20 : index
    %787 = memref.load %arg3[%c3_491, %c20_492] : memref<12x36xf32, #tpu.memory_space<smem>>
    %788 = vector.broadcast %787 : f32 to vector<8x128xf32>
    %789 = arith.select %777, %788, %751 : vector<8x128xi1>, vector<8x128xf32>
    %c4_493 = arith.constant 4 : index
    %c20_494 = arith.constant 20 : index
    %790 = memref.load %arg3[%c4_493, %c20_494] : memref<12x36xf32, #tpu.memory_space<smem>>
    %791 = vector.broadcast %790 : f32 to vector<8x128xf32>
    %792 = arith.select %777, %791, %754 : vector<8x128xi1>, vector<8x128xf32>
    %c5_495 = arith.constant 5 : index
    %c20_496 = arith.constant 20 : index
    %793 = memref.load %arg3[%c5_495, %c20_496] : memref<12x36xf32, #tpu.memory_space<smem>>
    %794 = vector.broadcast %793 : f32 to vector<8x128xf32>
    %795 = arith.select %777, %794, %757 : vector<8x128xi1>, vector<8x128xf32>
    %c6_497 = arith.constant 6 : index
    %c20_498 = arith.constant 20 : index
    %796 = memref.load %arg3[%c6_497, %c20_498] : memref<12x36xf32, #tpu.memory_space<smem>>
    %797 = vector.broadcast %796 : f32 to vector<8x128xf32>
    %798 = arith.select %777, %797, %760 : vector<8x128xi1>, vector<8x128xf32>
    %c7_499 = arith.constant 7 : index
    %c20_500 = arith.constant 20 : index
    %799 = memref.load %arg3[%c7_499, %c20_500] : memref<12x36xf32, #tpu.memory_space<smem>>
    %800 = vector.broadcast %799 : f32 to vector<8x128xf32>
    %801 = arith.select %777, %800, %763 : vector<8x128xi1>, vector<8x128xf32>
    %c8_501 = arith.constant 8 : index
    %c20_502 = arith.constant 20 : index
    %802 = memref.load %arg3[%c8_501, %c20_502] : memref<12x36xf32, #tpu.memory_space<smem>>
    %803 = vector.broadcast %802 : f32 to vector<8x128xf32>
    %804 = arith.select %777, %803, %766 : vector<8x128xi1>, vector<8x128xf32>
    %c9_503 = arith.constant 9 : index
    %c20_504 = arith.constant 20 : index
    %805 = memref.load %arg3[%c9_503, %c20_504] : memref<12x36xf32, #tpu.memory_space<smem>>
    %806 = vector.broadcast %805 : f32 to vector<8x128xf32>
    %807 = arith.select %777, %806, %769 : vector<8x128xi1>, vector<8x128xf32>
    %c10_505 = arith.constant 10 : index
    %c20_506 = arith.constant 20 : index
    %808 = memref.load %arg3[%c10_505, %c20_506] : memref<12x36xf32, #tpu.memory_space<smem>>
    %809 = vector.broadcast %808 : f32 to vector<8x128xf32>
    %810 = arith.select %777, %809, %772 : vector<8x128xi1>, vector<8x128xf32>
    %c11_507 = arith.constant 11 : index
    %c20_508 = arith.constant 20 : index
    %811 = memref.load %arg3[%c11_507, %c20_508] : memref<12x36xf32, #tpu.memory_space<smem>>
    %812 = vector.broadcast %811 : f32 to vector<8x128xf32>
    %813 = arith.select %777, %812, %775 : vector<8x128xi1>, vector<8x128xf32>
    %c21_i32 = arith.constant 21 : i32
    %814 = vector.broadcast %c21_i32 : i32 to vector<8x128xi32>
    %815 = arith.cmpi eq, %0, %814 : vector<8x128xi32>
    %c0_509 = arith.constant 0 : index
    %c21 = arith.constant 21 : index
    %816 = memref.load %arg3[%c0_509, %c21] : memref<12x36xf32, #tpu.memory_space<smem>>
    %817 = vector.broadcast %816 : f32 to vector<8x128xf32>
    %818 = arith.select %815, %817, %780 : vector<8x128xi1>, vector<8x128xf32>
    %c1_510 = arith.constant 1 : index
    %c21_511 = arith.constant 21 : index
    %819 = memref.load %arg3[%c1_510, %c21_511] : memref<12x36xf32, #tpu.memory_space<smem>>
    %820 = vector.broadcast %819 : f32 to vector<8x128xf32>
    %821 = arith.select %815, %820, %783 : vector<8x128xi1>, vector<8x128xf32>
    %c2_512 = arith.constant 2 : index
    %c21_513 = arith.constant 21 : index
    %822 = memref.load %arg3[%c2_512, %c21_513] : memref<12x36xf32, #tpu.memory_space<smem>>
    %823 = vector.broadcast %822 : f32 to vector<8x128xf32>
    %824 = arith.select %815, %823, %786 : vector<8x128xi1>, vector<8x128xf32>
    %c3_514 = arith.constant 3 : index
    %c21_515 = arith.constant 21 : index
    %825 = memref.load %arg3[%c3_514, %c21_515] : memref<12x36xf32, #tpu.memory_space<smem>>
    %826 = vector.broadcast %825 : f32 to vector<8x128xf32>
    %827 = arith.select %815, %826, %789 : vector<8x128xi1>, vector<8x128xf32>
    %c4_516 = arith.constant 4 : index
    %c21_517 = arith.constant 21 : index
    %828 = memref.load %arg3[%c4_516, %c21_517] : memref<12x36xf32, #tpu.memory_space<smem>>
    %829 = vector.broadcast %828 : f32 to vector<8x128xf32>
    %830 = arith.select %815, %829, %792 : vector<8x128xi1>, vector<8x128xf32>
    %c5_518 = arith.constant 5 : index
    %c21_519 = arith.constant 21 : index
    %831 = memref.load %arg3[%c5_518, %c21_519] : memref<12x36xf32, #tpu.memory_space<smem>>
    %832 = vector.broadcast %831 : f32 to vector<8x128xf32>
    %833 = arith.select %815, %832, %795 : vector<8x128xi1>, vector<8x128xf32>
    %c6_520 = arith.constant 6 : index
    %c21_521 = arith.constant 21 : index
    %834 = memref.load %arg3[%c6_520, %c21_521] : memref<12x36xf32, #tpu.memory_space<smem>>
    %835 = vector.broadcast %834 : f32 to vector<8x128xf32>
    %836 = arith.select %815, %835, %798 : vector<8x128xi1>, vector<8x128xf32>
    %c7_522 = arith.constant 7 : index
    %c21_523 = arith.constant 21 : index
    %837 = memref.load %arg3[%c7_522, %c21_523] : memref<12x36xf32, #tpu.memory_space<smem>>
    %838 = vector.broadcast %837 : f32 to vector<8x128xf32>
    %839 = arith.select %815, %838, %801 : vector<8x128xi1>, vector<8x128xf32>
    %c8_524 = arith.constant 8 : index
    %c21_525 = arith.constant 21 : index
    %840 = memref.load %arg3[%c8_524, %c21_525] : memref<12x36xf32, #tpu.memory_space<smem>>
    %841 = vector.broadcast %840 : f32 to vector<8x128xf32>
    %842 = arith.select %815, %841, %804 : vector<8x128xi1>, vector<8x128xf32>
    %c9_526 = arith.constant 9 : index
    %c21_527 = arith.constant 21 : index
    %843 = memref.load %arg3[%c9_526, %c21_527] : memref<12x36xf32, #tpu.memory_space<smem>>
    %844 = vector.broadcast %843 : f32 to vector<8x128xf32>
    %845 = arith.select %815, %844, %807 : vector<8x128xi1>, vector<8x128xf32>
    %c10_528 = arith.constant 10 : index
    %c21_529 = arith.constant 21 : index
    %846 = memref.load %arg3[%c10_528, %c21_529] : memref<12x36xf32, #tpu.memory_space<smem>>
    %847 = vector.broadcast %846 : f32 to vector<8x128xf32>
    %848 = arith.select %815, %847, %810 : vector<8x128xi1>, vector<8x128xf32>
    %c11_530 = arith.constant 11 : index
    %c21_531 = arith.constant 21 : index
    %849 = memref.load %arg3[%c11_530, %c21_531] : memref<12x36xf32, #tpu.memory_space<smem>>
    %850 = vector.broadcast %849 : f32 to vector<8x128xf32>
    %851 = arith.select %815, %850, %813 : vector<8x128xi1>, vector<8x128xf32>
    %c22_i32 = arith.constant 22 : i32
    %852 = vector.broadcast %c22_i32 : i32 to vector<8x128xi32>
    %853 = arith.cmpi eq, %0, %852 : vector<8x128xi32>
    %c0_532 = arith.constant 0 : index
    %c22 = arith.constant 22 : index
    %854 = memref.load %arg3[%c0_532, %c22] : memref<12x36xf32, #tpu.memory_space<smem>>
    %855 = vector.broadcast %854 : f32 to vector<8x128xf32>
    %856 = arith.select %853, %855, %818 : vector<8x128xi1>, vector<8x128xf32>
    %c1_533 = arith.constant 1 : index
    %c22_534 = arith.constant 22 : index
    %857 = memref.load %arg3[%c1_533, %c22_534] : memref<12x36xf32, #tpu.memory_space<smem>>
    %858 = vector.broadcast %857 : f32 to vector<8x128xf32>
    %859 = arith.select %853, %858, %821 : vector<8x128xi1>, vector<8x128xf32>
    %c2_535 = arith.constant 2 : index
    %c22_536 = arith.constant 22 : index
    %860 = memref.load %arg3[%c2_535, %c22_536] : memref<12x36xf32, #tpu.memory_space<smem>>
    %861 = vector.broadcast %860 : f32 to vector<8x128xf32>
    %862 = arith.select %853, %861, %824 : vector<8x128xi1>, vector<8x128xf32>
    %c3_537 = arith.constant 3 : index
    %c22_538 = arith.constant 22 : index
    %863 = memref.load %arg3[%c3_537, %c22_538] : memref<12x36xf32, #tpu.memory_space<smem>>
    %864 = vector.broadcast %863 : f32 to vector<8x128xf32>
    %865 = arith.select %853, %864, %827 : vector<8x128xi1>, vector<8x128xf32>
    %c4_539 = arith.constant 4 : index
    %c22_540 = arith.constant 22 : index
    %866 = memref.load %arg3[%c4_539, %c22_540] : memref<12x36xf32, #tpu.memory_space<smem>>
    %867 = vector.broadcast %866 : f32 to vector<8x128xf32>
    %868 = arith.select %853, %867, %830 : vector<8x128xi1>, vector<8x128xf32>
    %c5_541 = arith.constant 5 : index
    %c22_542 = arith.constant 22 : index
    %869 = memref.load %arg3[%c5_541, %c22_542] : memref<12x36xf32, #tpu.memory_space<smem>>
    %870 = vector.broadcast %869 : f32 to vector<8x128xf32>
    %871 = arith.select %853, %870, %833 : vector<8x128xi1>, vector<8x128xf32>
    %c6_543 = arith.constant 6 : index
    %c22_544 = arith.constant 22 : index
    %872 = memref.load %arg3[%c6_543, %c22_544] : memref<12x36xf32, #tpu.memory_space<smem>>
    %873 = vector.broadcast %872 : f32 to vector<8x128xf32>
    %874 = arith.select %853, %873, %836 : vector<8x128xi1>, vector<8x128xf32>
    %c7_545 = arith.constant 7 : index
    %c22_546 = arith.constant 22 : index
    %875 = memref.load %arg3[%c7_545, %c22_546] : memref<12x36xf32, #tpu.memory_space<smem>>
    %876 = vector.broadcast %875 : f32 to vector<8x128xf32>
    %877 = arith.select %853, %876, %839 : vector<8x128xi1>, vector<8x128xf32>
    %c8_547 = arith.constant 8 : index
    %c22_548 = arith.constant 22 : index
    %878 = memref.load %arg3[%c8_547, %c22_548] : memref<12x36xf32, #tpu.memory_space<smem>>
    %879 = vector.broadcast %878 : f32 to vector<8x128xf32>
    %880 = arith.select %853, %879, %842 : vector<8x128xi1>, vector<8x128xf32>
    %c9_549 = arith.constant 9 : index
    %c22_550 = arith.constant 22 : index
    %881 = memref.load %arg3[%c9_549, %c22_550] : memref<12x36xf32, #tpu.memory_space<smem>>
    %882 = vector.broadcast %881 : f32 to vector<8x128xf32>
    %883 = arith.select %853, %882, %845 : vector<8x128xi1>, vector<8x128xf32>
    %c10_551 = arith.constant 10 : index
    %c22_552 = arith.constant 22 : index
    %884 = memref.load %arg3[%c10_551, %c22_552] : memref<12x36xf32, #tpu.memory_space<smem>>
    %885 = vector.broadcast %884 : f32 to vector<8x128xf32>
    %886 = arith.select %853, %885, %848 : vector<8x128xi1>, vector<8x128xf32>
    %c11_553 = arith.constant 11 : index
    %c22_554 = arith.constant 22 : index
    %887 = memref.load %arg3[%c11_553, %c22_554] : memref<12x36xf32, #tpu.memory_space<smem>>
    %888 = vector.broadcast %887 : f32 to vector<8x128xf32>
    %889 = arith.select %853, %888, %851 : vector<8x128xi1>, vector<8x128xf32>
    %c23_i32 = arith.constant 23 : i32
    %890 = vector.broadcast %c23_i32 : i32 to vector<8x128xi32>
    %891 = arith.cmpi eq, %0, %890 : vector<8x128xi32>
    %c0_555 = arith.constant 0 : index
    %c23 = arith.constant 23 : index
    %892 = memref.load %arg3[%c0_555, %c23] : memref<12x36xf32, #tpu.memory_space<smem>>
    %893 = vector.broadcast %892 : f32 to vector<8x128xf32>
    %894 = arith.select %891, %893, %856 : vector<8x128xi1>, vector<8x128xf32>
    %c1_556 = arith.constant 1 : index
    %c23_557 = arith.constant 23 : index
    %895 = memref.load %arg3[%c1_556, %c23_557] : memref<12x36xf32, #tpu.memory_space<smem>>
    %896 = vector.broadcast %895 : f32 to vector<8x128xf32>
    %897 = arith.select %891, %896, %859 : vector<8x128xi1>, vector<8x128xf32>
    %c2_558 = arith.constant 2 : index
    %c23_559 = arith.constant 23 : index
    %898 = memref.load %arg3[%c2_558, %c23_559] : memref<12x36xf32, #tpu.memory_space<smem>>
    %899 = vector.broadcast %898 : f32 to vector<8x128xf32>
    %900 = arith.select %891, %899, %862 : vector<8x128xi1>, vector<8x128xf32>
    %c3_560 = arith.constant 3 : index
    %c23_561 = arith.constant 23 : index
    %901 = memref.load %arg3[%c3_560, %c23_561] : memref<12x36xf32, #tpu.memory_space<smem>>
    %902 = vector.broadcast %901 : f32 to vector<8x128xf32>
    %903 = arith.select %891, %902, %865 : vector<8x128xi1>, vector<8x128xf32>
    %c4_562 = arith.constant 4 : index
    %c23_563 = arith.constant 23 : index
    %904 = memref.load %arg3[%c4_562, %c23_563] : memref<12x36xf32, #tpu.memory_space<smem>>
    %905 = vector.broadcast %904 : f32 to vector<8x128xf32>
    %906 = arith.select %891, %905, %868 : vector<8x128xi1>, vector<8x128xf32>
    %c5_564 = arith.constant 5 : index
    %c23_565 = arith.constant 23 : index
    %907 = memref.load %arg3[%c5_564, %c23_565] : memref<12x36xf32, #tpu.memory_space<smem>>
    %908 = vector.broadcast %907 : f32 to vector<8x128xf32>
    %909 = arith.select %891, %908, %871 : vector<8x128xi1>, vector<8x128xf32>
    %c6_566 = arith.constant 6 : index
    %c23_567 = arith.constant 23 : index
    %910 = memref.load %arg3[%c6_566, %c23_567] : memref<12x36xf32, #tpu.memory_space<smem>>
    %911 = vector.broadcast %910 : f32 to vector<8x128xf32>
    %912 = arith.select %891, %911, %874 : vector<8x128xi1>, vector<8x128xf32>
    %c7_568 = arith.constant 7 : index
    %c23_569 = arith.constant 23 : index
    %913 = memref.load %arg3[%c7_568, %c23_569] : memref<12x36xf32, #tpu.memory_space<smem>>
    %914 = vector.broadcast %913 : f32 to vector<8x128xf32>
    %915 = arith.select %891, %914, %877 : vector<8x128xi1>, vector<8x128xf32>
    %c8_570 = arith.constant 8 : index
    %c23_571 = arith.constant 23 : index
    %916 = memref.load %arg3[%c8_570, %c23_571] : memref<12x36xf32, #tpu.memory_space<smem>>
    %917 = vector.broadcast %916 : f32 to vector<8x128xf32>
    %918 = arith.select %891, %917, %880 : vector<8x128xi1>, vector<8x128xf32>
    %c9_572 = arith.constant 9 : index
    %c23_573 = arith.constant 23 : index
    %919 = memref.load %arg3[%c9_572, %c23_573] : memref<12x36xf32, #tpu.memory_space<smem>>
    %920 = vector.broadcast %919 : f32 to vector<8x128xf32>
    %921 = arith.select %891, %920, %883 : vector<8x128xi1>, vector<8x128xf32>
    %c10_574 = arith.constant 10 : index
    %c23_575 = arith.constant 23 : index
    %922 = memref.load %arg3[%c10_574, %c23_575] : memref<12x36xf32, #tpu.memory_space<smem>>
    %923 = vector.broadcast %922 : f32 to vector<8x128xf32>
    %924 = arith.select %891, %923, %886 : vector<8x128xi1>, vector<8x128xf32>
    %c11_576 = arith.constant 11 : index
    %c23_577 = arith.constant 23 : index
    %925 = memref.load %arg3[%c11_576, %c23_577] : memref<12x36xf32, #tpu.memory_space<smem>>
    %926 = vector.broadcast %925 : f32 to vector<8x128xf32>
    %927 = arith.select %891, %926, %889 : vector<8x128xi1>, vector<8x128xf32>
    %c24_i32 = arith.constant 24 : i32
    %928 = vector.broadcast %c24_i32 : i32 to vector<8x128xi32>
    %929 = arith.cmpi eq, %0, %928 : vector<8x128xi32>
    %c0_578 = arith.constant 0 : index
    %c24 = arith.constant 24 : index
    %930 = memref.load %arg3[%c0_578, %c24] : memref<12x36xf32, #tpu.memory_space<smem>>
    %931 = vector.broadcast %930 : f32 to vector<8x128xf32>
    %932 = arith.select %929, %931, %894 : vector<8x128xi1>, vector<8x128xf32>
    %c1_579 = arith.constant 1 : index
    %c24_580 = arith.constant 24 : index
    %933 = memref.load %arg3[%c1_579, %c24_580] : memref<12x36xf32, #tpu.memory_space<smem>>
    %934 = vector.broadcast %933 : f32 to vector<8x128xf32>
    %935 = arith.select %929, %934, %897 : vector<8x128xi1>, vector<8x128xf32>
    %c2_581 = arith.constant 2 : index
    %c24_582 = arith.constant 24 : index
    %936 = memref.load %arg3[%c2_581, %c24_582] : memref<12x36xf32, #tpu.memory_space<smem>>
    %937 = vector.broadcast %936 : f32 to vector<8x128xf32>
    %938 = arith.select %929, %937, %900 : vector<8x128xi1>, vector<8x128xf32>
    %c3_583 = arith.constant 3 : index
    %c24_584 = arith.constant 24 : index
    %939 = memref.load %arg3[%c3_583, %c24_584] : memref<12x36xf32, #tpu.memory_space<smem>>
    %940 = vector.broadcast %939 : f32 to vector<8x128xf32>
    %941 = arith.select %929, %940, %903 : vector<8x128xi1>, vector<8x128xf32>
    %c4_585 = arith.constant 4 : index
    %c24_586 = arith.constant 24 : index
    %942 = memref.load %arg3[%c4_585, %c24_586] : memref<12x36xf32, #tpu.memory_space<smem>>
    %943 = vector.broadcast %942 : f32 to vector<8x128xf32>
    %944 = arith.select %929, %943, %906 : vector<8x128xi1>, vector<8x128xf32>
    %c5_587 = arith.constant 5 : index
    %c24_588 = arith.constant 24 : index
    %945 = memref.load %arg3[%c5_587, %c24_588] : memref<12x36xf32, #tpu.memory_space<smem>>
    %946 = vector.broadcast %945 : f32 to vector<8x128xf32>
    %947 = arith.select %929, %946, %909 : vector<8x128xi1>, vector<8x128xf32>
    %c6_589 = arith.constant 6 : index
    %c24_590 = arith.constant 24 : index
    %948 = memref.load %arg3[%c6_589, %c24_590] : memref<12x36xf32, #tpu.memory_space<smem>>
    %949 = vector.broadcast %948 : f32 to vector<8x128xf32>
    %950 = arith.select %929, %949, %912 : vector<8x128xi1>, vector<8x128xf32>
    %c7_591 = arith.constant 7 : index
    %c24_592 = arith.constant 24 : index
    %951 = memref.load %arg3[%c7_591, %c24_592] : memref<12x36xf32, #tpu.memory_space<smem>>
    %952 = vector.broadcast %951 : f32 to vector<8x128xf32>
    %953 = arith.select %929, %952, %915 : vector<8x128xi1>, vector<8x128xf32>
    %c8_593 = arith.constant 8 : index
    %c24_594 = arith.constant 24 : index
    %954 = memref.load %arg3[%c8_593, %c24_594] : memref<12x36xf32, #tpu.memory_space<smem>>
    %955 = vector.broadcast %954 : f32 to vector<8x128xf32>
    %956 = arith.select %929, %955, %918 : vector<8x128xi1>, vector<8x128xf32>
    %c9_595 = arith.constant 9 : index
    %c24_596 = arith.constant 24 : index
    %957 = memref.load %arg3[%c9_595, %c24_596] : memref<12x36xf32, #tpu.memory_space<smem>>
    %958 = vector.broadcast %957 : f32 to vector<8x128xf32>
    %959 = arith.select %929, %958, %921 : vector<8x128xi1>, vector<8x128xf32>
    %c10_597 = arith.constant 10 : index
    %c24_598 = arith.constant 24 : index
    %960 = memref.load %arg3[%c10_597, %c24_598] : memref<12x36xf32, #tpu.memory_space<smem>>
    %961 = vector.broadcast %960 : f32 to vector<8x128xf32>
    %962 = arith.select %929, %961, %924 : vector<8x128xi1>, vector<8x128xf32>
    %c11_599 = arith.constant 11 : index
    %c24_600 = arith.constant 24 : index
    %963 = memref.load %arg3[%c11_599, %c24_600] : memref<12x36xf32, #tpu.memory_space<smem>>
    %964 = vector.broadcast %963 : f32 to vector<8x128xf32>
    %965 = arith.select %929, %964, %927 : vector<8x128xi1>, vector<8x128xf32>
    %c25_i32 = arith.constant 25 : i32
    %966 = vector.broadcast %c25_i32 : i32 to vector<8x128xi32>
    %967 = arith.cmpi eq, %0, %966 : vector<8x128xi32>
    %c0_601 = arith.constant 0 : index
    %c25 = arith.constant 25 : index
    %968 = memref.load %arg3[%c0_601, %c25] : memref<12x36xf32, #tpu.memory_space<smem>>
    %969 = vector.broadcast %968 : f32 to vector<8x128xf32>
    %970 = arith.select %967, %969, %932 : vector<8x128xi1>, vector<8x128xf32>
    %c1_602 = arith.constant 1 : index
    %c25_603 = arith.constant 25 : index
    %971 = memref.load %arg3[%c1_602, %c25_603] : memref<12x36xf32, #tpu.memory_space<smem>>
    %972 = vector.broadcast %971 : f32 to vector<8x128xf32>
    %973 = arith.select %967, %972, %935 : vector<8x128xi1>, vector<8x128xf32>
    %c2_604 = arith.constant 2 : index
    %c25_605 = arith.constant 25 : index
    %974 = memref.load %arg3[%c2_604, %c25_605] : memref<12x36xf32, #tpu.memory_space<smem>>
    %975 = vector.broadcast %974 : f32 to vector<8x128xf32>
    %976 = arith.select %967, %975, %938 : vector<8x128xi1>, vector<8x128xf32>
    %c3_606 = arith.constant 3 : index
    %c25_607 = arith.constant 25 : index
    %977 = memref.load %arg3[%c3_606, %c25_607] : memref<12x36xf32, #tpu.memory_space<smem>>
    %978 = vector.broadcast %977 : f32 to vector<8x128xf32>
    %979 = arith.select %967, %978, %941 : vector<8x128xi1>, vector<8x128xf32>
    %c4_608 = arith.constant 4 : index
    %c25_609 = arith.constant 25 : index
    %980 = memref.load %arg3[%c4_608, %c25_609] : memref<12x36xf32, #tpu.memory_space<smem>>
    %981 = vector.broadcast %980 : f32 to vector<8x128xf32>
    %982 = arith.select %967, %981, %944 : vector<8x128xi1>, vector<8x128xf32>
    %c5_610 = arith.constant 5 : index
    %c25_611 = arith.constant 25 : index
    %983 = memref.load %arg3[%c5_610, %c25_611] : memref<12x36xf32, #tpu.memory_space<smem>>
    %984 = vector.broadcast %983 : f32 to vector<8x128xf32>
    %985 = arith.select %967, %984, %947 : vector<8x128xi1>, vector<8x128xf32>
    %c6_612 = arith.constant 6 : index
    %c25_613 = arith.constant 25 : index
    %986 = memref.load %arg3[%c6_612, %c25_613] : memref<12x36xf32, #tpu.memory_space<smem>>
    %987 = vector.broadcast %986 : f32 to vector<8x128xf32>
    %988 = arith.select %967, %987, %950 : vector<8x128xi1>, vector<8x128xf32>
    %c7_614 = arith.constant 7 : index
    %c25_615 = arith.constant 25 : index
    %989 = memref.load %arg3[%c7_614, %c25_615] : memref<12x36xf32, #tpu.memory_space<smem>>
    %990 = vector.broadcast %989 : f32 to vector<8x128xf32>
    %991 = arith.select %967, %990, %953 : vector<8x128xi1>, vector<8x128xf32>
    %c8_616 = arith.constant 8 : index
    %c25_617 = arith.constant 25 : index
    %992 = memref.load %arg3[%c8_616, %c25_617] : memref<12x36xf32, #tpu.memory_space<smem>>
    %993 = vector.broadcast %992 : f32 to vector<8x128xf32>
    %994 = arith.select %967, %993, %956 : vector<8x128xi1>, vector<8x128xf32>
    %c9_618 = arith.constant 9 : index
    %c25_619 = arith.constant 25 : index
    %995 = memref.load %arg3[%c9_618, %c25_619] : memref<12x36xf32, #tpu.memory_space<smem>>
    %996 = vector.broadcast %995 : f32 to vector<8x128xf32>
    %997 = arith.select %967, %996, %959 : vector<8x128xi1>, vector<8x128xf32>
    %c10_620 = arith.constant 10 : index
    %c25_621 = arith.constant 25 : index
    %998 = memref.load %arg3[%c10_620, %c25_621] : memref<12x36xf32, #tpu.memory_space<smem>>
    %999 = vector.broadcast %998 : f32 to vector<8x128xf32>
    %1000 = arith.select %967, %999, %962 : vector<8x128xi1>, vector<8x128xf32>
    %c11_622 = arith.constant 11 : index
    %c25_623 = arith.constant 25 : index
    %1001 = memref.load %arg3[%c11_622, %c25_623] : memref<12x36xf32, #tpu.memory_space<smem>>
    %1002 = vector.broadcast %1001 : f32 to vector<8x128xf32>
    %1003 = arith.select %967, %1002, %965 : vector<8x128xi1>, vector<8x128xf32>
    %c26_i32 = arith.constant 26 : i32
    %1004 = vector.broadcast %c26_i32 : i32 to vector<8x128xi32>
    %1005 = arith.cmpi eq, %0, %1004 : vector<8x128xi32>
    %c0_624 = arith.constant 0 : index
    %c26 = arith.constant 26 : index
    %1006 = memref.load %arg3[%c0_624, %c26] : memref<12x36xf32, #tpu.memory_space<smem>>
    %1007 = vector.broadcast %1006 : f32 to vector<8x128xf32>
    %1008 = arith.select %1005, %1007, %970 : vector<8x128xi1>, vector<8x128xf32>
    %c1_625 = arith.constant 1 : index
    %c26_626 = arith.constant 26 : index
    %1009 = memref.load %arg3[%c1_625, %c26_626] : memref<12x36xf32, #tpu.memory_space<smem>>
    %1010 = vector.broadcast %1009 : f32 to vector<8x128xf32>
    %1011 = arith.select %1005, %1010, %973 : vector<8x128xi1>, vector<8x128xf32>
    %c2_627 = arith.constant 2 : index
    %c26_628 = arith.constant 26 : index
    %1012 = memref.load %arg3[%c2_627, %c26_628] : memref<12x36xf32, #tpu.memory_space<smem>>
    %1013 = vector.broadcast %1012 : f32 to vector<8x128xf32>
    %1014 = arith.select %1005, %1013, %976 : vector<8x128xi1>, vector<8x128xf32>
    %c3_629 = arith.constant 3 : index
    %c26_630 = arith.constant 26 : index
    %1015 = memref.load %arg3[%c3_629, %c26_630] : memref<12x36xf32, #tpu.memory_space<smem>>
    %1016 = vector.broadcast %1015 : f32 to vector<8x128xf32>
    %1017 = arith.select %1005, %1016, %979 : vector<8x128xi1>, vector<8x128xf32>
    %c4_631 = arith.constant 4 : index
    %c26_632 = arith.constant 26 : index
    %1018 = memref.load %arg3[%c4_631, %c26_632] : memref<12x36xf32, #tpu.memory_space<smem>>
    %1019 = vector.broadcast %1018 : f32 to vector<8x128xf32>
    %1020 = arith.select %1005, %1019, %982 : vector<8x128xi1>, vector<8x128xf32>
    %c5_633 = arith.constant 5 : index
    %c26_634 = arith.constant 26 : index
    %1021 = memref.load %arg3[%c5_633, %c26_634] : memref<12x36xf32, #tpu.memory_space<smem>>
    %1022 = vector.broadcast %1021 : f32 to vector<8x128xf32>
    %1023 = arith.select %1005, %1022, %985 : vector<8x128xi1>, vector<8x128xf32>
    %c6_635 = arith.constant 6 : index
    %c26_636 = arith.constant 26 : index
    %1024 = memref.load %arg3[%c6_635, %c26_636] : memref<12x36xf32, #tpu.memory_space<smem>>
    %1025 = vector.broadcast %1024 : f32 to vector<8x128xf32>
    %1026 = arith.select %1005, %1025, %988 : vector<8x128xi1>, vector<8x128xf32>
    %c7_637 = arith.constant 7 : index
    %c26_638 = arith.constant 26 : index
    %1027 = memref.load %arg3[%c7_637, %c26_638] : memref<12x36xf32, #tpu.memory_space<smem>>
    %1028 = vector.broadcast %1027 : f32 to vector<8x128xf32>
    %1029 = arith.select %1005, %1028, %991 : vector<8x128xi1>, vector<8x128xf32>
    %c8_639 = arith.constant 8 : index
    %c26_640 = arith.constant 26 : index
    %1030 = memref.load %arg3[%c8_639, %c26_640] : memref<12x36xf32, #tpu.memory_space<smem>>
    %1031 = vector.broadcast %1030 : f32 to vector<8x128xf32>
    %1032 = arith.select %1005, %1031, %994 : vector<8x128xi1>, vector<8x128xf32>
    %c9_641 = arith.constant 9 : index
    %c26_642 = arith.constant 26 : index
    %1033 = memref.load %arg3[%c9_641, %c26_642] : memref<12x36xf32, #tpu.memory_space<smem>>
    %1034 = vector.broadcast %1033 : f32 to vector<8x128xf32>
    %1035 = arith.select %1005, %1034, %997 : vector<8x128xi1>, vector<8x128xf32>
    %c10_643 = arith.constant 10 : index
    %c26_644 = arith.constant 26 : index
    %1036 = memref.load %arg3[%c10_643, %c26_644] : memref<12x36xf32, #tpu.memory_space<smem>>
    %1037 = vector.broadcast %1036 : f32 to vector<8x128xf32>
    %1038 = arith.select %1005, %1037, %1000 : vector<8x128xi1>, vector<8x128xf32>
    %c11_645 = arith.constant 11 : index
    %c26_646 = arith.constant 26 : index
    %1039 = memref.load %arg3[%c11_645, %c26_646] : memref<12x36xf32, #tpu.memory_space<smem>>
    %1040 = vector.broadcast %1039 : f32 to vector<8x128xf32>
    %1041 = arith.select %1005, %1040, %1003 : vector<8x128xi1>, vector<8x128xf32>
    %c27_i32 = arith.constant 27 : i32
    %1042 = vector.broadcast %c27_i32 : i32 to vector<8x128xi32>
    %1043 = arith.cmpi eq, %0, %1042 : vector<8x128xi32>
    %c0_647 = arith.constant 0 : index
    %c27 = arith.constant 27 : index
    %1044 = memref.load %arg3[%c0_647, %c27] : memref<12x36xf32, #tpu.memory_space<smem>>
    %1045 = vector.broadcast %1044 : f32 to vector<8x128xf32>
    %1046 = arith.select %1043, %1045, %1008 : vector<8x128xi1>, vector<8x128xf32>
    %c1_648 = arith.constant 1 : index
    %c27_649 = arith.constant 27 : index
    %1047 = memref.load %arg3[%c1_648, %c27_649] : memref<12x36xf32, #tpu.memory_space<smem>>
    %1048 = vector.broadcast %1047 : f32 to vector<8x128xf32>
    %1049 = arith.select %1043, %1048, %1011 : vector<8x128xi1>, vector<8x128xf32>
    %c2_650 = arith.constant 2 : index
    %c27_651 = arith.constant 27 : index
    %1050 = memref.load %arg3[%c2_650, %c27_651] : memref<12x36xf32, #tpu.memory_space<smem>>
    %1051 = vector.broadcast %1050 : f32 to vector<8x128xf32>
    %1052 = arith.select %1043, %1051, %1014 : vector<8x128xi1>, vector<8x128xf32>
    %c3_652 = arith.constant 3 : index
    %c27_653 = arith.constant 27 : index
    %1053 = memref.load %arg3[%c3_652, %c27_653] : memref<12x36xf32, #tpu.memory_space<smem>>
    %1054 = vector.broadcast %1053 : f32 to vector<8x128xf32>
    %1055 = arith.select %1043, %1054, %1017 : vector<8x128xi1>, vector<8x128xf32>
    %c4_654 = arith.constant 4 : index
    %c27_655 = arith.constant 27 : index
    %1056 = memref.load %arg3[%c4_654, %c27_655] : memref<12x36xf32, #tpu.memory_space<smem>>
    %1057 = vector.broadcast %1056 : f32 to vector<8x128xf32>
    %1058 = arith.select %1043, %1057, %1020 : vector<8x128xi1>, vector<8x128xf32>
    %c5_656 = arith.constant 5 : index
    %c27_657 = arith.constant 27 : index
    %1059 = memref.load %arg3[%c5_656, %c27_657] : memref<12x36xf32, #tpu.memory_space<smem>>
    %1060 = vector.broadcast %1059 : f32 to vector<8x128xf32>
    %1061 = arith.select %1043, %1060, %1023 : vector<8x128xi1>, vector<8x128xf32>
    %c6_658 = arith.constant 6 : index
    %c27_659 = arith.constant 27 : index
    %1062 = memref.load %arg3[%c6_658, %c27_659] : memref<12x36xf32, #tpu.memory_space<smem>>
    %1063 = vector.broadcast %1062 : f32 to vector<8x128xf32>
    %1064 = arith.select %1043, %1063, %1026 : vector<8x128xi1>, vector<8x128xf32>
    %c7_660 = arith.constant 7 : index
    %c27_661 = arith.constant 27 : index
    %1065 = memref.load %arg3[%c7_660, %c27_661] : memref<12x36xf32, #tpu.memory_space<smem>>
    %1066 = vector.broadcast %1065 : f32 to vector<8x128xf32>
    %1067 = arith.select %1043, %1066, %1029 : vector<8x128xi1>, vector<8x128xf32>
    %c8_662 = arith.constant 8 : index
    %c27_663 = arith.constant 27 : index
    %1068 = memref.load %arg3[%c8_662, %c27_663] : memref<12x36xf32, #tpu.memory_space<smem>>
    %1069 = vector.broadcast %1068 : f32 to vector<8x128xf32>
    %1070 = arith.select %1043, %1069, %1032 : vector<8x128xi1>, vector<8x128xf32>
    %c9_664 = arith.constant 9 : index
    %c27_665 = arith.constant 27 : index
    %1071 = memref.load %arg3[%c9_664, %c27_665] : memref<12x36xf32, #tpu.memory_space<smem>>
    %1072 = vector.broadcast %1071 : f32 to vector<8x128xf32>
    %1073 = arith.select %1043, %1072, %1035 : vector<8x128xi1>, vector<8x128xf32>
    %c10_666 = arith.constant 10 : index
    %c27_667 = arith.constant 27 : index
    %1074 = memref.load %arg3[%c10_666, %c27_667] : memref<12x36xf32, #tpu.memory_space<smem>>
    %1075 = vector.broadcast %1074 : f32 to vector<8x128xf32>
    %1076 = arith.select %1043, %1075, %1038 : vector<8x128xi1>, vector<8x128xf32>
    %c11_668 = arith.constant 11 : index
    %c27_669 = arith.constant 27 : index
    %1077 = memref.load %arg3[%c11_668, %c27_669] : memref<12x36xf32, #tpu.memory_space<smem>>
    %1078 = vector.broadcast %1077 : f32 to vector<8x128xf32>
    %1079 = arith.select %1043, %1078, %1041 : vector<8x128xi1>, vector<8x128xf32>
    %c28_i32 = arith.constant 28 : i32
    %1080 = vector.broadcast %c28_i32 : i32 to vector<8x128xi32>
    %1081 = arith.cmpi eq, %0, %1080 : vector<8x128xi32>
    %c0_670 = arith.constant 0 : index
    %c28 = arith.constant 28 : index
    %1082 = memref.load %arg3[%c0_670, %c28] : memref<12x36xf32, #tpu.memory_space<smem>>
    %1083 = vector.broadcast %1082 : f32 to vector<8x128xf32>
    %1084 = arith.select %1081, %1083, %1046 : vector<8x128xi1>, vector<8x128xf32>
    %c1_671 = arith.constant 1 : index
    %c28_672 = arith.constant 28 : index
    %1085 = memref.load %arg3[%c1_671, %c28_672] : memref<12x36xf32, #tpu.memory_space<smem>>
    %1086 = vector.broadcast %1085 : f32 to vector<8x128xf32>
    %1087 = arith.select %1081, %1086, %1049 : vector<8x128xi1>, vector<8x128xf32>
    %c2_673 = arith.constant 2 : index
    %c28_674 = arith.constant 28 : index
    %1088 = memref.load %arg3[%c2_673, %c28_674] : memref<12x36xf32, #tpu.memory_space<smem>>
    %1089 = vector.broadcast %1088 : f32 to vector<8x128xf32>
    %1090 = arith.select %1081, %1089, %1052 : vector<8x128xi1>, vector<8x128xf32>
    %c3_675 = arith.constant 3 : index
    %c28_676 = arith.constant 28 : index
    %1091 = memref.load %arg3[%c3_675, %c28_676] : memref<12x36xf32, #tpu.memory_space<smem>>
    %1092 = vector.broadcast %1091 : f32 to vector<8x128xf32>
    %1093 = arith.select %1081, %1092, %1055 : vector<8x128xi1>, vector<8x128xf32>
    %c4_677 = arith.constant 4 : index
    %c28_678 = arith.constant 28 : index
    %1094 = memref.load %arg3[%c4_677, %c28_678] : memref<12x36xf32, #tpu.memory_space<smem>>
    %1095 = vector.broadcast %1094 : f32 to vector<8x128xf32>
    %1096 = arith.select %1081, %1095, %1058 : vector<8x128xi1>, vector<8x128xf32>
    %c5_679 = arith.constant 5 : index
    %c28_680 = arith.constant 28 : index
    %1097 = memref.load %arg3[%c5_679, %c28_680] : memref<12x36xf32, #tpu.memory_space<smem>>
    %1098 = vector.broadcast %1097 : f32 to vector<8x128xf32>
    %1099 = arith.select %1081, %1098, %1061 : vector<8x128xi1>, vector<8x128xf32>
    %c6_681 = arith.constant 6 : index
    %c28_682 = arith.constant 28 : index
    %1100 = memref.load %arg3[%c6_681, %c28_682] : memref<12x36xf32, #tpu.memory_space<smem>>
    %1101 = vector.broadcast %1100 : f32 to vector<8x128xf32>
    %1102 = arith.select %1081, %1101, %1064 : vector<8x128xi1>, vector<8x128xf32>
    %c7_683 = arith.constant 7 : index
    %c28_684 = arith.constant 28 : index
    %1103 = memref.load %arg3[%c7_683, %c28_684] : memref<12x36xf32, #tpu.memory_space<smem>>
    %1104 = vector.broadcast %1103 : f32 to vector<8x128xf32>
    %1105 = arith.select %1081, %1104, %1067 : vector<8x128xi1>, vector<8x128xf32>
    %c8_685 = arith.constant 8 : index
    %c28_686 = arith.constant 28 : index
    %1106 = memref.load %arg3[%c8_685, %c28_686] : memref<12x36xf32, #tpu.memory_space<smem>>
    %1107 = vector.broadcast %1106 : f32 to vector<8x128xf32>
    %1108 = arith.select %1081, %1107, %1070 : vector<8x128xi1>, vector<8x128xf32>
    %c9_687 = arith.constant 9 : index
    %c28_688 = arith.constant 28 : index
    %1109 = memref.load %arg3[%c9_687, %c28_688] : memref<12x36xf32, #tpu.memory_space<smem>>
    %1110 = vector.broadcast %1109 : f32 to vector<8x128xf32>
    %1111 = arith.select %1081, %1110, %1073 : vector<8x128xi1>, vector<8x128xf32>
    %c10_689 = arith.constant 10 : index
    %c28_690 = arith.constant 28 : index
    %1112 = memref.load %arg3[%c10_689, %c28_690] : memref<12x36xf32, #tpu.memory_space<smem>>
    %1113 = vector.broadcast %1112 : f32 to vector<8x128xf32>
    %1114 = arith.select %1081, %1113, %1076 : vector<8x128xi1>, vector<8x128xf32>
    %c11_691 = arith.constant 11 : index
    %c28_692 = arith.constant 28 : index
    %1115 = memref.load %arg3[%c11_691, %c28_692] : memref<12x36xf32, #tpu.memory_space<smem>>
    %1116 = vector.broadcast %1115 : f32 to vector<8x128xf32>
    %1117 = arith.select %1081, %1116, %1079 : vector<8x128xi1>, vector<8x128xf32>
    %c29_i32 = arith.constant 29 : i32
    %1118 = vector.broadcast %c29_i32 : i32 to vector<8x128xi32>
    %1119 = arith.cmpi eq, %0, %1118 : vector<8x128xi32>
    %c0_693 = arith.constant 0 : index
    %c29 = arith.constant 29 : index
    %1120 = memref.load %arg3[%c0_693, %c29] : memref<12x36xf32, #tpu.memory_space<smem>>
    %1121 = vector.broadcast %1120 : f32 to vector<8x128xf32>
    %1122 = arith.select %1119, %1121, %1084 : vector<8x128xi1>, vector<8x128xf32>
    %c1_694 = arith.constant 1 : index
    %c29_695 = arith.constant 29 : index
    %1123 = memref.load %arg3[%c1_694, %c29_695] : memref<12x36xf32, #tpu.memory_space<smem>>
    %1124 = vector.broadcast %1123 : f32 to vector<8x128xf32>
    %1125 = arith.select %1119, %1124, %1087 : vector<8x128xi1>, vector<8x128xf32>
    %c2_696 = arith.constant 2 : index
    %c29_697 = arith.constant 29 : index
    %1126 = memref.load %arg3[%c2_696, %c29_697] : memref<12x36xf32, #tpu.memory_space<smem>>
    %1127 = vector.broadcast %1126 : f32 to vector<8x128xf32>
    %1128 = arith.select %1119, %1127, %1090 : vector<8x128xi1>, vector<8x128xf32>
    %c3_698 = arith.constant 3 : index
    %c29_699 = arith.constant 29 : index
    %1129 = memref.load %arg3[%c3_698, %c29_699] : memref<12x36xf32, #tpu.memory_space<smem>>
    %1130 = vector.broadcast %1129 : f32 to vector<8x128xf32>
    %1131 = arith.select %1119, %1130, %1093 : vector<8x128xi1>, vector<8x128xf32>
    %c4_700 = arith.constant 4 : index
    %c29_701 = arith.constant 29 : index
    %1132 = memref.load %arg3[%c4_700, %c29_701] : memref<12x36xf32, #tpu.memory_space<smem>>
    %1133 = vector.broadcast %1132 : f32 to vector<8x128xf32>
    %1134 = arith.select %1119, %1133, %1096 : vector<8x128xi1>, vector<8x128xf32>
    %c5_702 = arith.constant 5 : index
    %c29_703 = arith.constant 29 : index
    %1135 = memref.load %arg3[%c5_702, %c29_703] : memref<12x36xf32, #tpu.memory_space<smem>>
    %1136 = vector.broadcast %1135 : f32 to vector<8x128xf32>
    %1137 = arith.select %1119, %1136, %1099 : vector<8x128xi1>, vector<8x128xf32>
    %c6_704 = arith.constant 6 : index
    %c29_705 = arith.constant 29 : index
    %1138 = memref.load %arg3[%c6_704, %c29_705] : memref<12x36xf32, #tpu.memory_space<smem>>
    %1139 = vector.broadcast %1138 : f32 to vector<8x128xf32>
    %1140 = arith.select %1119, %1139, %1102 : vector<8x128xi1>, vector<8x128xf32>
    %c7_706 = arith.constant 7 : index
    %c29_707 = arith.constant 29 : index
    %1141 = memref.load %arg3[%c7_706, %c29_707] : memref<12x36xf32, #tpu.memory_space<smem>>
    %1142 = vector.broadcast %1141 : f32 to vector<8x128xf32>
    %1143 = arith.select %1119, %1142, %1105 : vector<8x128xi1>, vector<8x128xf32>
    %c8_708 = arith.constant 8 : index
    %c29_709 = arith.constant 29 : index
    %1144 = memref.load %arg3[%c8_708, %c29_709] : memref<12x36xf32, #tpu.memory_space<smem>>
    %1145 = vector.broadcast %1144 : f32 to vector<8x128xf32>
    %1146 = arith.select %1119, %1145, %1108 : vector<8x128xi1>, vector<8x128xf32>
    %c9_710 = arith.constant 9 : index
    %c29_711 = arith.constant 29 : index
    %1147 = memref.load %arg3[%c9_710, %c29_711] : memref<12x36xf32, #tpu.memory_space<smem>>
    %1148 = vector.broadcast %1147 : f32 to vector<8x128xf32>
    %1149 = arith.select %1119, %1148, %1111 : vector<8x128xi1>, vector<8x128xf32>
    %c10_712 = arith.constant 10 : index
    %c29_713 = arith.constant 29 : index
    %1150 = memref.load %arg3[%c10_712, %c29_713] : memref<12x36xf32, #tpu.memory_space<smem>>
    %1151 = vector.broadcast %1150 : f32 to vector<8x128xf32>
    %1152 = arith.select %1119, %1151, %1114 : vector<8x128xi1>, vector<8x128xf32>
    %c11_714 = arith.constant 11 : index
    %c29_715 = arith.constant 29 : index
    %1153 = memref.load %arg3[%c11_714, %c29_715] : memref<12x36xf32, #tpu.memory_space<smem>>
    %1154 = vector.broadcast %1153 : f32 to vector<8x128xf32>
    %1155 = arith.select %1119, %1154, %1117 : vector<8x128xi1>, vector<8x128xf32>
    %c30_i32 = arith.constant 30 : i32
    %1156 = vector.broadcast %c30_i32 : i32 to vector<8x128xi32>
    %1157 = arith.cmpi eq, %0, %1156 : vector<8x128xi32>
    %c0_716 = arith.constant 0 : index
    %c30 = arith.constant 30 : index
    %1158 = memref.load %arg3[%c0_716, %c30] : memref<12x36xf32, #tpu.memory_space<smem>>
    %1159 = vector.broadcast %1158 : f32 to vector<8x128xf32>
    %1160 = arith.select %1157, %1159, %1122 : vector<8x128xi1>, vector<8x128xf32>
    %c1_717 = arith.constant 1 : index
    %c30_718 = arith.constant 30 : index
    %1161 = memref.load %arg3[%c1_717, %c30_718] : memref<12x36xf32, #tpu.memory_space<smem>>
    %1162 = vector.broadcast %1161 : f32 to vector<8x128xf32>
    %1163 = arith.select %1157, %1162, %1125 : vector<8x128xi1>, vector<8x128xf32>
    %c2_719 = arith.constant 2 : index
    %c30_720 = arith.constant 30 : index
    %1164 = memref.load %arg3[%c2_719, %c30_720] : memref<12x36xf32, #tpu.memory_space<smem>>
    %1165 = vector.broadcast %1164 : f32 to vector<8x128xf32>
    %1166 = arith.select %1157, %1165, %1128 : vector<8x128xi1>, vector<8x128xf32>
    %c3_721 = arith.constant 3 : index
    %c30_722 = arith.constant 30 : index
    %1167 = memref.load %arg3[%c3_721, %c30_722] : memref<12x36xf32, #tpu.memory_space<smem>>
    %1168 = vector.broadcast %1167 : f32 to vector<8x128xf32>
    %1169 = arith.select %1157, %1168, %1131 : vector<8x128xi1>, vector<8x128xf32>
    %c4_723 = arith.constant 4 : index
    %c30_724 = arith.constant 30 : index
    %1170 = memref.load %arg3[%c4_723, %c30_724] : memref<12x36xf32, #tpu.memory_space<smem>>
    %1171 = vector.broadcast %1170 : f32 to vector<8x128xf32>
    %1172 = arith.select %1157, %1171, %1134 : vector<8x128xi1>, vector<8x128xf32>
    %c5_725 = arith.constant 5 : index
    %c30_726 = arith.constant 30 : index
    %1173 = memref.load %arg3[%c5_725, %c30_726] : memref<12x36xf32, #tpu.memory_space<smem>>
    %1174 = vector.broadcast %1173 : f32 to vector<8x128xf32>
    %1175 = arith.select %1157, %1174, %1137 : vector<8x128xi1>, vector<8x128xf32>
    %c6_727 = arith.constant 6 : index
    %c30_728 = arith.constant 30 : index
    %1176 = memref.load %arg3[%c6_727, %c30_728] : memref<12x36xf32, #tpu.memory_space<smem>>
    %1177 = vector.broadcast %1176 : f32 to vector<8x128xf32>
    %1178 = arith.select %1157, %1177, %1140 : vector<8x128xi1>, vector<8x128xf32>
    %c7_729 = arith.constant 7 : index
    %c30_730 = arith.constant 30 : index
    %1179 = memref.load %arg3[%c7_729, %c30_730] : memref<12x36xf32, #tpu.memory_space<smem>>
    %1180 = vector.broadcast %1179 : f32 to vector<8x128xf32>
    %1181 = arith.select %1157, %1180, %1143 : vector<8x128xi1>, vector<8x128xf32>
    %c8_731 = arith.constant 8 : index
    %c30_732 = arith.constant 30 : index
    %1182 = memref.load %arg3[%c8_731, %c30_732] : memref<12x36xf32, #tpu.memory_space<smem>>
    %1183 = vector.broadcast %1182 : f32 to vector<8x128xf32>
    %1184 = arith.select %1157, %1183, %1146 : vector<8x128xi1>, vector<8x128xf32>
    %c9_733 = arith.constant 9 : index
    %c30_734 = arith.constant 30 : index
    %1185 = memref.load %arg3[%c9_733, %c30_734] : memref<12x36xf32, #tpu.memory_space<smem>>
    %1186 = vector.broadcast %1185 : f32 to vector<8x128xf32>
    %1187 = arith.select %1157, %1186, %1149 : vector<8x128xi1>, vector<8x128xf32>
    %c10_735 = arith.constant 10 : index
    %c30_736 = arith.constant 30 : index
    %1188 = memref.load %arg3[%c10_735, %c30_736] : memref<12x36xf32, #tpu.memory_space<smem>>
    %1189 = vector.broadcast %1188 : f32 to vector<8x128xf32>
    %1190 = arith.select %1157, %1189, %1152 : vector<8x128xi1>, vector<8x128xf32>
    %c11_737 = arith.constant 11 : index
    %c30_738 = arith.constant 30 : index
    %1191 = memref.load %arg3[%c11_737, %c30_738] : memref<12x36xf32, #tpu.memory_space<smem>>
    %1192 = vector.broadcast %1191 : f32 to vector<8x128xf32>
    %1193 = arith.select %1157, %1192, %1155 : vector<8x128xi1>, vector<8x128xf32>
    %c31_i32 = arith.constant 31 : i32
    %1194 = vector.broadcast %c31_i32 : i32 to vector<8x128xi32>
    %1195 = arith.cmpi eq, %0, %1194 : vector<8x128xi32>
    %c0_739 = arith.constant 0 : index
    %c31 = arith.constant 31 : index
    %1196 = memref.load %arg3[%c0_739, %c31] : memref<12x36xf32, #tpu.memory_space<smem>>
    %1197 = vector.broadcast %1196 : f32 to vector<8x128xf32>
    %1198 = arith.select %1195, %1197, %1160 : vector<8x128xi1>, vector<8x128xf32>
    %c1_740 = arith.constant 1 : index
    %c31_741 = arith.constant 31 : index
    %1199 = memref.load %arg3[%c1_740, %c31_741] : memref<12x36xf32, #tpu.memory_space<smem>>
    %1200 = vector.broadcast %1199 : f32 to vector<8x128xf32>
    %1201 = arith.select %1195, %1200, %1163 : vector<8x128xi1>, vector<8x128xf32>
    %c2_742 = arith.constant 2 : index
    %c31_743 = arith.constant 31 : index
    %1202 = memref.load %arg3[%c2_742, %c31_743] : memref<12x36xf32, #tpu.memory_space<smem>>
    %1203 = vector.broadcast %1202 : f32 to vector<8x128xf32>
    %1204 = arith.select %1195, %1203, %1166 : vector<8x128xi1>, vector<8x128xf32>
    %c3_744 = arith.constant 3 : index
    %c31_745 = arith.constant 31 : index
    %1205 = memref.load %arg3[%c3_744, %c31_745] : memref<12x36xf32, #tpu.memory_space<smem>>
    %1206 = vector.broadcast %1205 : f32 to vector<8x128xf32>
    %1207 = arith.select %1195, %1206, %1169 : vector<8x128xi1>, vector<8x128xf32>
    %c4_746 = arith.constant 4 : index
    %c31_747 = arith.constant 31 : index
    %1208 = memref.load %arg3[%c4_746, %c31_747] : memref<12x36xf32, #tpu.memory_space<smem>>
    %1209 = vector.broadcast %1208 : f32 to vector<8x128xf32>
    %1210 = arith.select %1195, %1209, %1172 : vector<8x128xi1>, vector<8x128xf32>
    %c5_748 = arith.constant 5 : index
    %c31_749 = arith.constant 31 : index
    %1211 = memref.load %arg3[%c5_748, %c31_749] : memref<12x36xf32, #tpu.memory_space<smem>>
    %1212 = vector.broadcast %1211 : f32 to vector<8x128xf32>
    %1213 = arith.select %1195, %1212, %1175 : vector<8x128xi1>, vector<8x128xf32>
    %c6_750 = arith.constant 6 : index
    %c31_751 = arith.constant 31 : index
    %1214 = memref.load %arg3[%c6_750, %c31_751] : memref<12x36xf32, #tpu.memory_space<smem>>
    %1215 = vector.broadcast %1214 : f32 to vector<8x128xf32>
    %1216 = arith.select %1195, %1215, %1178 : vector<8x128xi1>, vector<8x128xf32>
    %c7_752 = arith.constant 7 : index
    %c31_753 = arith.constant 31 : index
    %1217 = memref.load %arg3[%c7_752, %c31_753] : memref<12x36xf32, #tpu.memory_space<smem>>
    %1218 = vector.broadcast %1217 : f32 to vector<8x128xf32>
    %1219 = arith.select %1195, %1218, %1181 : vector<8x128xi1>, vector<8x128xf32>
    %c8_754 = arith.constant 8 : index
    %c31_755 = arith.constant 31 : index
    %1220 = memref.load %arg3[%c8_754, %c31_755] : memref<12x36xf32, #tpu.memory_space<smem>>
    %1221 = vector.broadcast %1220 : f32 to vector<8x128xf32>
    %1222 = arith.select %1195, %1221, %1184 : vector<8x128xi1>, vector<8x128xf32>
    %c9_756 = arith.constant 9 : index
    %c31_757 = arith.constant 31 : index
    %1223 = memref.load %arg3[%c9_756, %c31_757] : memref<12x36xf32, #tpu.memory_space<smem>>
    %1224 = vector.broadcast %1223 : f32 to vector<8x128xf32>
    %1225 = arith.select %1195, %1224, %1187 : vector<8x128xi1>, vector<8x128xf32>
    %c10_758 = arith.constant 10 : index
    %c31_759 = arith.constant 31 : index
    %1226 = memref.load %arg3[%c10_758, %c31_759] : memref<12x36xf32, #tpu.memory_space<smem>>
    %1227 = vector.broadcast %1226 : f32 to vector<8x128xf32>
    %1228 = arith.select %1195, %1227, %1190 : vector<8x128xi1>, vector<8x128xf32>
    %c11_760 = arith.constant 11 : index
    %c31_761 = arith.constant 31 : index
    %1229 = memref.load %arg3[%c11_760, %c31_761] : memref<12x36xf32, #tpu.memory_space<smem>>
    %1230 = vector.broadcast %1229 : f32 to vector<8x128xf32>
    %1231 = arith.select %1195, %1230, %1193 : vector<8x128xi1>, vector<8x128xf32>
    %c32_i32 = arith.constant 32 : i32
    %1232 = vector.broadcast %c32_i32 : i32 to vector<8x128xi32>
    %1233 = arith.cmpi eq, %0, %1232 : vector<8x128xi32>
    %c0_762 = arith.constant 0 : index
    %c32 = arith.constant 32 : index
    %1234 = memref.load %arg3[%c0_762, %c32] : memref<12x36xf32, #tpu.memory_space<smem>>
    %1235 = vector.broadcast %1234 : f32 to vector<8x128xf32>
    %1236 = arith.select %1233, %1235, %1198 : vector<8x128xi1>, vector<8x128xf32>
    %c1_763 = arith.constant 1 : index
    %c32_764 = arith.constant 32 : index
    %1237 = memref.load %arg3[%c1_763, %c32_764] : memref<12x36xf32, #tpu.memory_space<smem>>
    %1238 = vector.broadcast %1237 : f32 to vector<8x128xf32>
    %1239 = arith.select %1233, %1238, %1201 : vector<8x128xi1>, vector<8x128xf32>
    %c2_765 = arith.constant 2 : index
    %c32_766 = arith.constant 32 : index
    %1240 = memref.load %arg3[%c2_765, %c32_766] : memref<12x36xf32, #tpu.memory_space<smem>>
    %1241 = vector.broadcast %1240 : f32 to vector<8x128xf32>
    %1242 = arith.select %1233, %1241, %1204 : vector<8x128xi1>, vector<8x128xf32>
    %c3_767 = arith.constant 3 : index
    %c32_768 = arith.constant 32 : index
    %1243 = memref.load %arg3[%c3_767, %c32_768] : memref<12x36xf32, #tpu.memory_space<smem>>
    %1244 = vector.broadcast %1243 : f32 to vector<8x128xf32>
    %1245 = arith.select %1233, %1244, %1207 : vector<8x128xi1>, vector<8x128xf32>
    %c4_769 = arith.constant 4 : index
    %c32_770 = arith.constant 32 : index
    %1246 = memref.load %arg3[%c4_769, %c32_770] : memref<12x36xf32, #tpu.memory_space<smem>>
    %1247 = vector.broadcast %1246 : f32 to vector<8x128xf32>
    %1248 = arith.select %1233, %1247, %1210 : vector<8x128xi1>, vector<8x128xf32>
    %c5_771 = arith.constant 5 : index
    %c32_772 = arith.constant 32 : index
    %1249 = memref.load %arg3[%c5_771, %c32_772] : memref<12x36xf32, #tpu.memory_space<smem>>
    %1250 = vector.broadcast %1249 : f32 to vector<8x128xf32>
    %1251 = arith.select %1233, %1250, %1213 : vector<8x128xi1>, vector<8x128xf32>
    %c6_773 = arith.constant 6 : index
    %c32_774 = arith.constant 32 : index
    %1252 = memref.load %arg3[%c6_773, %c32_774] : memref<12x36xf32, #tpu.memory_space<smem>>
    %1253 = vector.broadcast %1252 : f32 to vector<8x128xf32>
    %1254 = arith.select %1233, %1253, %1216 : vector<8x128xi1>, vector<8x128xf32>
    %c7_775 = arith.constant 7 : index
    %c32_776 = arith.constant 32 : index
    %1255 = memref.load %arg3[%c7_775, %c32_776] : memref<12x36xf32, #tpu.memory_space<smem>>
    %1256 = vector.broadcast %1255 : f32 to vector<8x128xf32>
    %1257 = arith.select %1233, %1256, %1219 : vector<8x128xi1>, vector<8x128xf32>
    %c8_777 = arith.constant 8 : index
    %c32_778 = arith.constant 32 : index
    %1258 = memref.load %arg3[%c8_777, %c32_778] : memref<12x36xf32, #tpu.memory_space<smem>>
    %1259 = vector.broadcast %1258 : f32 to vector<8x128xf32>
    %1260 = arith.select %1233, %1259, %1222 : vector<8x128xi1>, vector<8x128xf32>
    %c9_779 = arith.constant 9 : index
    %c32_780 = arith.constant 32 : index
    %1261 = memref.load %arg3[%c9_779, %c32_780] : memref<12x36xf32, #tpu.memory_space<smem>>
    %1262 = vector.broadcast %1261 : f32 to vector<8x128xf32>
    %1263 = arith.select %1233, %1262, %1225 : vector<8x128xi1>, vector<8x128xf32>
    %c10_781 = arith.constant 10 : index
    %c32_782 = arith.constant 32 : index
    %1264 = memref.load %arg3[%c10_781, %c32_782] : memref<12x36xf32, #tpu.memory_space<smem>>
    %1265 = vector.broadcast %1264 : f32 to vector<8x128xf32>
    %1266 = arith.select %1233, %1265, %1228 : vector<8x128xi1>, vector<8x128xf32>
    %c11_783 = arith.constant 11 : index
    %c32_784 = arith.constant 32 : index
    %1267 = memref.load %arg3[%c11_783, %c32_784] : memref<12x36xf32, #tpu.memory_space<smem>>
    %1268 = vector.broadcast %1267 : f32 to vector<8x128xf32>
    %1269 = arith.select %1233, %1268, %1231 : vector<8x128xi1>, vector<8x128xf32>
    %c33_i32 = arith.constant 33 : i32
    %1270 = vector.broadcast %c33_i32 : i32 to vector<8x128xi32>
    %1271 = arith.cmpi eq, %0, %1270 : vector<8x128xi32>
    %c0_785 = arith.constant 0 : index
    %c33 = arith.constant 33 : index
    %1272 = memref.load %arg3[%c0_785, %c33] : memref<12x36xf32, #tpu.memory_space<smem>>
    %1273 = vector.broadcast %1272 : f32 to vector<8x128xf32>
    %1274 = arith.select %1271, %1273, %1236 : vector<8x128xi1>, vector<8x128xf32>
    %c1_786 = arith.constant 1 : index
    %c33_787 = arith.constant 33 : index
    %1275 = memref.load %arg3[%c1_786, %c33_787] : memref<12x36xf32, #tpu.memory_space<smem>>
    %1276 = vector.broadcast %1275 : f32 to vector<8x128xf32>
    %1277 = arith.select %1271, %1276, %1239 : vector<8x128xi1>, vector<8x128xf32>
    %c2_788 = arith.constant 2 : index
    %c33_789 = arith.constant 33 : index
    %1278 = memref.load %arg3[%c2_788, %c33_789] : memref<12x36xf32, #tpu.memory_space<smem>>
    %1279 = vector.broadcast %1278 : f32 to vector<8x128xf32>
    %1280 = arith.select %1271, %1279, %1242 : vector<8x128xi1>, vector<8x128xf32>
    %c3_790 = arith.constant 3 : index
    %c33_791 = arith.constant 33 : index
    %1281 = memref.load %arg3[%c3_790, %c33_791] : memref<12x36xf32, #tpu.memory_space<smem>>
    %1282 = vector.broadcast %1281 : f32 to vector<8x128xf32>
    %1283 = arith.select %1271, %1282, %1245 : vector<8x128xi1>, vector<8x128xf32>
    %c4_792 = arith.constant 4 : index
    %c33_793 = arith.constant 33 : index
    %1284 = memref.load %arg3[%c4_792, %c33_793] : memref<12x36xf32, #tpu.memory_space<smem>>
    %1285 = vector.broadcast %1284 : f32 to vector<8x128xf32>
    %1286 = arith.select %1271, %1285, %1248 : vector<8x128xi1>, vector<8x128xf32>
    %c5_794 = arith.constant 5 : index
    %c33_795 = arith.constant 33 : index
    %1287 = memref.load %arg3[%c5_794, %c33_795] : memref<12x36xf32, #tpu.memory_space<smem>>
    %1288 = vector.broadcast %1287 : f32 to vector<8x128xf32>
    %1289 = arith.select %1271, %1288, %1251 : vector<8x128xi1>, vector<8x128xf32>
    %c6_796 = arith.constant 6 : index
    %c33_797 = arith.constant 33 : index
    %1290 = memref.load %arg3[%c6_796, %c33_797] : memref<12x36xf32, #tpu.memory_space<smem>>
    %1291 = vector.broadcast %1290 : f32 to vector<8x128xf32>
    %1292 = arith.select %1271, %1291, %1254 : vector<8x128xi1>, vector<8x128xf32>
    %c7_798 = arith.constant 7 : index
    %c33_799 = arith.constant 33 : index
    %1293 = memref.load %arg3[%c7_798, %c33_799] : memref<12x36xf32, #tpu.memory_space<smem>>
    %1294 = vector.broadcast %1293 : f32 to vector<8x128xf32>
    %1295 = arith.select %1271, %1294, %1257 : vector<8x128xi1>, vector<8x128xf32>
    %c8_800 = arith.constant 8 : index
    %c33_801 = arith.constant 33 : index
    %1296 = memref.load %arg3[%c8_800, %c33_801] : memref<12x36xf32, #tpu.memory_space<smem>>
    %1297 = vector.broadcast %1296 : f32 to vector<8x128xf32>
    %1298 = arith.select %1271, %1297, %1260 : vector<8x128xi1>, vector<8x128xf32>
    %c9_802 = arith.constant 9 : index
    %c33_803 = arith.constant 33 : index
    %1299 = memref.load %arg3[%c9_802, %c33_803] : memref<12x36xf32, #tpu.memory_space<smem>>
    %1300 = vector.broadcast %1299 : f32 to vector<8x128xf32>
    %1301 = arith.select %1271, %1300, %1263 : vector<8x128xi1>, vector<8x128xf32>
    %c10_804 = arith.constant 10 : index
    %c33_805 = arith.constant 33 : index
    %1302 = memref.load %arg3[%c10_804, %c33_805] : memref<12x36xf32, #tpu.memory_space<smem>>
    %1303 = vector.broadcast %1302 : f32 to vector<8x128xf32>
    %1304 = arith.select %1271, %1303, %1266 : vector<8x128xi1>, vector<8x128xf32>
    %c11_806 = arith.constant 11 : index
    %c33_807 = arith.constant 33 : index
    %1305 = memref.load %arg3[%c11_806, %c33_807] : memref<12x36xf32, #tpu.memory_space<smem>>
    %1306 = vector.broadcast %1305 : f32 to vector<8x128xf32>
    %1307 = arith.select %1271, %1306, %1269 : vector<8x128xi1>, vector<8x128xf32>
    %c34_i32 = arith.constant 34 : i32
    %1308 = vector.broadcast %c34_i32 : i32 to vector<8x128xi32>
    %1309 = arith.cmpi eq, %0, %1308 : vector<8x128xi32>
    %c0_808 = arith.constant 0 : index
    %c34 = arith.constant 34 : index
    %1310 = memref.load %arg3[%c0_808, %c34] : memref<12x36xf32, #tpu.memory_space<smem>>
    %1311 = vector.broadcast %1310 : f32 to vector<8x128xf32>
    %1312 = arith.select %1309, %1311, %1274 : vector<8x128xi1>, vector<8x128xf32>
    %c1_809 = arith.constant 1 : index
    %c34_810 = arith.constant 34 : index
    %1313 = memref.load %arg3[%c1_809, %c34_810] : memref<12x36xf32, #tpu.memory_space<smem>>
    %1314 = vector.broadcast %1313 : f32 to vector<8x128xf32>
    %1315 = arith.select %1309, %1314, %1277 : vector<8x128xi1>, vector<8x128xf32>
    %c2_811 = arith.constant 2 : index
    %c34_812 = arith.constant 34 : index
    %1316 = memref.load %arg3[%c2_811, %c34_812] : memref<12x36xf32, #tpu.memory_space<smem>>
    %1317 = vector.broadcast %1316 : f32 to vector<8x128xf32>
    %1318 = arith.select %1309, %1317, %1280 : vector<8x128xi1>, vector<8x128xf32>
    %c3_813 = arith.constant 3 : index
    %c34_814 = arith.constant 34 : index
    %1319 = memref.load %arg3[%c3_813, %c34_814] : memref<12x36xf32, #tpu.memory_space<smem>>
    %1320 = vector.broadcast %1319 : f32 to vector<8x128xf32>
    %1321 = arith.select %1309, %1320, %1283 : vector<8x128xi1>, vector<8x128xf32>
    %c4_815 = arith.constant 4 : index
    %c34_816 = arith.constant 34 : index
    %1322 = memref.load %arg3[%c4_815, %c34_816] : memref<12x36xf32, #tpu.memory_space<smem>>
    %1323 = vector.broadcast %1322 : f32 to vector<8x128xf32>
    %1324 = arith.select %1309, %1323, %1286 : vector<8x128xi1>, vector<8x128xf32>
    %c5_817 = arith.constant 5 : index
    %c34_818 = arith.constant 34 : index
    %1325 = memref.load %arg3[%c5_817, %c34_818] : memref<12x36xf32, #tpu.memory_space<smem>>
    %1326 = vector.broadcast %1325 : f32 to vector<8x128xf32>
    %1327 = arith.select %1309, %1326, %1289 : vector<8x128xi1>, vector<8x128xf32>
    %c6_819 = arith.constant 6 : index
    %c34_820 = arith.constant 34 : index
    %1328 = memref.load %arg3[%c6_819, %c34_820] : memref<12x36xf32, #tpu.memory_space<smem>>
    %1329 = vector.broadcast %1328 : f32 to vector<8x128xf32>
    %1330 = arith.select %1309, %1329, %1292 : vector<8x128xi1>, vector<8x128xf32>
    %c7_821 = arith.constant 7 : index
    %c34_822 = arith.constant 34 : index
    %1331 = memref.load %arg3[%c7_821, %c34_822] : memref<12x36xf32, #tpu.memory_space<smem>>
    %1332 = vector.broadcast %1331 : f32 to vector<8x128xf32>
    %1333 = arith.select %1309, %1332, %1295 : vector<8x128xi1>, vector<8x128xf32>
    %c8_823 = arith.constant 8 : index
    %c34_824 = arith.constant 34 : index
    %1334 = memref.load %arg3[%c8_823, %c34_824] : memref<12x36xf32, #tpu.memory_space<smem>>
    %1335 = vector.broadcast %1334 : f32 to vector<8x128xf32>
    %1336 = arith.select %1309, %1335, %1298 : vector<8x128xi1>, vector<8x128xf32>
    %c9_825 = arith.constant 9 : index
    %c34_826 = arith.constant 34 : index
    %1337 = memref.load %arg3[%c9_825, %c34_826] : memref<12x36xf32, #tpu.memory_space<smem>>
    %1338 = vector.broadcast %1337 : f32 to vector<8x128xf32>
    %1339 = arith.select %1309, %1338, %1301 : vector<8x128xi1>, vector<8x128xf32>
    %c10_827 = arith.constant 10 : index
    %c34_828 = arith.constant 34 : index
    %1340 = memref.load %arg3[%c10_827, %c34_828] : memref<12x36xf32, #tpu.memory_space<smem>>
    %1341 = vector.broadcast %1340 : f32 to vector<8x128xf32>
    %1342 = arith.select %1309, %1341, %1304 : vector<8x128xi1>, vector<8x128xf32>
    %c11_829 = arith.constant 11 : index
    %c34_830 = arith.constant 34 : index
    %1343 = memref.load %arg3[%c11_829, %c34_830] : memref<12x36xf32, #tpu.memory_space<smem>>
    %1344 = vector.broadcast %1343 : f32 to vector<8x128xf32>
    %1345 = arith.select %1309, %1344, %1307 : vector<8x128xi1>, vector<8x128xf32>
    %c35_i32 = arith.constant 35 : i32
    %1346 = vector.broadcast %c35_i32 : i32 to vector<8x128xi32>
    %1347 = arith.cmpi eq, %0, %1346 : vector<8x128xi32>
    %c0_831 = arith.constant 0 : index
    %c35 = arith.constant 35 : index
    %1348 = memref.load %arg3[%c0_831, %c35] : memref<12x36xf32, #tpu.memory_space<smem>>
    %1349 = vector.broadcast %1348 : f32 to vector<8x128xf32>
    %1350 = arith.select %1347, %1349, %1312 : vector<8x128xi1>, vector<8x128xf32>
    %c1_832 = arith.constant 1 : index
    %c35_833 = arith.constant 35 : index
    %1351 = memref.load %arg3[%c1_832, %c35_833] : memref<12x36xf32, #tpu.memory_space<smem>>
    %1352 = vector.broadcast %1351 : f32 to vector<8x128xf32>
    %1353 = arith.select %1347, %1352, %1315 : vector<8x128xi1>, vector<8x128xf32>
    %c2_834 = arith.constant 2 : index
    %c35_835 = arith.constant 35 : index
    %1354 = memref.load %arg3[%c2_834, %c35_835] : memref<12x36xf32, #tpu.memory_space<smem>>
    %1355 = vector.broadcast %1354 : f32 to vector<8x128xf32>
    %1356 = arith.select %1347, %1355, %1318 : vector<8x128xi1>, vector<8x128xf32>
    %c3_836 = arith.constant 3 : index
    %c35_837 = arith.constant 35 : index
    %1357 = memref.load %arg3[%c3_836, %c35_837] : memref<12x36xf32, #tpu.memory_space<smem>>
    %1358 = vector.broadcast %1357 : f32 to vector<8x128xf32>
    %1359 = arith.select %1347, %1358, %1321 : vector<8x128xi1>, vector<8x128xf32>
    %c4_838 = arith.constant 4 : index
    %c35_839 = arith.constant 35 : index
    %1360 = memref.load %arg3[%c4_838, %c35_839] : memref<12x36xf32, #tpu.memory_space<smem>>
    %1361 = vector.broadcast %1360 : f32 to vector<8x128xf32>
    %1362 = arith.select %1347, %1361, %1324 : vector<8x128xi1>, vector<8x128xf32>
    %c5_840 = arith.constant 5 : index
    %c35_841 = arith.constant 35 : index
    %1363 = memref.load %arg3[%c5_840, %c35_841] : memref<12x36xf32, #tpu.memory_space<smem>>
    %1364 = vector.broadcast %1363 : f32 to vector<8x128xf32>
    %1365 = arith.select %1347, %1364, %1327 : vector<8x128xi1>, vector<8x128xf32>
    %c6_842 = arith.constant 6 : index
    %c35_843 = arith.constant 35 : index
    %1366 = memref.load %arg3[%c6_842, %c35_843] : memref<12x36xf32, #tpu.memory_space<smem>>
    %1367 = vector.broadcast %1366 : f32 to vector<8x128xf32>
    %1368 = arith.select %1347, %1367, %1330 : vector<8x128xi1>, vector<8x128xf32>
    %c7_844 = arith.constant 7 : index
    %c35_845 = arith.constant 35 : index
    %1369 = memref.load %arg3[%c7_844, %c35_845] : memref<12x36xf32, #tpu.memory_space<smem>>
    %1370 = vector.broadcast %1369 : f32 to vector<8x128xf32>
    %1371 = arith.select %1347, %1370, %1333 : vector<8x128xi1>, vector<8x128xf32>
    %c8_846 = arith.constant 8 : index
    %c35_847 = arith.constant 35 : index
    %1372 = memref.load %arg3[%c8_846, %c35_847] : memref<12x36xf32, #tpu.memory_space<smem>>
    %1373 = vector.broadcast %1372 : f32 to vector<8x128xf32>
    %1374 = arith.select %1347, %1373, %1336 : vector<8x128xi1>, vector<8x128xf32>
    %c9_848 = arith.constant 9 : index
    %c35_849 = arith.constant 35 : index
    %1375 = memref.load %arg3[%c9_848, %c35_849] : memref<12x36xf32, #tpu.memory_space<smem>>
    %1376 = vector.broadcast %1375 : f32 to vector<8x128xf32>
    %1377 = arith.select %1347, %1376, %1339 : vector<8x128xi1>, vector<8x128xf32>
    %c10_850 = arith.constant 10 : index
    %c35_851 = arith.constant 35 : index
    %1378 = memref.load %arg3[%c10_850, %c35_851] : memref<12x36xf32, #tpu.memory_space<smem>>
    %1379 = vector.broadcast %1378 : f32 to vector<8x128xf32>
    %1380 = arith.select %1347, %1379, %1342 : vector<8x128xi1>, vector<8x128xf32>
    %c11_852 = arith.constant 11 : index
    %c35_853 = arith.constant 35 : index
    %1381 = memref.load %arg3[%c11_852, %c35_853] : memref<12x36xf32, #tpu.memory_space<smem>>
    %1382 = vector.broadcast %1381 : f32 to vector<8x128xf32>
    %1383 = arith.select %1347, %1382, %1345 : vector<8x128xi1>, vector<8x128xf32>
    %1384 = arith.mulf %2, %2 : vector<8x128xf32>
    %1385 = arith.mulf %1384, %2 : vector<8x128xf32>
    %cst_854 = arith.constant 1.000000e+00 : f32
    %1386 = vector.broadcast %cst_854 : f32 to vector<8x128xf32>
    %1387 = arith.mulf %1350, %1386 : vector<8x128xf32>
    %cst_855 = arith.constant 1.000000e+00 : f32
    %1388 = vector.broadcast %cst_855 : f32 to vector<8x128xf32>
    %1389 = arith.mulf %1362, %1388 : vector<8x128xf32>
    %cst_856 = arith.constant 1.000000e+00 : f32
    %1390 = vector.broadcast %cst_856 : f32 to vector<8x128xf32>
    %1391 = arith.mulf %1390, %2 : vector<8x128xf32>
    %1392 = arith.mulf %1353, %1391 : vector<8x128xf32>
    %1393 = arith.mulf %1365, %1391 : vector<8x128xf32>
    %1394 = arith.addf %1387, %1392 : vector<8x128xf32>
    %1395 = arith.addf %1389, %1393 : vector<8x128xf32>
    %cst_857 = arith.constant 5.000000e-01 : f32
    %1396 = vector.broadcast %cst_857 : f32 to vector<8x128xf32>
    %1397 = arith.mulf %1396, %1384 : vector<8x128xf32>
    %1398 = arith.mulf %1356, %1397 : vector<8x128xf32>
    %1399 = arith.mulf %1368, %1397 : vector<8x128xf32>
    %1400 = arith.addf %1394, %1398 : vector<8x128xf32>
    %1401 = arith.addf %1395, %1399 : vector<8x128xf32>
    %cst_858 = arith.constant 0.166666672 : f32
    %1402 = vector.broadcast %cst_858 : f32 to vector<8x128xf32>
    %1403 = arith.mulf %1402, %1385 : vector<8x128xf32>
    %1404 = arith.mulf %1359, %1403 : vector<8x128xf32>
    %1405 = arith.mulf %1371, %1403 : vector<8x128xf32>
    %1406 = arith.addf %1400, %1404 : vector<8x128xf32>
    %1407 = arith.addf %1401, %1405 : vector<8x128xf32>
    %cst_859 = arith.constant 1.000000e+00 : f32
    %1408 = vector.broadcast %cst_859 : f32 to vector<8x128xf32>
    %1409 = arith.addf %1408, %1407 : vector<8x128xf32>
    %cst_860 = arith.constant 0.000000e+00 : f32
    %1410 = vector.broadcast %cst_860 : f32 to vector<8x128xf32>
    %1411 = arith.subf %1410, %1406 : vector<8x128xf32>
    %1412 = math.exp %1411 : vector<8x128xf32>
    %1413 = arith.subf %1409, %1412 : vector<8x128xf32>
    %1414 = arith.mulf %4, %1413 : vector<8x128xf32>
    %cst_861 = arith.constant 1.960000e+03 : f32
    %1415 = vector.broadcast %cst_861 : f32 to vector<8x128xf32>
    %1416 = arith.mulf %1415, %2 : vector<8x128xf32>
    %1417 = math.exp %1416 : vector<8x128xf32>
    %cst_862 = arith.constant 1.000000e+00 : f32
    %1418 = vector.broadcast %cst_862 : f32 to vector<8x128xf32>
    %1419 = arith.subf %1417, %1418 : vector<8x128xf32>
    %cst_863 = arith.constant 3.400000e-02 : f32
    %1420 = vector.broadcast %cst_863 : f32 to vector<8x128xf32>
    %1421 = arith.mulf %1420, %1419 : vector<8x128xf32>
    %1422 = arith.mulf %1374, %1421 : vector<8x128xf32>
    %1423 = arith.mulf %1377, %1421 : vector<8x128xf32>
    %1424 = arith.mulf %1380, %1421 : vector<8x128xf32>
    %1425 = arith.mulf %1383, %1421 : vector<8x128xf32>
    %cst_864 = arith.constant 0.000000e+00 : f32
    %1426 = vector.broadcast %cst_864 : f32 to vector<8x128xf32>
    %1427 = arith.cmpf oeq, %14, %1426 : vector<8x128xf32>
    %cst_865 = arith.constant 0.000000e+00 : f32
    %1428 = vector.broadcast %cst_865 : f32 to vector<8x128xf32>
    %1429 = arith.cmpf oeq, %16, %1428 : vector<8x128xf32>
    %1430 = arith.mulf %1423, %14 : vector<8x128xf32>
    %1431 = arith.mulf %1423, %16 : vector<8x128xf32>
    %cst_866 = arith.constant 1.000000e+00 : f32
    %1432 = vector.broadcast %cst_866 : f32 to vector<8x128xf32>
    %1433 = arith.select %1427, %1432, %1430 : vector<8x128xi1>, vector<8x128xf32>
    %cst_867 = arith.constant 1.000000e+00 : f32
    %1434 = vector.broadcast %cst_867 : f32 to vector<8x128xf32>
    %1435 = arith.select %1429, %1434, %1431 : vector<8x128xi1>, vector<8x128xf32>
    %cst_868 = arith.constant 5.000000e-01 : f32
    %1436 = vector.broadcast %cst_868 : f32 to vector<8x128xf32>
    %1437 = arith.divf %1436, %1433 : vector<8x128xf32>
    %cst_869 = arith.constant 5.000000e-01 : f32
    %1438 = vector.broadcast %cst_869 : f32 to vector<8x128xf32>
    %1439 = arith.divf %1438, %1435 : vector<8x128xf32>
    %1440 = arith.mulf %1433, %1433 : vector<8x128xf32>
    %cst_870 = arith.constant 2.000000e+00 : f32
    %1441 = vector.broadcast %cst_870 : f32 to vector<8x128xf32>
    %1442 = arith.mulf %1441, %1433 : vector<8x128xf32>
    %cst_871 = arith.constant 1.000000e+00 : f32
    %1443 = vector.broadcast %cst_871 : f32 to vector<8x128xf32>
    %1444 = arith.subf %1435, %1443 : vector<8x128xf32>
    %1445 = arith.mulf %1442, %1444 : vector<8x128xf32>
    %1446 = arith.subf %1440, %1445 : vector<8x128xf32>
    %cst_872 = arith.constant 1.000000e+00 : f32
    %1447 = vector.broadcast %cst_872 : f32 to vector<8x128xf32>
    %1448 = arith.addf %1435, %1447 : vector<8x128xf32>
    %1449 = arith.mulf %1448, %1448 : vector<8x128xf32>
    %1450 = arith.addf %1446, %1449 : vector<8x128xf32>
    %1451 = math.sqrt %1450 : vector<8x128xf32>
    %1452 = arith.mulf %1435, %1435 : vector<8x128xf32>
    %cst_873 = arith.constant 2.000000e+00 : f32
    %1453 = vector.broadcast %cst_873 : f32 to vector<8x128xf32>
    %1454 = arith.mulf %1453, %1435 : vector<8x128xf32>
    %cst_874 = arith.constant 1.000000e+00 : f32
    %1455 = vector.broadcast %cst_874 : f32 to vector<8x128xf32>
    %1456 = arith.subf %1433, %1455 : vector<8x128xf32>
    %1457 = arith.mulf %1454, %1456 : vector<8x128xf32>
    %1458 = arith.subf %1452, %1457 : vector<8x128xf32>
    %cst_875 = arith.constant 1.000000e+00 : f32
    %1459 = vector.broadcast %cst_875 : f32 to vector<8x128xf32>
    %1460 = arith.addf %1433, %1459 : vector<8x128xf32>
    %1461 = arith.mulf %1460, %1460 : vector<8x128xf32>
    %1462 = arith.addf %1458, %1461 : vector<8x128xf32>
    %1463 = math.sqrt %1462 : vector<8x128xf32>
    %1464 = arith.subf %1451, %1431 : vector<8x128xf32>
    %cst_876 = arith.constant 1.000000e+00 : f32
    %1465 = vector.broadcast %cst_876 : f32 to vector<8x128xf32>
    %1466 = arith.subf %1464, %1465 : vector<8x128xf32>
    %1467 = arith.mulf %1437, %1466 : vector<8x128xf32>
    %cst_877 = arith.constant 5.000000e-01 : f32
    %1468 = vector.broadcast %cst_877 : f32 to vector<8x128xf32>
    %1469 = arith.addf %1468, %1467 : vector<8x128xf32>
    %1470 = arith.subf %1463, %1430 : vector<8x128xf32>
    %cst_878 = arith.constant 1.000000e+00 : f32
    %1471 = vector.broadcast %cst_878 : f32 to vector<8x128xf32>
    %1472 = arith.subf %1470, %1471 : vector<8x128xf32>
    %1473 = arith.mulf %1439, %1472 : vector<8x128xf32>
    %cst_879 = arith.constant 5.000000e-01 : f32
    %1474 = vector.broadcast %cst_879 : f32 to vector<8x128xf32>
    %1475 = arith.addf %1474, %1473 : vector<8x128xf32>
    %cst_880 = arith.constant 2.000000e+00 : f32
    %1476 = vector.broadcast %cst_880 : f32 to vector<8x128xf32>
    %1477 = arith.mulf %1476, %1439 : vector<8x128xf32>
    %1478 = arith.select %1427, %1477, %1469 : vector<8x128xi1>, vector<8x128xf32>
    %cst_881 = arith.constant 1.000000e+00 : f32
    %1479 = vector.broadcast %cst_881 : f32 to vector<8x128xf32>
    %1480 = arith.select %1429, %1479, %1478 : vector<8x128xi1>, vector<8x128xf32>
    %cst_882 = arith.constant 2.000000e+00 : f32
    %1481 = vector.broadcast %cst_882 : f32 to vector<8x128xf32>
    %1482 = arith.mulf %1481, %1437 : vector<8x128xf32>
    %1483 = arith.select %1429, %1482, %1475 : vector<8x128xi1>, vector<8x128xf32>
    %cst_883 = arith.constant 1.000000e+00 : f32
    %1484 = vector.broadcast %cst_883 : f32 to vector<8x128xf32>
    %1485 = arith.select %1427, %1484, %1483 : vector<8x128xi1>, vector<8x128xf32>
    %cst_884 = arith.constant 0.000000e+00 : f32
    %1486 = vector.broadcast %cst_884 : f32 to vector<8x128xf32>
    %1487 = arith.cmpf oeq, %10, %1486 : vector<8x128xf32>
    %cst_885 = arith.constant 0.000000e+00 : f32
    %1488 = vector.broadcast %cst_885 : f32 to vector<8x128xf32>
    %1489 = arith.cmpf oeq, %12, %1488 : vector<8x128xf32>
    %1490 = arith.mulf %1422, %10 : vector<8x128xf32>
    %1491 = arith.mulf %1422, %12 : vector<8x128xf32>
    %cst_886 = arith.constant 1.000000e+00 : f32
    %1492 = vector.broadcast %cst_886 : f32 to vector<8x128xf32>
    %1493 = arith.select %1487, %1492, %1490 : vector<8x128xi1>, vector<8x128xf32>
    %cst_887 = arith.constant 1.000000e+00 : f32
    %1494 = vector.broadcast %cst_887 : f32 to vector<8x128xf32>
    %1495 = arith.select %1489, %1494, %1491 : vector<8x128xi1>, vector<8x128xf32>
    %cst_888 = arith.constant 5.000000e-01 : f32
    %1496 = vector.broadcast %cst_888 : f32 to vector<8x128xf32>
    %1497 = arith.divf %1496, %1493 : vector<8x128xf32>
    %cst_889 = arith.constant 5.000000e-01 : f32
    %1498 = vector.broadcast %cst_889 : f32 to vector<8x128xf32>
    %1499 = arith.divf %1498, %1495 : vector<8x128xf32>
    %1500 = arith.mulf %1493, %1493 : vector<8x128xf32>
    %cst_890 = arith.constant 2.000000e+00 : f32
    %1501 = vector.broadcast %cst_890 : f32 to vector<8x128xf32>
    %1502 = arith.mulf %1501, %1493 : vector<8x128xf32>
    %cst_891 = arith.constant 1.000000e+00 : f32
    %1503 = vector.broadcast %cst_891 : f32 to vector<8x128xf32>
    %1504 = arith.subf %1495, %1503 : vector<8x128xf32>
    %1505 = arith.mulf %1502, %1504 : vector<8x128xf32>
    %1506 = arith.subf %1500, %1505 : vector<8x128xf32>
    %cst_892 = arith.constant 1.000000e+00 : f32
    %1507 = vector.broadcast %cst_892 : f32 to vector<8x128xf32>
    %1508 = arith.addf %1495, %1507 : vector<8x128xf32>
    %1509 = arith.mulf %1508, %1508 : vector<8x128xf32>
    %1510 = arith.addf %1506, %1509 : vector<8x128xf32>
    %1511 = math.sqrt %1510 : vector<8x128xf32>
    %1512 = arith.mulf %1495, %1495 : vector<8x128xf32>
    %cst_893 = arith.constant 2.000000e+00 : f32
    %1513 = vector.broadcast %cst_893 : f32 to vector<8x128xf32>
    %1514 = arith.mulf %1513, %1495 : vector<8x128xf32>
    %cst_894 = arith.constant 1.000000e+00 : f32
    %1515 = vector.broadcast %cst_894 : f32 to vector<8x128xf32>
    %1516 = arith.subf %1493, %1515 : vector<8x128xf32>
    %1517 = arith.mulf %1514, %1516 : vector<8x128xf32>
    %1518 = arith.subf %1512, %1517 : vector<8x128xf32>
    %cst_895 = arith.constant 1.000000e+00 : f32
    %1519 = vector.broadcast %cst_895 : f32 to vector<8x128xf32>
    %1520 = arith.addf %1493, %1519 : vector<8x128xf32>
    %1521 = arith.mulf %1520, %1520 : vector<8x128xf32>
    %1522 = arith.addf %1518, %1521 : vector<8x128xf32>
    %1523 = math.sqrt %1522 : vector<8x128xf32>
    %1524 = arith.subf %1511, %1491 : vector<8x128xf32>
    %cst_896 = arith.constant 1.000000e+00 : f32
    %1525 = vector.broadcast %cst_896 : f32 to vector<8x128xf32>
    %1526 = arith.subf %1524, %1525 : vector<8x128xf32>
    %1527 = arith.mulf %1497, %1526 : vector<8x128xf32>
    %cst_897 = arith.constant 5.000000e-01 : f32
    %1528 = vector.broadcast %cst_897 : f32 to vector<8x128xf32>
    %1529 = arith.addf %1528, %1527 : vector<8x128xf32>
    %1530 = arith.subf %1523, %1490 : vector<8x128xf32>
    %cst_898 = arith.constant 1.000000e+00 : f32
    %1531 = vector.broadcast %cst_898 : f32 to vector<8x128xf32>
    %1532 = arith.subf %1530, %1531 : vector<8x128xf32>
    %1533 = arith.mulf %1499, %1532 : vector<8x128xf32>
    %cst_899 = arith.constant 5.000000e-01 : f32
    %1534 = vector.broadcast %cst_899 : f32 to vector<8x128xf32>
    %1535 = arith.addf %1534, %1533 : vector<8x128xf32>
    %cst_900 = arith.constant 2.000000e+00 : f32
    %1536 = vector.broadcast %cst_900 : f32 to vector<8x128xf32>
    %1537 = arith.mulf %1536, %1499 : vector<8x128xf32>
    %1538 = arith.select %1487, %1537, %1529 : vector<8x128xi1>, vector<8x128xf32>
    %cst_901 = arith.constant 1.000000e+00 : f32
    %1539 = vector.broadcast %cst_901 : f32 to vector<8x128xf32>
    %1540 = arith.select %1489, %1539, %1538 : vector<8x128xi1>, vector<8x128xf32>
    %cst_902 = arith.constant 2.000000e+00 : f32
    %1541 = vector.broadcast %cst_902 : f32 to vector<8x128xf32>
    %1542 = arith.mulf %1541, %1497 : vector<8x128xf32>
    %1543 = arith.select %1489, %1542, %1535 : vector<8x128xi1>, vector<8x128xf32>
    %cst_903 = arith.constant 1.000000e+00 : f32
    %1544 = vector.broadcast %cst_903 : f32 to vector<8x128xf32>
    %1545 = arith.select %1487, %1544, %1543 : vector<8x128xi1>, vector<8x128xf32>
    %1546 = arith.mulf %1424, %16 : vector<8x128xf32>
    %1547 = arith.mulf %1546, %1485 : vector<8x128xf32>
    %cst_904 = arith.constant 1.000000e+00 : f32
    %1548 = vector.broadcast %cst_904 : f32 to vector<8x128xf32>
    %1549 = arith.addf %1548, %1547 : vector<8x128xf32>
    %1550 = arith.mulf %1549, %1540 : vector<8x128xf32>
    %1551 = arith.mulf %1425, %14 : vector<8x128xf32>
    %1552 = arith.mulf %1551, %1480 : vector<8x128xf32>
    %cst_905 = arith.constant 1.000000e+00 : f32
    %1553 = vector.broadcast %cst_905 : f32 to vector<8x128xf32>
    %1554 = arith.addf %1553, %1552 : vector<8x128xf32>
    %1555 = arith.mulf %1554, %1545 : vector<8x128xf32>
    %cst_906 = arith.constant 0.000000e+00 : f32
    %1556 = vector.broadcast %cst_906 : f32 to vector<8x128xf32>
    %1557 = arith.cmpf oeq, %6, %1556 : vector<8x128xf32>
    %cst_907 = arith.constant 1.000000e+00 : f32
    %1558 = vector.broadcast %cst_907 : f32 to vector<8x128xf32>
    %1559 = arith.subf %1540, %1558 : vector<8x128xf32>
    %cst_908 = arith.constant 5.000000e-01 : f32
    %1560 = vector.broadcast %cst_908 : f32 to vector<8x128xf32>
    %1561 = arith.mulf %1559, %1560 : vector<8x128xf32>
    %1562 = math.log %1550 : vector<8x128xf32>
    %1563 = arith.subf %1561, %1562 : vector<8x128xf32>
    %1564 = arith.mulf %6, %1563 : vector<8x128xf32>
    %cst_909 = arith.constant 0.000000e+00 : f32
    %1565 = vector.broadcast %cst_909 : f32 to vector<8x128xf32>
    %1566 = arith.select %1557, %1565, %1564 : vector<8x128xi1>, vector<8x128xf32>
    %cst_910 = arith.constant 0.000000e+00 : f32
    %1567 = vector.broadcast %cst_910 : f32 to vector<8x128xf32>
    %1568 = arith.cmpf oeq, %8, %1567 : vector<8x128xf32>
    %cst_911 = arith.constant 1.000000e+00 : f32
    %1569 = vector.broadcast %cst_911 : f32 to vector<8x128xf32>
    %1570 = arith.subf %1545, %1569 : vector<8x128xf32>
    %cst_912 = arith.constant 5.000000e-01 : f32
    %1571 = vector.broadcast %cst_912 : f32 to vector<8x128xf32>
    %1572 = arith.mulf %1570, %1571 : vector<8x128xf32>
    %1573 = math.log %1555 : vector<8x128xf32>
    %1574 = arith.subf %1572, %1573 : vector<8x128xf32>
    %1575 = arith.mulf %8, %1574 : vector<8x128xf32>
    %cst_913 = arith.constant 0.000000e+00 : f32
    %1576 = vector.broadcast %cst_913 : f32 to vector<8x128xf32>
    %1577 = arith.select %1568, %1576, %1575 : vector<8x128xi1>, vector<8x128xf32>
    %cst_914 = arith.constant 1.000000e+00 : f32
    %1578 = vector.broadcast %cst_914 : f32 to vector<8x128xf32>
    %1579 = arith.subf %1578, %1480 : vector<8x128xf32>
    %1580 = arith.mulf %14, %1579 : vector<8x128xf32>
    %cst_915 = arith.constant 5.000000e-01 : f32
    %1581 = vector.broadcast %cst_915 : f32 to vector<8x128xf32>
    %1582 = arith.mulf %1580, %1581 : vector<8x128xf32>
    %cst_916 = arith.constant 1.000000e+00 : f32
    %1583 = vector.broadcast %cst_916 : f32 to vector<8x128xf32>
    %1584 = arith.subf %1583, %1485 : vector<8x128xf32>
    %1585 = arith.mulf %16, %1584 : vector<8x128xf32>
    %cst_917 = arith.constant 5.000000e-01 : f32
    %1586 = vector.broadcast %cst_917 : f32 to vector<8x128xf32>
    %1587 = arith.mulf %1585, %1586 : vector<8x128xf32>
    %1588 = arith.addf %1582, %1587 : vector<8x128xf32>
    %1589 = arith.mulf %4, %1588 : vector<8x128xf32>
    %1590 = arith.addf %1566, %1577 : vector<8x128xf32>
    %1591 = arith.addf %1590, %1589 : vector<8x128xf32>
    %1592 = arith.addf %1591, %1414 : vector<8x128xf32>
    %c0_918 = arith.constant 0 : index
    %c0_919 = arith.constant 0 : index
    %1593 = vector.load %arg4[%c0_918, %c0_919] : memref<8x128xf32, #tpu.memory_space<vmem>>, vector<8x128xf32>
    tpu.vector_store %arg4[%c0_918, %c0_919], %1592 {strides = array<i32>} : memref<8x128xf32, #tpu.memory_space<vmem>>, vector<8x128xf32>,
    return
  }
  func.func @transform_0(%arg0: i32) -> (i32, i32) {
    %c0_i32 = arith.constant 0 : i32
    %c0_i32_0 = arith.constant 0 : i32
    return %c0_i32, %arg0 : i32, i32
  }
  func.func @transform_1(%arg0: i32) -> (i32, i32, i32) {
    %c0_i32 = arith.constant 0 : i32
    %c0_i32_0 = arith.constant 0 : i32
    %c0_i32_1 = arith.constant 0 : i32
    return %c0_i32, %c0_i32_0, %arg0 : i32, i32, i32
  }
  func.func @transform_2(%arg0: i32) -> (i32, i32) {
    %c0_i32 = arith.constant 0 : i32
    %c0_i32_0 = arith.constant 0 : i32
    %c0_i32_1 = arith.constant 0 : i32
    return %c0_i32, %c0_i32_0 : i32, i32
  }
  func.func @transform_3(%arg0: i32) -> (i32, i32) {
    %c0_i32 = arith.constant 0 : i32
    %c0_i32_0 = arith.constant 0 : i32
    return %c0_i32, %arg0 : i32, i32
  }
}

</mosaic_0001>

<llo_original>
// kernel: tpu_custom_call.1
$region0: #{tpu_custom_call.1}
  #allocation0 [shape = 'u32[]', space=smem, size = 0x4, offset = 0x4, fixed_abs, tag = 'smem constant byte address 0x4 - core index']
  #allocation1 [shape = 'u32[144,128]{1,0:T(1,128)}', space=vmem, size = 0x12000, scoped, tag = 'internal scratch']
  %s0 = inlined_call_operand.hbm [shape: s32[8,128], index: 0, kind: input, shape index: {}]
  %s1 = inlined_call_operand.hbm [shape: f32[8,8,128], index: 1, kind: input, shape index: {}]
  %s2 = inlined_call_operand.hbm [shape: f32[12,36], index: 2, kind: input, shape index: {}]
  %s3 = inlined_call_operand.hbm [shape: f32[8,128], index: 3, kind: output, shape index: {}]
  %s4 = sld [smem:[#allocation0]]
  $region34: #{tpu_custom_call.1} parent=0
    _
  %s6 = ssub.s32 1, %s4
  %s7 = scalar_select 0, %s6, %s4
  $region1: #{tpu_custom_call.1} parent=0
    #allocation2 [shape = 'u8[4096]{0}', space=vmem, size = 0x1000, scoped, tag = 'input window, operand 0, single buffered']
    #allocation3 [shape = 's32[1]{0}', space=sflag, size = 0x4, scoped, tag = 'scoped memory for tpu_custom_call.1']
    #allocation4 [shape = 's32[1]{0}', space=sflag, size = 0x4, scoped, tag = 'scoped memory for tpu_custom_call.1']
    #allocation5 [shape = 's32[1]{0}', space=sflag, size = 0x4, scoped, tag = 'scoped memory for tpu_custom_call.1']
    #allocation6 [shape = 'u8[32768]{0}', space=vmem, size = 0x8000, scoped, tag = 'input window, operand 1, single buffered']
    #allocation7 [shape = 's32[1]{0}', space=sflag, size = 0x4, scoped, tag = 'scoped memory for tpu_custom_call.1']
    #allocation8 [shape = 'u8[8192]{0}', space=smem, size = 0x2000, scoped, tag = 'input window, operand 2, single buffered']
    #allocation9 [shape = 'u8[4096]{0}', space=vmem, size = 0x1000, scoped, tag = 'output window, operand 0, single buffered']
    %8 = vsyncpa [#allocation3], 0
    %9 = vsyncpa [#allocation7], 0
    %10 = vsyncpa [#allocation5], 0
    %11 = vsyncpa [#allocation4], 0
    // Predicated region
    $region2: #{tpu_custom_call.1} parent=1 // pred_check
      _
    $region3: #{tpu_custom_call.1} parent=1 // pred_check_branch
      %13 = sbr.rel (0) target = $region5
    $region4: #{tpu_custom_call.1} parent=1 // pred_region
      %s15 = ssub.s32 128, 128
      %16 = vsyncadd [#allocation3], %s15
      %s18 = sshll.u32 [#allocation2], 4
      %s19 = int_to_ptr.vmem [resolvable:$true] %s18
      %21 = dma.hbm_to_vmem [thread:$0]  %s0, 128, %s19, [#allocation3]
    $region5: #{tpu_custom_call.1} parent=1 // pred_fallthru
      _
    // Predicated region
    $region6: #{tpu_custom_call.1} parent=1 // pred_check
      _
    $region7: #{tpu_custom_call.1} parent=1 // pred_check_branch
      %23 = sbr.rel (0) target = $region9
    $region8: #{tpu_custom_call.1} parent=1 // pred_region
      %s25 = ssub.s32 1024, 1024
      %26 = vsyncadd [#allocation7], %s25
      %s27 = sshll.u32 [#allocation6], 4
      %s28 = int_to_ptr.vmem [resolvable:$true] %s27
      %33 = dma.hbm_to_vmem [thread:$0]  %s1, 1024, %s28, [#allocation7], 128, 128, 8
    $region9: #{tpu_custom_call.1} parent=1 // pred_fallthru
      _
    // Predicated region
    $region10: #{tpu_custom_call.1} parent=1 // pred_check
      _
    $region11: #{tpu_custom_call.1} parent=1 // pred_check_branch
      %35 = sbr.rel (0) target = $region13
    $region12: #{tpu_custom_call.1} parent=1 // pred_region
      %s37 = ssub.s32 256, 256
      %38 = vsyncadd [#allocation5], %s37
      %43 = dma.hbm_to_smem %s2, 256, [#allocation8], [#allocation5], 128, 128, 8
    $region13: #{tpu_custom_call.1} parent=1 // pred_fallthru
      _
    // Predicated region
    $region14: #{tpu_custom_call.1} parent=1 // pred_check
      _
    $region15: #{tpu_custom_call.1} parent=1 // pred_check_branch
      %45 = sbr.rel (0) target = $region17
    $region16: #{tpu_custom_call.1} parent=1 // pred_region
      %46 = dma.done [#allocation3], 128
    $region17: #{tpu_custom_call.1} parent=1 // pred_fallthru
      _
    // Predicated region
    $region18: #{tpu_custom_call.1} parent=1 // pred_check
      _
    $region19: #{tpu_custom_call.1} parent=1 // pred_check_branch
      %48 = sbr.rel (0) target = $region21
    $region20: #{tpu_custom_call.1} parent=1 // pred_region
      %49 = dma.done [#allocation7], 1024
    $region21: #{tpu_custom_call.1} parent=1 // pred_fallthru
      _
    // Predicated region
    $region22: #{tpu_custom_call.1} parent=1 // pred_check
      _
    $region23: #{tpu_custom_call.1} parent=1 // pred_check_branch
      %51 = sbr.rel (0) target = $region25
    $region24: #{tpu_custom_call.1} parent=1 // pred_region
      %52 = dma.done [#allocation5], 256
    $region25: #{tpu_custom_call.1} parent=1 // pred_fallthru
      _
    %53 = sfence
    %v54 = vld [vmem:[#allocation2] sm:$0xff]
    %v55 = vld [vmem:[#allocation6] sm:$0xff]
    %s56 = scalar_lea.vmem [#allocation6], 8
    %v57 = vld [vmem:[%s56] sm:$0xff]
    %s58 = scalar_lea.vmem [#allocation6], 16
    %v59 = vld [vmem:[%s58] sm:$0xff]
    %s60 = scalar_lea.vmem [#allocation6], 24
    %v61 = vld [vmem:[%s60] sm:$0xff]
    %s62 = scalar_lea.vmem [#allocation6], 32
    %v63 = vld [vmem:[%s62] sm:$0xff]
    %s64 = scalar_lea.vmem [#allocation6], 40
    %v65 = vld [vmem:[%s64] sm:$0xff]
    %s66 = scalar_lea.vmem [#allocation6], 48
    %v67 = vld [vmem:[%s66] sm:$0xff]
    %s68 = scalar_lea.vmem [#allocation6], 56
    %v69 = vld [vmem:[%s68] sm:$0xff]
    %s70 = sld [smem:[#allocation8]]
    %v71 = vstv %s70
    %v72 = vadd.f32 %v71, 0.0
    %s73 = sld [smem:[#allocation8 + $0x80]]
    %v74 = vstv %s73
    %v75 = vadd.f32 %v74, 0.0
    %s76 = sld [smem:[#allocation8 + $0x100]]
    %v77 = vstv %s76
    %v78 = vadd.f32 %v77, 0.0
    %s79 = sld [smem:[#allocation8 + $0x180]]
    %v80 = vstv %s79
    %v81 = vadd.f32 %v80, 0.0
    %s82 = sld [smem:[#allocation8 + $0x200]]
    %v83 = vstv %s82
    %v84 = vadd.f32 %v83, 0.0
    %s85 = sld [smem:[#allocation8 + $0x280]]
    %v86 = vstv %s85
    %v87 = vadd.f32 %v86, 0.0
    %s88 = sld [smem:[#allocation8 + $0x300]]
    %v89 = vstv %s88
    %v90 = vadd.f32 %v89, 0.0
    %s91 = sld [smem:[#allocation8 + $0x380]]
    %v92 = vstv %s91
    %v93 = vadd.f32 %v92, 0.0
    %s94 = sld [smem:[#allocation8 + $0x400]]
    %v95 = vstv %s94
    %v96 = vadd.f32 %v95, 0.0
    %s97 = sld [smem:[#allocation8 + $0x480]]
    %v98 = vstv %s97
    %v99 = vadd.f32 %v98, 0.0
    %s100 = sld [smem:[#allocation8 + $0x500]]
    %v101 = vstv %s100
    %v102 = vadd.f32 %v101, 0.0
    %s103 = sld [smem:[#allocation8 + $0x580]]
    %v104 = vstv %s103
    %v105 = vadd.f32 %v104, 0.0
    %vm106 = vcmp.eq.s32.totalorder %v54, 1
    %s107 = sld [smem:[#allocation8 + $0x1]]
    %v108 = vstv %s107
    %v109 = vsel %vm106, %v108, %v72
    %s110 = sld [smem:[#allocation8 + $0x81]]
    %v111 = vstv %s110
    %v112 = vsel %vm106, %v111, %v75
    %s113 = sld [smem:[#allocation8 + $0x101]]
    %v114 = vstv %s113
    %v115 = vsel %vm106, %v114, %v78
    %s116 = sld [smem:[#allocation8 + $0x181]]
    %v117 = vstv %s116
    %v118 = vsel %vm106, %v117, %v81
    %s119 = sld [smem:[#allocation8 + $0x201]]
    %v120 = vstv %s119
    %v121 = vsel %vm106, %v120, %v84
    %s122 = sld [smem:[#allocation8 + $0x281]]
    %v123 = vstv %s122
    %v124 = vsel %vm106, %v123, %v87
    %s125 = sld [smem:[#allocation8 + $0x301]]
    %v126 = vstv %s125
    %v127 = vsel %vm106, %v126, %v90
    %s128 = sld [smem:[#allocation8 + $0x381]]
    %v129 = vstv %s128
    %v130 = vsel %vm106, %v129, %v93
    %s131 = sld [smem:[#allocation8 + $0x401]]
    %v132 = vstv %s131
    %v133 = vsel %vm106, %v132, %v96
    %s134 = sld [smem:[#allocation8 + $0x481]]
    %v135 = vstv %s134
    %v136 = vsel %vm106, %v135, %v99
    %s137 = sld [smem:[#allocation8 + $0x501]]
    %v138 = vstv %s137
    %v139 = vsel %vm106, %v138, %v102
    %s140 = sld [smem:[#allocation8 + $0x581]]
    %v141 = vstv %s140
    %v142 = vsel %vm106, %v141, %v105
    %vm143 = vcmp.eq.s32.totalorder %v54, 2
    %s144 = sld [smem:[#allocation8 + $0x2]]
    %v145 = vstv %s144
    %v146 = vsel %vm143, %v145, %v109
    %s147 = sld [smem:[#allocation8 + $0x82]]
    %v148 = vstv %s147
    %v149 = vsel %vm143, %v148, %v112
    %s150 = sld [smem:[#allocation8 + $0x102]]
    %v151 = vstv %s150
    %v152 = vsel %vm143, %v151, %v115
    %s153 = sld [smem:[#allocation8 + $0x182]]
    %v154 = vstv %s153
    %v155 = vsel %vm143, %v154, %v118
    %s156 = sld [smem:[#allocation8 + $0x202]]
    %v157 = vstv %s156
    %v158 = vsel %vm143, %v157, %v121
    %s159 = sld [smem:[#allocation8 + $0x282]]
    %v160 = vstv %s159
    %v161 = vsel %vm143, %v160, %v124
    %s162 = sld [smem:[#allocation8 + $0x302]]
    %v163 = vstv %s162
    %v164 = vsel %vm143, %v163, %v127
    %s165 = sld [smem:[#allocation8 + $0x382]]
    %v166 = vstv %s165
    %v167 = vsel %vm143, %v166, %v130
    %s168 = sld [smem:[#allocation8 + $0x402]]
    %v169 = vstv %s168
    %v170 = vsel %vm143, %v169, %v133
    %s171 = sld [smem:[#allocation8 + $0x482]]
    %v172 = vstv %s171
    %v173 = vsel %vm143, %v172, %v136
    %s174 = sld [smem:[#allocation8 + $0x502]]
    %v175 = vstv %s174
    %v176 = vsel %vm143, %v175, %v139
    %s177 = sld [smem:[#allocation8 + $0x582]]
    %v178 = vstv %s177
    %v179 = vsel %vm143, %v178, %v142
    %vm180 = vcmp.eq.s32.totalorder %v54, 3
    %s181 = sld [smem:[#allocation8 + $0x3]]
    %v182 = vstv %s181
    %v183 = vsel %vm180, %v182, %v146
    %s184 = sld [smem:[#allocation8 + $0x83]]
    %v185 = vstv %s184
    %v186 = vsel %vm180, %v185, %v149
    %s187 = sld [smem:[#allocation8 + $0x103]]
    %v188 = vstv %s187
    %v189 = vsel %vm180, %v188, %v152
    %s190 = sld [smem:[#allocation8 + $0x183]]
    %v191 = vstv %s190
    %v192 = vsel %vm180, %v191, %v155
    %s193 = sld [smem:[#allocation8 + $0x203]]
    %v194 = vstv %s193
    %v195 = vsel %vm180, %v194, %v158
    %s196 = sld [smem:[#allocation8 + $0x283]]
    %v197 = vstv %s196
    %v198 = vsel %vm180, %v197, %v161
    %s199 = sld [smem:[#allocation8 + $0x303]]
    %v200 = vstv %s199
    %v201 = vsel %vm180, %v200, %v164
    %s202 = sld [smem:[#allocation8 + $0x383]]
    %v203 = vstv %s202
    %v204 = vsel %vm180, %v203, %v167
    %s205 = sld [smem:[#allocation8 + $0x403]]
    %v206 = vstv %s205
    %v207 = vsel %vm180, %v206, %v170
    %s208 = sld [smem:[#allocation8 + $0x483]]
    %v209 = vstv %s208
    %v210 = vsel %vm180, %v209, %v173
    %s211 = sld [smem:[#allocation8 + $0x503]]
    %v212 = vstv %s211
    %v213 = vsel %vm180, %v212, %v176
    %s214 = sld [smem:[#allocation8 + $0x583]]
    %v215 = vstv %s214
    %v216 = vsel %vm180, %v215, %v179
    %vm217 = vcmp.eq.s32.totalorder %v54, 4
    %s218 = sld [smem:[#allocation8 + $0x4]]
    %v219 = vstv %s218
    %v220 = vsel %vm217, %v219, %v183
    %s221 = sld [smem:[#allocation8 + $0x84]]
    %v222 = vstv %s221
    %v223 = vsel %vm217, %v222, %v186
    %s224 = sld [smem:[#allocation8 + $0x104]]
    %v225 = vstv %s224
    %v226 = vsel %vm217, %v225, %v189
    %s227 = sld [smem:[#allocation8 + $0x184]]
    %v228 = vstv %s227
    %v229 = vsel %vm217, %v228, %v192
    %s230 = sld [smem:[#allocation8 + $0x204]]
    %v231 = vstv %s230
    %v232 = vsel %vm217, %v231, %v195
    %s233 = sld [smem:[#allocation8 + $0x284]]
    %v234 = vstv %s233
    %v235 = vsel %vm217, %v234, %v198
    %s236 = sld [smem:[#allocation8 + $0x304]]
    %v237 = vstv %s236
    %v238 = vsel %vm217, %v237, %v201
    %s239 = sld [smem:[#allocation8 + $0x384]]
    %v240 = vstv %s239
    %v241 = vsel %vm217, %v240, %v204
    %s242 = sld [smem:[#allocation8 + $0x404]]
    %v243 = vstv %s242
    %v244 = vsel %vm217, %v243, %v207
    %s245 = sld [smem:[#allocation8 + $0x484]]
    %v246 = vstv %s245
    %v247 = vsel %vm217, %v246, %v210
    %s248 = sld [smem:[#allocation8 + $0x504]]
    %v249 = vstv %s248
    %v250 = vsel %vm217, %v249, %v213
    %s251 = sld [smem:[#allocation8 + $0x584]]
    %v252 = vstv %s251
    %v253 = vsel %vm217, %v252, %v216
    %vm254 = vcmp.eq.s32.totalorder %v54, 5
    %s255 = sld [smem:[#allocation8 + $0x5]]
    %v256 = vstv %s255
    %v257 = vsel %vm254, %v256, %v220
    %s258 = sld [smem:[#allocation8 + $0x85]]
    %v259 = vstv %s258
    %v260 = vsel %vm254, %v259, %v223
    %s261 = sld [smem:[#allocation8 + $0x105]]
    %v262 = vstv %s261
    %v263 = vsel %vm254, %v262, %v226
    %s264 = sld [smem:[#allocation8 + $0x185]]
    %v265 = vstv %s264
    %v266 = vsel %vm254, %v265, %v229
    %s267 = sld [smem:[#allocation8 + $0x205]]
    %v268 = vstv %s267
    %v269 = vsel %vm254, %v268, %v232
    %s270 = sld [smem:[#allocation8 + $0x285]]
    %v271 = vstv %s270
    %v272 = vsel %vm254, %v271, %v235
    %s273 = sld [smem:[#allocation8 + $0x305]]
    %v274 = vstv %s273
    %v275 = vsel %vm254, %v274, %v238
    %s276 = sld [smem:[#allocation8 + $0x385]]
    %v277 = vstv %s276
    %v278 = vsel %vm254, %v277, %v241
    %s279 = sld [smem:[#allocation8 + $0x405]]
    %v280 = vstv %s279
    %v281 = vsel %vm254, %v280, %v244
    %s282 = sld [smem:[#allocation8 + $0x485]]
    %v283 = vstv %s282
    %v284 = vsel %vm254, %v283, %v247
    %s285 = sld [smem:[#allocation8 + $0x505]]
    %v286 = vstv %s285
    %v287 = vsel %vm254, %v286, %v250
    %s288 = sld [smem:[#allocation8 + $0x585]]
    %v289 = vstv %s288
    %v290 = vsel %vm254, %v289, %v253
    %vm291 = vcmp.eq.s32.totalorder %v54, 6
    %s292 = sld [smem:[#allocation8 + $0x6]]
    %v293 = vstv %s292
    %v294 = vsel %vm291, %v293, %v257
    %s295 = sld [smem:[#allocation8 + $0x86]]
    %v296 = vstv %s295
    %v297 = vsel %vm291, %v296, %v260
    %s298 = sld [smem:[#allocation8 + $0x106]]
    %v299 = vstv %s298
    %v300 = vsel %vm291, %v299, %v263
    %s301 = sld [smem:[#allocation8 + $0x186]]
    %v302 = vstv %s301
    %v303 = vsel %vm291, %v302, %v266
    %s304 = sld [smem:[#allocation8 + $0x206]]
    %v305 = vstv %s304
    %v306 = vsel %vm291, %v305, %v269
    %s307 = sld [smem:[#allocation8 + $0x286]]
    %v308 = vstv %s307
    %v309 = vsel %vm291, %v308, %v272
    %s310 = sld [smem:[#allocation8 + $0x306]]
    %v311 = vstv %s310
    %v312 = vsel %vm291, %v311, %v275
    %s313 = sld [smem:[#allocation8 + $0x386]]
    %v314 = vstv %s313
    %v315 = vsel %vm291, %v314, %v278
    %s316 = sld [smem:[#allocation8 + $0x406]]
    %v317 = vstv %s316
    %v318 = vsel %vm291, %v317, %v281
    %s319 = sld [smem:[#allocation8 + $0x486]]
    %v320 = vstv %s319
    %v321 = vsel %vm291, %v320, %v284
    %s322 = sld [smem:[#allocation8 + $0x506]]
    %v323 = vstv %s322
    %v324 = vsel %vm291, %v323, %v287
    %s325 = sld [smem:[#allocation8 + $0x586]]
    %v326 = vstv %s325
    %v327 = vsel %vm291, %v326, %v290
    %vm328 = vcmp.eq.s32.totalorder %v54, 7
    %s329 = sld [smem:[#allocation8 + $0x7]]
    %v330 = vstv %s329
    %v331 = vsel %vm328, %v330, %v294
    %s332 = sld [smem:[#allocation8 + $0x87]]
    %v333 = vstv %s332
    %v334 = vsel %vm328, %v333, %v297
    %s335 = sld [smem:[#allocation8 + $0x107]]
    %v336 = vstv %s335
    %v337 = vsel %vm328, %v336, %v300
    %s338 = sld [smem:[#allocation8 + $0x187]]
    %v339 = vstv %s338
    %v340 = vsel %vm328, %v339, %v303
    %s341 = sld [smem:[#allocation8 + $0x207]]
    %v342 = vstv %s341
    %v343 = vsel %vm328, %v342, %v306
    %s344 = sld [smem:[#allocation8 + $0x287]]
    %v345 = vstv %s344
    %v346 = vsel %vm328, %v345, %v309
    %s347 = sld [smem:[#allocation8 + $0x307]]
    %v348 = vstv %s347
    %v349 = vsel %vm328, %v348, %v312
    %s350 = sld [smem:[#allocation8 + $0x387]]
    %v351 = vstv %s350
    %v352 = vsel %vm328, %v351, %v315
    %s353 = sld [smem:[#allocation8 + $0x407]]
    %v354 = vstv %s353
    %v355 = vsel %vm328, %v354, %v318
    %s356 = sld [smem:[#allocation8 + $0x487]]
    %v357 = vstv %s356
    %v358 = vsel %vm328, %v357, %v321
    %s359 = sld [smem:[#allocation8 + $0x507]]
    %v360 = vstv %s359
    %v361 = vsel %vm328, %v360, %v324
    %s362 = sld [smem:[#allocation8 + $0x587]]
    %v363 = vstv %s362
    %v364 = vsel %vm328, %v363, %v327
    %vm365 = vcmp.eq.s32.totalorder %v54, 8
    %s366 = sld [smem:[#allocation8 + $0x8]]
    %v367 = vstv %s366
    %v368 = vsel %vm365, %v367, %v331
    %s369 = sld [smem:[#allocation8 + $0x88]]
    %v370 = vstv %s369
    %v371 = vsel %vm365, %v370, %v334
    %s372 = sld [smem:[#allocation8 + $0x108]]
    %v373 = vstv %s372
    %v374 = vsel %vm365, %v373, %v337
    %s375 = sld [smem:[#allocation8 + $0x188]]
    %v376 = vstv %s375
    %v377 = vsel %vm365, %v376, %v340
    %s378 = sld [smem:[#allocation8 + $0x208]]
    %v379 = vstv %s378
    %v380 = vsel %vm365, %v379, %v343
    %s381 = sld [smem:[#allocation8 + $0x288]]
    %v382 = vstv %s381
    %v383 = vsel %vm365, %v382, %v346
    %s384 = sld [smem:[#allocation8 + $0x308]]
    %v385 = vstv %s384
    %v386 = vsel %vm365, %v385, %v349
    %s387 = sld [smem:[#allocation8 + $0x388]]
    %v388 = vstv %s387
    %v389 = vsel %vm365, %v388, %v352
    %s390 = sld [smem:[#allocation8 + $0x408]]
    %v391 = vstv %s390
    %v392 = vsel %vm365, %v391, %v355
    %s393 = sld [smem:[#allocation8 + $0x488]]
    %v394 = vstv %s393
    %v395 = vsel %vm365, %v394, %v358
    %s396 = sld [smem:[#allocation8 + $0x508]]
    %v397 = vstv %s396
    %v398 = vsel %vm365, %v397, %v361
    %s399 = sld [smem:[#allocation8 + $0x588]]
    %v400 = vstv %s399
    %v401 = vsel %vm365, %v400, %v364
    %vm402 = vcmp.eq.s32.totalorder %v54, 9
    %s403 = sld [smem:[#allocation8 + $0x9]]
    %v404 = vstv %s403
    %v405 = vsel %vm402, %v404, %v368
    %s406 = sld [smem:[#allocation8 + $0x89]]
    %v407 = vstv %s406
    %v408 = vsel %vm402, %v407, %v371
    %s409 = sld [smem:[#allocation8 + $0x109]]
    %v410 = vstv %s409
    %v411 = vsel %vm402, %v410, %v374
    %s412 = sld [smem:[#allocation8 + $0x189]]
    %v413 = vstv %s412
    %v414 = vsel %vm402, %v413, %v377
    %s415 = sld [smem:[#allocation8 + $0x209]]
    %v416 = vstv %s415
    %v417 = vsel %vm402, %v416, %v380
    %s418 = sld [smem:[#allocation8 + $0x289]]
    %v419 = vstv %s418
    %v420 = vsel %vm402, %v419, %v383
    %s421 = sld [smem:[#allocation8 + $0x309]]
    %v422 = vstv %s421
    %v423 = vsel %vm402, %v422, %v386
    %s424 = sld [smem:[#allocation8 + $0x389]]
    %v425 = vstv %s424
    %v426 = vsel %vm402, %v425, %v389
    %s427 = sld [smem:[#allocation8 + $0x409]]
    %v428 = vstv %s427
    %v429 = vsel %vm402, %v428, %v392
    %s430 = sld [smem:[#allocation8 + $0x489]]
    %v431 = vstv %s430
    %v432 = vsel %vm402, %v431, %v395
    %s433 = sld [smem:[#allocation8 + $0x509]]
    %v434 = vstv %s433
    %v435 = vsel %vm402, %v434, %v398
    %s436 = sld [smem:[#allocation8 + $0x589]]
    %v437 = vstv %s436
    %v438 = vsel %vm402, %v437, %v401
    %vm439 = vcmp.eq.s32.totalorder %v54, 10
    %s440 = sld [smem:[#allocation8 + $0xa]]
    %v441 = vstv %s440
    %v442 = vsel %vm439, %v441, %v405
    %s443 = sld [smem:[#allocation8 + $0x8a]]
    %v444 = vstv %s443
    %v445 = vsel %vm439, %v444, %v408
    %s446 = sld [smem:[#allocation8 + $0x10a]]
    %v447 = vstv %s446
    %v448 = vsel %vm439, %v447, %v411
    %s449 = sld [smem:[#allocation8 + $0x18a]]
    %v450 = vstv %s449
    %v451 = vsel %vm439, %v450, %v414
    %s452 = sld [smem:[#allocation8 + $0x20a]]
    %v453 = vstv %s452
    %v454 = vsel %vm439, %v453, %v417
    %s455 = sld [smem:[#allocation8 + $0x28a]]
    %v456 = vstv %s455
    %v457 = vsel %vm439, %v456, %v420
    %s458 = sld [smem:[#allocation8 + $0x30a]]
    %v459 = vstv %s458
    %v460 = vsel %vm439, %v459, %v423
    %s461 = sld [smem:[#allocation8 + $0x38a]]
    %v462 = vstv %s461
    %v463 = vsel %vm439, %v462, %v426
    %s464 = sld [smem:[#allocation8 + $0x40a]]
    %v465 = vstv %s464
    %v466 = vsel %vm439, %v465, %v429
    %s467 = sld [smem:[#allocation8 + $0x48a]]
    %v468 = vstv %s467
    %v469 = vsel %vm439, %v468, %v432
    %s470 = sld [smem:[#allocation8 + $0x50a]]
    %v471 = vstv %s470
    %v472 = vsel %vm439, %v471, %v435
    %s473 = sld [smem:[#allocation8 + $0x58a]]
    %v474 = vstv %s473
    %v475 = vsel %vm439, %v474, %v438
    %vm476 = vcmp.eq.s32.totalorder %v54, 11
    %s477 = sld [smem:[#allocation8 + $0xb]]
    %v478 = vstv %s477
    %v479 = vsel %vm476, %v478, %v442
    %s480 = sld [smem:[#allocation8 + $0x8b]]
    %v481 = vstv %s480
    %v482 = vsel %vm476, %v481, %v445
    %s483 = sld [smem:[#allocation8 + $0x10b]]
    %v484 = vstv %s483
    %v485 = vsel %vm476, %v484, %v448
    %s486 = sld [smem:[#allocation8 + $0x18b]]
    %v487 = vstv %s486
    %v488 = vsel %vm476, %v487, %v451
    %s489 = sld [smem:[#allocation8 + $0x20b]]
    %v490 = vstv %s489
    %v491 = vsel %vm476, %v490, %v454
    %s492 = sld [smem:[#allocation8 + $0x28b]]
    %v493 = vstv %s492
    %v494 = vsel %vm476, %v493, %v457
    %s495 = sld [smem:[#allocation8 + $0x30b]]
    %v496 = vstv %s495
    %v497 = vsel %vm476, %v496, %v460
    %s498 = sld [smem:[#allocation8 + $0x38b]]
    %v499 = vstv %s498
    %v500 = vsel %vm476, %v499, %v463
    %s501 = sld [smem:[#allocation8 + $0x40b]]
    %v502 = vstv %s501
    %v503 = vsel %vm476, %v502, %v466
    %s504 = sld [smem:[#allocation8 + $0x48b]]
    %v505 = vstv %s504
    %v506 = vsel %vm476, %v505, %v469
    %s507 = sld [smem:[#allocation8 + $0x50b]]
    %v508 = vstv %s507
    %v509 = vsel %vm476, %v508, %v472
    %s510 = sld [smem:[#allocation8 + $0x58b]]
    %v511 = vstv %s510
    %v512 = vsel %vm476, %v511, %v475
    %vm513 = vcmp.eq.s32.totalorder %v54, 12
    %s514 = sld [smem:[#allocation8 + $0xc]]
    %v515 = vstv %s514
    %v516 = vsel %vm513, %v515, %v479
    %s517 = sld [smem:[#allocation8 + $0x8c]]
    %v518 = vstv %s517
    %v519 = vsel %vm513, %v518, %v482
    %s520 = sld [smem:[#allocation8 + $0x10c]]
    %v521 = vstv %s520
    %v522 = vsel %vm513, %v521, %v485
    %s523 = sld [smem:[#allocation8 + $0x18c]]
    %v524 = vstv %s523
    %v525 = vsel %vm513, %v524, %v488
    %s526 = sld [smem:[#allocation8 + $0x20c]]
    %v527 = vstv %s526
    %v528 = vsel %vm513, %v527, %v491
    %s529 = sld [smem:[#allocation8 + $0x28c]]
    %v530 = vstv %s529
    %v531 = vsel %vm513, %v530, %v494
    %s532 = sld [smem:[#allocation8 + $0x30c]]
    %v533 = vstv %s532
    %v534 = vsel %vm513, %v533, %v497
    %s535 = sld [smem:[#allocation8 + $0x38c]]
    %v536 = vstv %s535
    %v537 = vsel %vm513, %v536, %v500
    %s538 = sld [smem:[#allocation8 + $0x40c]]
    %v539 = vstv %s538
    %v540 = vsel %vm513, %v539, %v503
    %s541 = sld [smem:[#allocation8 + $0x48c]]
    %v542 = vstv %s541
    %v543 = vsel %vm513, %v542, %v506
    %s544 = sld [smem:[#allocation8 + $0x50c]]
    %v545 = vstv %s544
    %v546 = vsel %vm513, %v545, %v509
    %s547 = sld [smem:[#allocation8 + $0x58c]]
    %v548 = vstv %s547
    %v549 = vsel %vm513, %v548, %v512
    %vm550 = vcmp.eq.s32.totalorder %v54, 13
    %s551 = sld [smem:[#allocation8 + $0xd]]
    %v552 = vstv %s551
    %v553 = vsel %vm550, %v552, %v516
    %s554 = sld [smem:[#allocation8 + $0x8d]]
    %v555 = vstv %s554
    %v556 = vsel %vm550, %v555, %v519
    %s557 = sld [smem:[#allocation8 + $0x10d]]
    %v558 = vstv %s557
    %v559 = vsel %vm550, %v558, %v522
    %s560 = sld [smem:[#allocation8 + $0x18d]]
    %v561 = vstv %s560
    %v562 = vsel %vm550, %v561, %v525
    %s563 = sld [smem:[#allocation8 + $0x20d]]
    %v564 = vstv %s563
    %v565 = vsel %vm550, %v564, %v528
    %s566 = sld [smem:[#allocation8 + $0x28d]]
    %v567 = vstv %s566
    %v568 = vsel %vm550, %v567, %v531
    %s569 = sld [smem:[#allocation8 + $0x30d]]
    %v570 = vstv %s569
    %v571 = vsel %vm550, %v570, %v534
    %s572 = sld [smem:[#allocation8 + $0x38d]]
    %v573 = vstv %s572
    %v574 = vsel %vm550, %v573, %v537
    %s575 = sld [smem:[#allocation8 + $0x40d]]
    %v576 = vstv %s575
    %v577 = vsel %vm550, %v576, %v540
    %s578 = sld [smem:[#allocation8 + $0x48d]]
    %v579 = vstv %s578
    %v580 = vsel %vm550, %v579, %v543
    %s581 = sld [smem:[#allocation8 + $0x50d]]
    %v582 = vstv %s581
    %v583 = vsel %vm550, %v582, %v546
    %s584 = sld [smem:[#allocation8 + $0x58d]]
    %v585 = vstv %s584
    %v586 = vsel %vm550, %v585, %v549
    %vm587 = vcmp.eq.s32.totalorder %v54, 14
    %s588 = sld [smem:[#allocation8 + $0xe]]
    %v589 = vstv %s588
    %v590 = vsel %vm587, %v589, %v553
    %s591 = sld [smem:[#allocation8 + $0x8e]]
    %v592 = vstv %s591
    %v593 = vsel %vm587, %v592, %v556
    %s594 = sld [smem:[#allocation8 + $0x10e]]
    %v595 = vstv %s594
    %v596 = vsel %vm587, %v595, %v559
    %s597 = sld [smem:[#allocation8 + $0x18e]]
    %v598 = vstv %s597
    %v599 = vsel %vm587, %v598, %v562
    %s600 = sld [smem:[#allocation8 + $0x20e]]
    %v601 = vstv %s600
    %v602 = vsel %vm587, %v601, %v565
    %s603 = sld [smem:[#allocation8 + $0x28e]]
    %v604 = vstv %s603
    %v605 = vsel %vm587, %v604, %v568
    %s606 = sld [smem:[#allocation8 + $0x30e]]
    %v607 = vstv %s606
    %v608 = vsel %vm587, %v607, %v571
    %s609 = sld [smem:[#allocation8 + $0x38e]]
    %v610 = vstv %s609
    %v611 = vsel %vm587, %v610, %v574
    %s612 = sld [smem:[#allocation8 + $0x40e]]
    %v613 = vstv %s612
    %v614 = vsel %vm587, %v613, %v577
    %s615 = sld [smem:[#allocation8 + $0x48e]]
    %v616 = vstv %s615
    %v617 = vsel %vm587, %v616, %v580
    %s618 = sld [smem:[#allocation8 + $0x50e]]
    %v619 = vstv %s618
    %v620 = vsel %vm587, %v619, %v583
    %s621 = sld [smem:[#allocation8 + $0x58e]]
    %v622 = vstv %s621
    %v623 = vsel %vm587, %v622, %v586
    %vm624 = vcmp.eq.s32.totalorder %v54, 15
    %s625 = sld [smem:[#allocation8 + $0xf]]
    %v626 = vstv %s625
    %v627 = vsel %vm624, %v626, %v590
    %s628 = sld [smem:[#allocation8 + $0x8f]]
    %v629 = vstv %s628
    %v630 = vsel %vm624, %v629, %v593
    %s631 = sld [smem:[#allocation8 + $0x10f]]
    %v632 = vstv %s631
    %v633 = vsel %vm624, %v632, %v596
    %s634 = sld [smem:[#allocation8 + $0x18f]]
    %v635 = vstv %s634
    %v636 = vsel %vm624, %v635, %v599
    %s637 = sld [smem:[#allocation8 + $0x20f]]
    %v638 = vstv %s637
    %v639 = vsel %vm624, %v638, %v602
    %s640 = sld [smem:[#allocation8 + $0x28f]]
    %v641 = vstv %s640
    %v642 = vsel %vm624, %v641, %v605
    %s643 = sld [smem:[#allocation8 + $0x30f]]
    %v644 = vstv %s643
    %v645 = vsel %vm624, %v644, %v608
    %s646 = sld [smem:[#allocation8 + $0x38f]]
    %v647 = vstv %s646
    %v648 = vsel %vm624, %v647, %v611
    %s649 = sld [smem:[#allocation8 + $0x40f]]
    %v650 = vstv %s649
    %v651 = vsel %vm624, %v650, %v614
    %s652 = sld [smem:[#allocation8 + $0x48f]]
    %v653 = vstv %s652
    %v654 = vsel %vm624, %v653, %v617
    %s655 = sld [smem:[#allocation8 + $0x50f]]
    %v656 = vstv %s655
    %v657 = vsel %vm624, %v656, %v620
    %s658 = sld [smem:[#allocation8 + $0x58f]]
    %v659 = vstv %s658
    %v660 = vsel %vm624, %v659, %v623
    %vm661 = vcmp.eq.s32.totalorder %v54, 16
    %s662 = sld [smem:[#allocation8 + $0x10]]
    %v663 = vstv %s662
    %v664 = vsel %vm661, %v663, %v627
    %s665 = sld [smem:[#allocation8 + $0x90]]
    %v666 = vstv %s665
    %v667 = vsel %vm661, %v666, %v630
    %s668 = sld [smem:[#allocation8 + $0x110]]
    %v669 = vstv %s668
    %v670 = vsel %vm661, %v669, %v633
    %s671 = sld [smem:[#allocation8 + $0x190]]
    %v672 = vstv %s671
    %v673 = vsel %vm661, %v672, %v636
    %s674 = sld [smem:[#allocation8 + $0x210]]
    %v675 = vstv %s674
    %v676 = vsel %vm661, %v675, %v639
    %s677 = sld [smem:[#allocation8 + $0x290]]
    %v678 = vstv %s677
    %v679 = vsel %vm661, %v678, %v642
    %s680 = sld [smem:[#allocation8 + $0x310]]
    %v681 = vstv %s680
    %v682 = vsel %vm661, %v681, %v645
    %s683 = sld [smem:[#allocation8 + $0x390]]
    %v684 = vstv %s683
    %v685 = vsel %vm661, %v684, %v648
    %s686 = sld [smem:[#allocation8 + $0x410]]
    %v687 = vstv %s686
    %v688 = vsel %vm661, %v687, %v651
    %s689 = sld [smem:[#allocation8 + $0x490]]
    %v690 = vstv %s689
    %v691 = vsel %vm661, %v690, %v654
    %s692 = sld [smem:[#allocation8 + $0x510]]
    %v693 = vstv %s692
    %v694 = vsel %vm661, %v693, %v657
    %s695 = sld [smem:[#allocation8 + $0x590]]
    %v696 = vstv %s695
    %v697 = vsel %vm661, %v696, %v660
    %vm698 = vcmp.eq.s32.totalorder %v54, 17
    %s699 = sld [smem:[#allocation8 + $0x11]]
    %v700 = vstv %s699
    %v701 = vsel %vm698, %v700, %v664
    %s702 = sld [smem:[#allocation8 + $0x91]]
    %v703 = vstv %s702
    %v704 = vsel %vm698, %v703, %v667
    %s705 = sld [smem:[#allocation8 + $0x111]]
    %v706 = vstv %s705
    %v707 = vsel %vm698, %v706, %v670
    %s708 = sld [smem:[#allocation8 + $0x191]]
    %v709 = vstv %s708
    %v710 = vsel %vm698, %v709, %v673
    %s711 = sld [smem:[#allocation8 + $0x211]]
    %v712 = vstv %s711
    %v713 = vsel %vm698, %v712, %v676
    %s714 = sld [smem:[#allocation8 + $0x291]]
    %v715 = vstv %s714
    %v716 = vsel %vm698, %v715, %v679
    %s717 = sld [smem:[#allocation8 + $0x311]]
    %v718 = vstv %s717
    %v719 = vsel %vm698, %v718, %v682
    %s720 = sld [smem:[#allocation8 + $0x391]]
    %v721 = vstv %s720
    %v722 = vsel %vm698, %v721, %v685
    %s723 = sld [smem:[#allocation8 + $0x411]]
    %v724 = vstv %s723
    %v725 = vsel %vm698, %v724, %v688
    %s726 = sld [smem:[#allocation8 + $0x491]]
    %v727 = vstv %s726
    %v728 = vsel %vm698, %v727, %v691
    %s729 = sld [smem:[#allocation8 + $0x511]]
    %v730 = vstv %s729
    %v731 = vsel %vm698, %v730, %v694
    %s732 = sld [smem:[#allocation8 + $0x591]]
    %v733 = vstv %s732
    %v734 = vsel %vm698, %v733, %v697
    %vm735 = vcmp.eq.s32.totalorder %v54, 18
    %s736 = sld [smem:[#allocation8 + $0x12]]
    %v737 = vstv %s736
    %v738 = vsel %vm735, %v737, %v701
    %s739 = sld [smem:[#allocation8 + $0x92]]
    %v740 = vstv %s739
    %v741 = vsel %vm735, %v740, %v704
    %s742 = sld [smem:[#allocation8 + $0x112]]
    %v743 = vstv %s742
    %v744 = vsel %vm735, %v743, %v707
    %s745 = sld [smem:[#allocation8 + $0x192]]
    %v746 = vstv %s745
    %v747 = vsel %vm735, %v746, %v710
    %s748 = sld [smem:[#allocation8 + $0x212]]
    %v749 = vstv %s748
    %v750 = vsel %vm735, %v749, %v713
    %s751 = sld [smem:[#allocation8 + $0x292]]
    %v752 = vstv %s751
    %v753 = vsel %vm735, %v752, %v716
    %s754 = sld [smem:[#allocation8 + $0x312]]
    %v755 = vstv %s754
    %v756 = vsel %vm735, %v755, %v719
    %s757 = sld [smem:[#allocation8 + $0x392]]
    %v758 = vstv %s757
    %v759 = vsel %vm735, %v758, %v722
    %s760 = sld [smem:[#allocation8 + $0x412]]
    %v761 = vstv %s760
    %v762 = vsel %vm735, %v761, %v725
    %s763 = sld [smem:[#allocation8 + $0x492]]
    %v764 = vstv %s763
    %v765 = vsel %vm735, %v764, %v728
    %s766 = sld [smem:[#allocation8 + $0x512]]
    %v767 = vstv %s766
    %v768 = vsel %vm735, %v767, %v731
    %s769 = sld [smem:[#allocation8 + $0x592]]
    %v770 = vstv %s769
    %v771 = vsel %vm735, %v770, %v734
    %vm772 = vcmp.eq.s32.totalorder %v54, 19
    %s773 = sld [smem:[#allocation8 + $0x13]]
    %v774 = vstv %s773
    %v775 = vsel %vm772, %v774, %v738
    %s776 = sld [smem:[#allocation8 + $0x93]]
    %v777 = vstv %s776
    %v778 = vsel %vm772, %v777, %v741
    %s779 = sld [smem:[#allocation8 + $0x113]]
    %v780 = vstv %s779
    %v781 = vsel %vm772, %v780, %v744
    %s782 = sld [smem:[#allocation8 + $0x193]]
    %v783 = vstv %s782
    %v784 = vsel %vm772, %v783, %v747
    %s785 = sld [smem:[#allocation8 + $0x213]]
    %v786 = vstv %s785
    %v787 = vsel %vm772, %v786, %v750
    %s788 = sld [smem:[#allocation8 + $0x293]]
    %v789 = vstv %s788
    %v790 = vsel %vm772, %v789, %v753
    %s791 = sld [smem:[#allocation8 + $0x313]]
    %v792 = vstv %s791
    %v793 = vsel %vm772, %v792, %v756
    %s794 = sld [smem:[#allocation8 + $0x393]]
    %v795 = vstv %s794
    %v796 = vsel %vm772, %v795, %v759
    %s797 = sld [smem:[#allocation8 + $0x413]]
    %v798 = vstv %s797
    %v799 = vsel %vm772, %v798, %v762
    %s800 = sld [smem:[#allocation8 + $0x493]]
    %v801 = vstv %s800
    %v802 = vsel %vm772, %v801, %v765
    %s803 = sld [smem:[#allocation8 + $0x513]]
    %v804 = vstv %s803
    %v805 = vsel %vm772, %v804, %v768
    %s806 = sld [smem:[#allocation8 + $0x593]]
    %v807 = vstv %s806
    %v808 = vsel %vm772, %v807, %v771
    %vm809 = vcmp.eq.s32.totalorder %v54, 20
    %s810 = sld [smem:[#allocation8 + $0x14]]
    %v811 = vstv %s810
    %v812 = vsel %vm809, %v811, %v775
    %s813 = sld [smem:[#allocation8 + $0x94]]
    %v814 = vstv %s813
    %v815 = vsel %vm809, %v814, %v778
    %s816 = sld [smem:[#allocation8 + $0x114]]
    %v817 = vstv %s816
    %v818 = vsel %vm809, %v817, %v781
    %s819 = sld [smem:[#allocation8 + $0x194]]
    %v820 = vstv %s819
    %v821 = vsel %vm809, %v820, %v784
    %s822 = sld [smem:[#allocation8 + $0x214]]
    %v823 = vstv %s822
    %v824 = vsel %vm809, %v823, %v787
    %s825 = sld [smem:[#allocation8 + $0x294]]
    %v826 = vstv %s825
    %v827 = vsel %vm809, %v826, %v790
    %s828 = sld [smem:[#allocation8 + $0x314]]
    %v829 = vstv %s828
    %v830 = vsel %vm809, %v829, %v793
    %s831 = sld [smem:[#allocation8 + $0x394]]
    %v832 = vstv %s831
    %v833 = vsel %vm809, %v832, %v796
    %s834 = sld [smem:[#allocation8 + $0x414]]
    %v835 = vstv %s834
    %v836 = vsel %vm809, %v835, %v799
    %s837 = sld [smem:[#allocation8 + $0x494]]
    %v838 = vstv %s837
    %v839 = vsel %vm809, %v838, %v802
    %s840 = sld [smem:[#allocation8 + $0x514]]
    %v841 = vstv %s840
    %v842 = vsel %vm809, %v841, %v805
    %s843 = sld [smem:[#allocation8 + $0x594]]
    %v844 = vstv %s843
    %v845 = vsel %vm809, %v844, %v808
    %vm846 = vcmp.eq.s32.totalorder %v54, 21
    %s847 = sld [smem:[#allocation8 + $0x15]]
    %v848 = vstv %s847
    %v849 = vsel %vm846, %v848, %v812
    %s850 = sld [smem:[#allocation8 + $0x95]]
    %v851 = vstv %s850
    %v852 = vsel %vm846, %v851, %v815
    %s853 = sld [smem:[#allocation8 + $0x115]]
    %v854 = vstv %s853
    %v855 = vsel %vm846, %v854, %v818
    %s856 = sld [smem:[#allocation8 + $0x195]]
    %v857 = vstv %s856
    %v858 = vsel %vm846, %v857, %v821
    %s859 = sld [smem:[#allocation8 + $0x215]]
    %v860 = vstv %s859
    %v861 = vsel %vm846, %v860, %v824
    %s862 = sld [smem:[#allocation8 + $0x295]]
    %v863 = vstv %s862
    %v864 = vsel %vm846, %v863, %v827
    %s865 = sld [smem:[#allocation8 + $0x315]]
    %v866 = vstv %s865
    %v867 = vsel %vm846, %v866, %v830
    %s868 = sld [smem:[#allocation8 + $0x395]]
    %v869 = vstv %s868
    %v870 = vsel %vm846, %v869, %v833
    %s871 = sld [smem:[#allocation8 + $0x415]]
    %v872 = vstv %s871
    %v873 = vsel %vm846, %v872, %v836
    %s874 = sld [smem:[#allocation8 + $0x495]]
    %v875 = vstv %s874
    %v876 = vsel %vm846, %v875, %v839
    %s877 = sld [smem:[#allocation8 + $0x515]]
    %v878 = vstv %s877
    %v879 = vsel %vm846, %v878, %v842
    %s880 = sld [smem:[#allocation8 + $0x595]]
    %v881 = vstv %s880
    %v882 = vsel %vm846, %v881, %v845
    %vm883 = vcmp.eq.s32.totalorder %v54, 22
    %s884 = sld [smem:[#allocation8 + $0x16]]
    %v885 = vstv %s884
    %v886 = vsel %vm883, %v885, %v849
    %s887 = sld [smem:[#allocation8 + $0x96]]
    %v888 = vstv %s887
    %v889 = vsel %vm883, %v888, %v852
    %s890 = sld [smem:[#allocation8 + $0x116]]
    %v891 = vstv %s890
    %v892 = vsel %vm883, %v891, %v855
    %s893 = sld [smem:[#allocation8 + $0x196]]
    %v894 = vstv %s893
    %v895 = vsel %vm883, %v894, %v858
    %s896 = sld [smem:[#allocation8 + $0x216]]
    %v897 = vstv %s896
    %v898 = vsel %vm883, %v897, %v861
    %s899 = sld [smem:[#allocation8 + $0x296]]
    %v900 = vstv %s899
    %v901 = vsel %vm883, %v900, %v864
    %s902 = sld [smem:[#allocation8 + $0x316]]
    %v903 = vstv %s902
    %v904 = vsel %vm883, %v903, %v867
    %s905 = sld [smem:[#allocation8 + $0x396]]
    %v906 = vstv %s905
    %v907 = vsel %vm883, %v906, %v870
    %s908 = sld [smem:[#allocation8 + $0x416]]
    %v909 = vstv %s908
    %v910 = vsel %vm883, %v909, %v873
    %s911 = sld [smem:[#allocation8 + $0x496]]
    %v912 = vstv %s911
    %v913 = vsel %vm883, %v912, %v876
    %s914 = sld [smem:[#allocation8 + $0x516]]
    %v915 = vstv %s914
    %v916 = vsel %vm883, %v915, %v879
    %s917 = sld [smem:[#allocation8 + $0x596]]
    %v918 = vstv %s917
    %v919 = vsel %vm883, %v918, %v882
    %vm920 = vcmp.eq.s32.totalorder %v54, 23
    %s921 = sld [smem:[#allocation8 + $0x17]]
    %v922 = vstv %s921
    %v923 = vsel %vm920, %v922, %v886
    %s924 = sld [smem:[#allocation8 + $0x97]]
    %v925 = vstv %s924
    %v926 = vsel %vm920, %v925, %v889
    %s927 = sld [smem:[#allocation8 + $0x117]]
    %v928 = vstv %s927
    %v929 = vsel %vm920, %v928, %v892
    %s930 = sld [smem:[#allocation8 + $0x197]]
    %v931 = vstv %s930
    %v932 = vsel %vm920, %v931, %v895
    %s933 = sld [smem:[#allocation8 + $0x217]]
    %v934 = vstv %s933
    %v935 = vsel %vm920, %v934, %v898
    %s936 = sld [smem:[#allocation8 + $0x297]]
    %v937 = vstv %s936
    %v938 = vsel %vm920, %v937, %v901
    %s939 = sld [smem:[#allocation8 + $0x317]]
    %v940 = vstv %s939
    %v941 = vsel %vm920, %v940, %v904
    %s942 = sld [smem:[#allocation8 + $0x397]]
    %v943 = vstv %s942
    %v944 = vsel %vm920, %v943, %v907
    %s945 = sld [smem:[#allocation8 + $0x417]]
    %v946 = vstv %s945
    %v947 = vsel %vm920, %v946, %v910
    %s948 = sld [smem:[#allocation8 + $0x497]]
    %v949 = vstv %s948
    %v950 = vsel %vm920, %v949, %v913
    %s951 = sld [smem:[#allocation8 + $0x517]]
    %v952 = vstv %s951
    %v953 = vsel %vm920, %v952, %v916
    %s954 = sld [smem:[#allocation8 + $0x597]]
    %v955 = vstv %s954
    %v956 = vsel %vm920, %v955, %v919
    %vm957 = vcmp.eq.s32.totalorder %v54, 24
    %s958 = sld [smem:[#allocation8 + $0x18]]
    %v959 = vstv %s958
    %v960 = vsel %vm957, %v959, %v923
    %s961 = sld [smem:[#allocation8 + $0x98]]
    %v962 = vstv %s961
    %v963 = vsel %vm957, %v962, %v926
    %s964 = sld [smem:[#allocation8 + $0x118]]
    %v965 = vstv %s964
    %v966 = vsel %vm957, %v965, %v929
    %s967 = sld [smem:[#allocation8 + $0x198]]
    %v968 = vstv %s967
    %v969 = vsel %vm957, %v968, %v932
    %s970 = sld [smem:[#allocation8 + $0x218]]
    %v971 = vstv %s970
    %v972 = vsel %vm957, %v971, %v935
    %s973 = sld [smem:[#allocation8 + $0x298]]
    %v974 = vstv %s973
    %v975 = vsel %vm957, %v974, %v938
    %s976 = sld [smem:[#allocation8 + $0x318]]
    %v977 = vstv %s976
    %v978 = vsel %vm957, %v977, %v941
    %s979 = sld [smem:[#allocation8 + $0x398]]
    %v980 = vstv %s979
    %v981 = vsel %vm957, %v980, %v944
    %s982 = sld [smem:[#allocation8 + $0x418]]
    %v983 = vstv %s982
    %v984 = vsel %vm957, %v983, %v947
    %s985 = sld [smem:[#allocation8 + $0x498]]
    %v986 = vstv %s985
    %v987 = vsel %vm957, %v986, %v950
    %s988 = sld [smem:[#allocation8 + $0x518]]
    %v989 = vstv %s988
    %v990 = vsel %vm957, %v989, %v953
    %s991 = sld [smem:[#allocation8 + $0x598]]
    %v992 = vstv %s991
    %v993 = vsel %vm957, %v992, %v956
    %vm994 = vcmp.eq.s32.totalorder %v54, 25
    %s995 = sld [smem:[#allocation8 + $0x19]]
    %v996 = vstv %s995
    %v997 = vsel %vm994, %v996, %v960
    %s998 = sld [smem:[#allocation8 + $0x99]]
    %v999 = vstv %s998
    %v1000 = vsel %vm994, %v999, %v963
    %s1001 = sld [smem:[#allocation8 + $0x119]]
    %v1002 = vstv %s1001
    %v1003 = vsel %vm994, %v1002, %v966
    %s1004 = sld [smem:[#allocation8 + $0x199]]
    %v1005 = vstv %s1004
    %v1006 = vsel %vm994, %v1005, %v969
    %s1007 = sld [smem:[#allocation8 + $0x219]]
    %v1008 = vstv %s1007
    %v1009 = vsel %vm994, %v1008, %v972
    %s1010 = sld [smem:[#allocation8 + $0x299]]
    %v1011 = vstv %s1010
    %v1012 = vsel %vm994, %v1011, %v975
    %s1013 = sld [smem:[#allocation8 + $0x319]]
    %v1014 = vstv %s1013
    %v1015 = vsel %vm994, %v1014, %v978
    %s1016 = sld [smem:[#allocation8 + $0x399]]
    %v1017 = vstv %s1016
    %v1018 = vsel %vm994, %v1017, %v981
    %s1019 = sld [smem:[#allocation8 + $0x419]]
    %v1020 = vstv %s1019
    %v1021 = vsel %vm994, %v1020, %v984
    %s1022 = sld [smem:[#allocation8 + $0x499]]
    %v1023 = vstv %s1022
    %v1024 = vsel %vm994, %v1023, %v987
    %s1025 = sld [smem:[#allocation8 + $0x519]]
    %v1026 = vstv %s1025
    %v1027 = vsel %vm994, %v1026, %v990
    %s1028 = sld [smem:[#allocation8 + $0x599]]
    %v1029 = vstv %s1028
    %v1030 = vsel %vm994, %v1029, %v993
    %vm1031 = vcmp.eq.s32.totalorder %v54, 26
    %s1032 = sld [smem:[#allocation8 + $0x1a]]
    %v1033 = vstv %s1032
    %v1034 = vsel %vm1031, %v1033, %v997
    %s1035 = sld [smem:[#allocation8 + $0x9a]]
    %v1036 = vstv %s1035
    %v1037 = vsel %vm1031, %v1036, %v1000
    %s1038 = sld [smem:[#allocation8 + $0x11a]]
    %v1039 = vstv %s1038
    %v1040 = vsel %vm1031, %v1039, %v1003
    %s1041 = sld [smem:[#allocation8 + $0x19a]]
    %v1042 = vstv %s1041
    %v1043 = vsel %vm1031, %v1042, %v1006
    %s1044 = sld [smem:[#allocation8 + $0x21a]]
    %v1045 = vstv %s1044
    %v1046 = vsel %vm1031, %v1045, %v1009
    %s1047 = sld [smem:[#allocation8 + $0x29a]]
    %v1048 = vstv %s1047
    %v1049 = vsel %vm1031, %v1048, %v1012
    %s1050 = sld [smem:[#allocation8 + $0x31a]]
    %v1051 = vstv %s1050
    %v1052 = vsel %vm1031, %v1051, %v1015
    %s1053 = sld [smem:[#allocation8 + $0x39a]]
    %v1054 = vstv %s1053
    %v1055 = vsel %vm1031, %v1054, %v1018
    %s1056 = sld [smem:[#allocation8 + $0x41a]]
    %v1057 = vstv %s1056
    %v1058 = vsel %vm1031, %v1057, %v1021
    %s1059 = sld [smem:[#allocation8 + $0x49a]]
    %v1060 = vstv %s1059
    %v1061 = vsel %vm1031, %v1060, %v1024
    %s1062 = sld [smem:[#allocation8 + $0x51a]]
    %v1063 = vstv %s1062
    %v1064 = vsel %vm1031, %v1063, %v1027
    %s1065 = sld [smem:[#allocation8 + $0x59a]]
    %v1066 = vstv %s1065
    %v1067 = vsel %vm1031, %v1066, %v1030
    %vm1068 = vcmp.eq.s32.totalorder %v54, 27
    %s1069 = sld [smem:[#allocation8 + $0x1b]]
    %v1070 = vstv %s1069
    %v1071 = vsel %vm1068, %v1070, %v1034
    %s1072 = sld [smem:[#allocation8 + $0x9b]]
    %v1073 = vstv %s1072
    %v1074 = vsel %vm1068, %v1073, %v1037
    %s1075 = sld [smem:[#allocation8 + $0x11b]]
    %v1076 = vstv %s1075
    %v1077 = vsel %vm1068, %v1076, %v1040
    %s1078 = sld [smem:[#allocation8 + $0x19b]]
    %v1079 = vstv %s1078
    %v1080 = vsel %vm1068, %v1079, %v1043
    %s1081 = sld [smem:[#allocation8 + $0x21b]]
    %v1082 = vstv %s1081
    %v1083 = vsel %vm1068, %v1082, %v1046
    %s1084 = sld [smem:[#allocation8 + $0x29b]]
    %v1085 = vstv %s1084
    %v1086 = vsel %vm1068, %v1085, %v1049
    %s1087 = sld [smem:[#allocation8 + $0x31b]]
    %v1088 = vstv %s1087
    %v1089 = vsel %vm1068, %v1088, %v1052
    %s1090 = sld [smem:[#allocation8 + $0x39b]]
    %v1091 = vstv %s1090
    %v1092 = vsel %vm1068, %v1091, %v1055
    %s1093 = sld [smem:[#allocation8 + $0x41b]]
    %v1094 = vstv %s1093
    %v1095 = vsel %vm1068, %v1094, %v1058
    %s1096 = sld [smem:[#allocation8 + $0x49b]]
    %v1097 = vstv %s1096
    %v1098 = vsel %vm1068, %v1097, %v1061
    %s1099 = sld [smem:[#allocation8 + $0x51b]]
    %v1100 = vstv %s1099
    %v1101 = vsel %vm1068, %v1100, %v1064
    %s1102 = sld [smem:[#allocation8 + $0x59b]]
    %v1103 = vstv %s1102
    %v1104 = vsel %vm1068, %v1103, %v1067
    %vm1105 = vcmp.eq.s32.totalorder %v54, 28
    %s1106 = sld [smem:[#allocation8 + $0x1c]]
    %v1107 = vstv %s1106
    %v1108 = vsel %vm1105, %v1107, %v1071
    %s1109 = sld [smem:[#allocation8 + $0x9c]]
    %v1110 = vstv %s1109
    %v1111 = vsel %vm1105, %v1110, %v1074
    %s1112 = sld [smem:[#allocation8 + $0x11c]]
    %v1113 = vstv %s1112
    %v1114 = vsel %vm1105, %v1113, %v1077
    %s1115 = sld [smem:[#allocation8 + $0x19c]]
    %v1116 = vstv %s1115
    %v1117 = vsel %vm1105, %v1116, %v1080
    %s1118 = sld [smem:[#allocation8 + $0x21c]]
    %v1119 = vstv %s1118
    %v1120 = vsel %vm1105, %v1119, %v1083
    %s1121 = sld [smem:[#allocation8 + $0x29c]]
    %v1122 = vstv %s1121
    %v1123 = vsel %vm1105, %v1122, %v1086
    %s1124 = sld [smem:[#allocation8 + $0x31c]]
    %v1125 = vstv %s1124
    %v1126 = vsel %vm1105, %v1125, %v1089
    %s1127 = sld [smem:[#allocation8 + $0x39c]]
    %v1128 = vstv %s1127
    %v1129 = vsel %vm1105, %v1128, %v1092
    %s1130 = sld [smem:[#allocation8 + $0x41c]]
    %v1131 = vstv %s1130
    %v1132 = vsel %vm1105, %v1131, %v1095
    %s1133 = sld [smem:[#allocation8 + $0x49c]]
    %v1134 = vstv %s1133
    %v1135 = vsel %vm1105, %v1134, %v1098
    %s1136 = sld [smem:[#allocation8 + $0x51c]]
    %v1137 = vstv %s1136
    %v1138 = vsel %vm1105, %v1137, %v1101
    %s1139 = sld [smem:[#allocation8 + $0x59c]]
    %v1140 = vstv %s1139
    %v1141 = vsel %vm1105, %v1140, %v1104
    %vm1142 = vcmp.eq.s32.totalorder %v54, 29
    %s1143 = sld [smem:[#allocation8 + $0x1d]]
    %v1144 = vstv %s1143
    %v1145 = vsel %vm1142, %v1144, %v1108
    %s1146 = sld [smem:[#allocation8 + $0x9d]]
    %v1147 = vstv %s1146
    %v1148 = vsel %vm1142, %v1147, %v1111
    %s1149 = sld [smem:[#allocation8 + $0x11d]]
    %v1150 = vstv %s1149
    %v1151 = vsel %vm1142, %v1150, %v1114
    %s1152 = sld [smem:[#allocation8 + $0x19d]]
    %v1153 = vstv %s1152
    %v1154 = vsel %vm1142, %v1153, %v1117
    %s1155 = sld [smem:[#allocation8 + $0x21d]]
    %v1156 = vstv %s1155
    %v1157 = vsel %vm1142, %v1156, %v1120
    %s1158 = sld [smem:[#allocation8 + $0x29d]]
    %v1159 = vstv %s1158
    %v1160 = vsel %vm1142, %v1159, %v1123
    %s1161 = sld [smem:[#allocation8 + $0x31d]]
    %v1162 = vstv %s1161
    %v1163 = vsel %vm1142, %v1162, %v1126
    %s1164 = sld [smem:[#allocation8 + $0x39d]]
    %v1165 = vstv %s1164
    %v1166 = vsel %vm1142, %v1165, %v1129
    %s1167 = sld [smem:[#allocation8 + $0x41d]]
    %v1168 = vstv %s1167
    %v1169 = vsel %vm1142, %v1168, %v1132
    %s1170 = sld [smem:[#allocation8 + $0x49d]]
    %v1171 = vstv %s1170
    %v1172 = vsel %vm1142, %v1171, %v1135
    %s1173 = sld [smem:[#allocation8 + $0x51d]]
    %v1174 = vstv %s1173
    %v1175 = vsel %vm1142, %v1174, %v1138
    %s1176 = sld [smem:[#allocation8 + $0x59d]]
    %v1177 = vstv %s1176
    %v1178 = vsel %vm1142, %v1177, %v1141
    %vm1179 = vcmp.eq.s32.totalorder %v54, 30
    %s1180 = sld [smem:[#allocation8 + $0x1e]]
    %v1181 = vstv %s1180
    %v1182 = vsel %vm1179, %v1181, %v1145
    %s1183 = sld [smem:[#allocation8 + $0x9e]]
    %v1184 = vstv %s1183
    %v1185 = vsel %vm1179, %v1184, %v1148
    %s1186 = sld [smem:[#allocation8 + $0x11e]]
    %v1187 = vstv %s1186
    %v1188 = vsel %vm1179, %v1187, %v1151
    %s1189 = sld [smem:[#allocation8 + $0x19e]]
    %v1190 = vstv %s1189
    %v1191 = vsel %vm1179, %v1190, %v1154
    %s1192 = sld [smem:[#allocation8 + $0x21e]]
    %v1193 = vstv %s1192
    %v1194 = vsel %vm1179, %v1193, %v1157
    %s1195 = sld [smem:[#allocation8 + $0x29e]]
    %v1196 = vstv %s1195
    %v1197 = vsel %vm1179, %v1196, %v1160
    %s1198 = sld [smem:[#allocation8 + $0x31e]]
    %v1199 = vstv %s1198
    %v1200 = vsel %vm1179, %v1199, %v1163
    %s1201 = sld [smem:[#allocation8 + $0x39e]]
    %v1202 = vstv %s1201
    %v1203 = vsel %vm1179, %v1202, %v1166
    %s1204 = sld [smem:[#allocation8 + $0x41e]]
    %v1205 = vstv %s1204
    %v1206 = vsel %vm1179, %v1205, %v1169
    %s1207 = sld [smem:[#allocation8 + $0x49e]]
    %v1208 = vstv %s1207
    %v1209 = vsel %vm1179, %v1208, %v1172
    %s1210 = sld [smem:[#allocation8 + $0x51e]]
    %v1211 = vstv %s1210
    %v1212 = vsel %vm1179, %v1211, %v1175
    %s1213 = sld [smem:[#allocation8 + $0x59e]]
    %v1214 = vstv %s1213
    %v1215 = vsel %vm1179, %v1214, %v1178
    %vm1216 = vcmp.eq.s32.totalorder %v54, 31
    %s1217 = sld [smem:[#allocation8 + $0x1f]]
    %v1218 = vstv %s1217
    %v1219 = vsel %vm1216, %v1218, %v1182
    %s1220 = sld [smem:[#allocation8 + $0x9f]]
    %v1221 = vstv %s1220
    %v1222 = vsel %vm1216, %v1221, %v1185
    %s1223 = sld [smem:[#allocation8 + $0x11f]]
    %v1224 = vstv %s1223
    %v1225 = vsel %vm1216, %v1224, %v1188
    %s1226 = sld [smem:[#allocation8 + $0x19f]]
    %v1227 = vstv %s1226
    %v1228 = vsel %vm1216, %v1227, %v1191
    %s1229 = sld [smem:[#allocation8 + $0x21f]]
    %v1230 = vstv %s1229
    %v1231 = vsel %vm1216, %v1230, %v1194
    %s1232 = sld [smem:[#allocation8 + $0x29f]]
    %v1233 = vstv %s1232
    %v1234 = vsel %vm1216, %v1233, %v1197
    %s1235 = sld [smem:[#allocation8 + $0x31f]]
    %v1236 = vstv %s1235
    %v1237 = vsel %vm1216, %v1236, %v1200
    %s1238 = sld [smem:[#allocation8 + $0x39f]]
    %v1239 = vstv %s1238
    %v1240 = vsel %vm1216, %v1239, %v1203
    %s1241 = sld [smem:[#allocation8 + $0x41f]]
    %v1242 = vstv %s1241
    %v1243 = vsel %vm1216, %v1242, %v1206
    %s1244 = sld [smem:[#allocation8 + $0x49f]]
    %v1245 = vstv %s1244
    %v1246 = vsel %vm1216, %v1245, %v1209
    %s1247 = sld [smem:[#allocation8 + $0x51f]]
    %v1248 = vstv %s1247
    %v1249 = vsel %vm1216, %v1248, %v1212
    %s1250 = sld [smem:[#allocation8 + $0x59f]]
    %v1251 = vstv %s1250
    %v1252 = vsel %vm1216, %v1251, %v1215
    %vm1253 = vcmp.eq.s32.totalorder %v54, 32
    %s1254 = sld [smem:[#allocation8 + $0x20]]
    %v1255 = vstv %s1254
    %v1256 = vsel %vm1253, %v1255, %v1219
    %s1257 = sld [smem:[#allocation8 + $0xa0]]
    %v1258 = vstv %s1257
    %v1259 = vsel %vm1253, %v1258, %v1222
    %s1260 = sld [smem:[#allocation8 + $0x120]]
    %v1261 = vstv %s1260
    %v1262 = vsel %vm1253, %v1261, %v1225
    %s1263 = sld [smem:[#allocation8 + $0x1a0]]
    %v1264 = vstv %s1263
    %v1265 = vsel %vm1253, %v1264, %v1228
    %s1266 = sld [smem:[#allocation8 + $0x220]]
    %v1267 = vstv %s1266
    %v1268 = vsel %vm1253, %v1267, %v1231
    %s1269 = sld [smem:[#allocation8 + $0x2a0]]
    %v1270 = vstv %s1269
    %v1271 = vsel %vm1253, %v1270, %v1234
    %s1272 = sld [smem:[#allocation8 + $0x320]]
    %v1273 = vstv %s1272
    %v1274 = vsel %vm1253, %v1273, %v1237
    %s1275 = sld [smem:[#allocation8 + $0x3a0]]
    %v1276 = vstv %s1275
    %v1277 = vsel %vm1253, %v1276, %v1240
    %s1278 = sld [smem:[#allocation8 + $0x420]]
    %v1279 = vstv %s1278
    %v1280 = vsel %vm1253, %v1279, %v1243
    %s1281 = sld [smem:[#allocation8 + $0x4a0]]
    %v1282 = vstv %s1281
    %v1283 = vsel %vm1253, %v1282, %v1246
    %s1284 = sld [smem:[#allocation8 + $0x520]]
    %v1285 = vstv %s1284
    %v1286 = vsel %vm1253, %v1285, %v1249
    %s1287 = sld [smem:[#allocation8 + $0x5a0]]
    %v1288 = vstv %s1287
    %v1289 = vsel %vm1253, %v1288, %v1252
    %vm1290 = vcmp.eq.s32.totalorder %v54, 33
    %s1291 = sld [smem:[#allocation8 + $0x21]]
    %v1292 = vstv %s1291
    %v1293 = vsel %vm1290, %v1292, %v1256
    %s1294 = sld [smem:[#allocation8 + $0xa1]]
    %v1295 = vstv %s1294
    %v1296 = vsel %vm1290, %v1295, %v1259
    %s1297 = sld [smem:[#allocation8 + $0x121]]
    %v1298 = vstv %s1297
    %v1299 = vsel %vm1290, %v1298, %v1262
    %s1300 = sld [smem:[#allocation8 + $0x1a1]]
    %v1301 = vstv %s1300
    %v1302 = vsel %vm1290, %v1301, %v1265
    %s1303 = sld [smem:[#allocation8 + $0x221]]
    %v1304 = vstv %s1303
    %v1305 = vsel %vm1290, %v1304, %v1268
    %s1306 = sld [smem:[#allocation8 + $0x2a1]]
    %v1307 = vstv %s1306
    %v1308 = vsel %vm1290, %v1307, %v1271
    %s1309 = sld [smem:[#allocation8 + $0x321]]
    %v1310 = vstv %s1309
    %v1311 = vsel %vm1290, %v1310, %v1274
    %s1312 = sld [smem:[#allocation8 + $0x3a1]]
    %v1313 = vstv %s1312
    %v1314 = vsel %vm1290, %v1313, %v1277
    %s1315 = sld [smem:[#allocation8 + $0x421]]
    %v1316 = vstv %s1315
    %v1317 = vsel %vm1290, %v1316, %v1280
    %s1318 = sld [smem:[#allocation8 + $0x4a1]]
    %v1319 = vstv %s1318
    %v1320 = vsel %vm1290, %v1319, %v1283
    %s1321 = sld [smem:[#allocation8 + $0x521]]
    %v1322 = vstv %s1321
    %v1323 = vsel %vm1290, %v1322, %v1286
    %s1324 = sld [smem:[#allocation8 + $0x5a1]]
    %v1325 = vstv %s1324
    %v1326 = vsel %vm1290, %v1325, %v1289
    %vm1327 = vcmp.eq.s32.totalorder %v54, 34
    %s1328 = sld [smem:[#allocation8 + $0x22]]
    %v1329 = vstv %s1328
    %v1330 = vsel %vm1327, %v1329, %v1293
    %s1331 = sld [smem:[#allocation8 + $0xa2]]
    %v1332 = vstv %s1331
    %v1333 = vsel %vm1327, %v1332, %v1296
    %s1334 = sld [smem:[#allocation8 + $0x122]]
    %v1335 = vstv %s1334
    %v1336 = vsel %vm1327, %v1335, %v1299
    %s1337 = sld [smem:[#allocation8 + $0x1a2]]
    %v1338 = vstv %s1337
    %v1339 = vsel %vm1327, %v1338, %v1302
    %s1340 = sld [smem:[#allocation8 + $0x222]]
    %v1341 = vstv %s1340
    %v1342 = vsel %vm1327, %v1341, %v1305
    %s1343 = sld [smem:[#allocation8 + $0x2a2]]
    %v1344 = vstv %s1343
    %v1345 = vsel %vm1327, %v1344, %v1308
    %s1346 = sld [smem:[#allocation8 + $0x322]]
    %v1347 = vstv %s1346
    %v1348 = vsel %vm1327, %v1347, %v1311
    %s1349 = sld [smem:[#allocation8 + $0x3a2]]
    %v1350 = vstv %s1349
    %v1351 = vsel %vm1327, %v1350, %v1314
    %s1352 = sld [smem:[#allocation8 + $0x422]]
    %v1353 = vstv %s1352
    %v1354 = vsel %vm1327, %v1353, %v1317
    %s1355 = sld [smem:[#allocation8 + $0x4a2]]
    %v1356 = vstv %s1355
    %v1357 = vsel %vm1327, %v1356, %v1320
    %s1358 = sld [smem:[#allocation8 + $0x522]]
    %v1359 = vstv %s1358
    %v1360 = vsel %vm1327, %v1359, %v1323
    %s1361 = sld [smem:[#allocation8 + $0x5a2]]
    %v1362 = vstv %s1361
    %v1363 = vsel %vm1327, %v1362, %v1326
    %vm1364 = vcmp.eq.s32.totalorder %v54, 35
    %s1365 = sld [smem:[#allocation8 + $0x23]]
    %v1366 = vstv %s1365
    %v1367 = vsel %vm1364, %v1366, %v1330
    %s1368 = sld [smem:[#allocation8 + $0xa3]]
    %v1369 = vstv %s1368
    %v1370 = vsel %vm1364, %v1369, %v1333
    %s1371 = sld [smem:[#allocation8 + $0x123]]
    %v1372 = vstv %s1371
    %v1373 = vsel %vm1364, %v1372, %v1336
    %s1374 = sld [smem:[#allocation8 + $0x1a3]]
    %v1375 = vstv %s1374
    %v1376 = vsel %vm1364, %v1375, %v1339
    %s1377 = sld [smem:[#allocation8 + $0x223]]
    %v1378 = vstv %s1377
    %v1379 = vsel %vm1364, %v1378, %v1342
    %s1380 = sld [smem:[#allocation8 + $0x2a3]]
    %v1381 = vstv %s1380
    %v1382 = vsel %vm1364, %v1381, %v1345
    %s1383 = sld [smem:[#allocation8 + $0x323]]
    %v1384 = vstv %s1383
    %v1385 = vsel %vm1364, %v1384, %v1348
    %s1386 = sld [smem:[#allocation8 + $0x3a3]]
    %v1387 = vstv %s1386
    %v1388 = vsel %vm1364, %v1387, %v1351
    %s1389 = sld [smem:[#allocation8 + $0x423]]
    %v1390 = vstv %s1389
    %v1391 = vsel %vm1364, %v1390, %v1354
    %s1392 = sld [smem:[#allocation8 + $0x4a3]]
    %v1393 = vstv %s1392
    %v1394 = vsel %vm1364, %v1393, %v1357
    %s1395 = sld [smem:[#allocation8 + $0x523]]
    %v1396 = vstv %s1395
    %v1397 = vsel %vm1364, %v1396, %v1360
    %s1398 = sld [smem:[#allocation8 + $0x5a3]]
    %v1399 = vstv %s1398
    %v1400 = vsel %vm1364, %v1399, %v1363
    %v1401 = vmul.f32 %v55, %v55
    %v1402 = vmul.f32 %v1401, %v55
    %v1403 = vmul.f32 %v1370, %v55
    %v1404 = vmul.f32 %v1382, %v55
    %v1405 = vadd.f32 %v1367, %v1403
    %v1406 = vadd.f32 %v1379, %v1404
    %v1407 = vmul.f32 %v1401, 0.5
    %v1408 = vmul.f32 %v1373, %v1407
    %v1409 = vmul.f32 %v1385, %v1407
    %v1410 = vadd.f32 %v1405, %v1408
    %v1411 = vadd.f32 %v1406, %v1409
    %v1412 = vmul.f32 %v1402, 0.16666667
    %v1413 = vmul.f32 %v1376, %v1412
    %v1414 = vmul.f32 %v1388, %v1412
    %v1415 = vadd.f32 %v1410, %v1413
    %v1416 = vadd.f32 %v1411, %v1414
    %v1417 = vadd.f32 %v1416, 1.0
    %v1418 = vsub.f32 0.0, %v1415
    %v1419 = vmul.f32 %v1418, 1.442695
    %v1420 = vpow.pop %v1419
    %v1421 = vsub.f32 %v1417, %v1420
    %v1422 = vmul.f32 %v57, %v1421
    %v1423 = vmul.f32 %v55, 1960.0
    %v1424 = vmul.f32 %v1423, 1.442695
    %v1425 = vpow.pop %v1424
    %v1426 = vsub.f32 %v1425, 1.0
    %v1427 = vmul.f32 %v1426, 0.034
    %v1428 = vmul.f32 %v1391, %v1427
    %v1429 = vmul.f32 %v1394, %v1427
    %v1430 = vmul.f32 %v1397, %v1427
    %v1431 = vmul.f32 %v1400, %v1427
    %vm1432 = vcmp.eq.f32.partialorder %v67, 0.0
    %vm1433 = vcmp.eq.f32.partialorder %v69, 0.0
    %v1434 = vmul.f32 %v1429, %v67
    %v1435 = vmul.f32 %v1429, %v69
    %v1436 = vsel %vm1432, 1.0, %v1434
    %v1437 = vsel %vm1433, 1.0, %v1435
    %v1438 = vrcp.pop %v1436
    %v1439 = vmul.f32 0.5, %v1438
    %v1440 = vrcp.pop %v1437
    %v1441 = vmul.f32 0.5, %v1440
    %v1442 = vmul.f32 %v1436, %v1436
    %v1443 = vmul.f32 %v1436, 2.0
    %v1444 = vsub.f32 %v1437, 1.0
    %v1445 = vmul.f32 %v1443, %v1444
    %v1446 = vsub.f32 %v1442, %v1445
    %v1447 = vadd.f32 %v1437, 1.0
    %v1448 = vmul.f32 %v1447, %v1447
    %v1449 = vadd.f32 %v1446, %v1448
    %v1450 = vrsqrt.pop %v1449
    %v1451 = vmul.f32 %v1449, %v1450
    %vm1452 = vcmp.eq.f32.partialorder %v1449, inf
    %v1453 = vsel %vm1452, %v1449, %v1451
    %vm1454 = vcmp.eq.f32.partialorder %v1449, 0.0
    %v1455 = vand.u32 %v1449, 2147483648
    %v1456 = vsel %vm1454, %v1455, %v1453
    %v1457 = vmul.f32 %v1437, %v1437
    %v1458 = vmul.f32 %v1437, 2.0
    %v1459 = vsub.f32 %v1436, 1.0
    %v1460 = vmul.f32 %v1458, %v1459
    %v1461 = vsub.f32 %v1457, %v1460
    %v1462 = vadd.f32 %v1436, 1.0
    %v1463 = vmul.f32 %v1462, %v1462
    %v1464 = vadd.f32 %v1461, %v1463
    %v1465 = vrsqrt.pop %v1464
    %v1466 = vmul.f32 %v1464, %v1465
    %vm1467 = vcmp.eq.f32.partialorder %v1464, inf
    %v1468 = vsel %vm1467, %v1464, %v1466
    %vm1469 = vcmp.eq.f32.partialorder %v1464, 0.0
    %v1470 = vand.u32 %v1464, 2147483648
    %v1471 = vsel %vm1469, %v1470, %v1468
    %v1472 = vsub.f32 %v1456, %v1435
    %v1473 = vsub.f32 %v1472, 1.0
    %v1474 = vmul.f32 %v1439, %v1473
    %v1475 = vadd.f32 %v1474, 0.5
    %v1476 = vsub.f32 %v1471, %v1434
    %v1477 = vsub.f32 %v1476, 1.0
    %v1478 = vmul.f32 %v1441, %v1477
    %v1479 = vadd.f32 %v1478, 0.5
    %v1480 = vmul.f32 %v1441, 2.0
    %v1481 = vsel %vm1432, %v1480, %v1475
    %v1482 = vsel %vm1433, 1.0, %v1481
    %v1483 = vmul.f32 %v1439, 2.0
    %v1484 = vsel %vm1433, %v1483, %v1479
    %v1485 = vsel %vm1432, 1.0, %v1484
    %vm1486 = vcmp.eq.f32.partialorder %v63, 0.0
    %vm1487 = vcmp.eq.f32.partialorder %v65, 0.0
    %v1488 = vmul.f32 %v1428, %v63
    %v1489 = vmul.f32 %v1428, %v65
    %v1490 = vsel %vm1486, 1.0, %v1488
    %v1491 = vsel %vm1487, 1.0, %v1489
    %v1492 = vrcp.pop %v1490
    %v1493 = vmul.f32 0.5, %v1492
    %v1494 = vrcp.pop %v1491
    %v1495 = vmul.f32 0.5, %v1494
    %v1496 = vmul.f32 %v1490, %v1490
    %v1497 = vmul.f32 %v1490, 2.0
    %v1498 = vsub.f32 %v1491, 1.0
    %v1499 = vmul.f32 %v1497, %v1498
    %v1500 = vsub.f32 %v1496, %v1499
    %v1501 = vadd.f32 %v1491, 1.0
    %v1502 = vmul.f32 %v1501, %v1501
    %v1503 = vadd.f32 %v1500, %v1502
    %v1504 = vrsqrt.pop %v1503
    %v1505 = vmul.f32 %v1503, %v1504
    %vm1506 = vcmp.eq.f32.partialorder %v1503, inf
    %v1507 = vsel %vm1506, %v1503, %v1505
    %vm1508 = vcmp.eq.f32.partialorder %v1503, 0.0
    %v1509 = vand.u32 %v1503, 2147483648
    %v1510 = vsel %vm1508, %v1509, %v1507
    %v1511 = vmul.f32 %v1491, %v1491
    %v1512 = vmul.f32 %v1491, 2.0
    %v1513 = vsub.f32 %v1490, 1.0
    %v1514 = vmul.f32 %v1512, %v1513
    %v1515 = vsub.f32 %v1511, %v1514
    %v1516 = vadd.f32 %v1490, 1.0
    %v1517 = vmul.f32 %v1516, %v1516
    %v1518 = vadd.f32 %v1515, %v1517
    %v1519 = vrsqrt.pop %v1518
    %v1520 = vmul.f32 %v1518, %v1519
    %vm1521 = vcmp.eq.f32.partialorder %v1518, inf
    %v1522 = vsel %vm1521, %v1518, %v1520
    %vm1523 = vcmp.eq.f32.partialorder %v1518, 0.0
    %v1524 = vand.u32 %v1518, 2147483648
    %v1525 = vsel %vm1523, %v1524, %v1522
    %v1526 = vsub.f32 %v1510, %v1489
    %v1527 = vsub.f32 %v1526, 1.0
    %v1528 = vmul.f32 %v1493, %v1527
    %v1529 = vadd.f32 %v1528, 0.5
    %v1530 = vsub.f32 %v1525, %v1488
    %v1531 = vsub.f32 %v1530, 1.0
    %v1532 = vmul.f32 %v1495, %v1531
    %v1533 = vadd.f32 %v1532, 0.5
    %v1534 = vmul.f32 %v1495, 2.0
    %v1535 = vsel %vm1486, %v1534, %v1529
    %v1536 = vsel %vm1487, 1.0, %v1535
    %v1537 = vmul.f32 %v1493, 2.0
    %v1538 = vsel %vm1487, %v1537, %v1533
    %v1539 = vsel %vm1486, 1.0, %v1538
    %v1540 = vmul.f32 %v1430, %v69
    %v1541 = vmul.f32 %v1540, %v1485
    %v1542 = vadd.f32 %v1541, 1.0
    %v1543 = vmul.f32 %v1542, %v1536
    %v1544 = vmul.f32 %v1431, %v67
    %v1545 = vmul.f32 %v1544, %v1482
    %v1546 = vadd.f32 %v1545, 1.0
    %v1547 = vmul.f32 %v1546, %v1539
    %vm1548 = vcmp.eq.f32.partialorder %v59, 0.0
    %v1549 = vsub.f32 %v1536, 1.0
    %v1550 = vmul.f32 %v1549, 0.5
    %v1551 = vlog2.pop %v1543
    %v1552 = vmul.f32 %v1551, 0.6931472
    %v1553 = vsub.f32 %v1550, %v1552
    %v1554 = vmul.f32 %v59, %v1553
    %v1555 = vsel %vm1548, 0.0, %v1554
    %vm1556 = vcmp.eq.f32.partialorder %v61, 0.0
    %v1557 = vsub.f32 %v1539, 1.0
    %v1558 = vmul.f32 %v1557, 0.5
    %v1559 = vlog2.pop %v1547
    %v1560 = vmul.f32 %v1559, 0.6931472
    %v1561 = vsub.f32 %v1558, %v1560
    %v1562 = vmul.f32 %v61, %v1561
    %v1563 = vsel %vm1556, 0.0, %v1562
    %v1564 = vsub.f32 1.0, %v1482
    %v1565 = vmul.f32 %v67, %v1564
    %v1566 = vmul.f32 %v1565, 0.5
    %v1567 = vsub.f32 1.0, %v1485
    %v1568 = vmul.f32 %v69, %v1567
    %v1569 = vmul.f32 %v1568, 0.5
    %v1570 = vadd.f32 %v1566, %v1569
    %v1571 = vmul.f32 %v57, %v1570
    %v1572 = vadd.f32 %v1555, %v1563
    %v1573 = vadd.f32 %v1572, %v1571
    %v1574 = vadd.f32 %v1573, %v1422
    %1575 = vst [vmem:[#allocation9] sm:$0xff] %v1574
    // Predicated region
    $region26: #{tpu_custom_call.1} parent=1 // pred_check
      _
    $region27: #{tpu_custom_call.1} parent=1 // pred_check_branch
      %1577 = sbr.rel (0) target = $region29
    $region28: #{tpu_custom_call.1} parent=1 // pred_region
      %s1579 = ssub.s32 128, 128
      %1580 = vsyncadd [#allocation4], %s1579
      %s1582 = sshll.u32 [#allocation9], 4
      %s1583 = int_to_ptr.vmem [resolvable:$true] %s1582
      %1585 = dma.vmem_to_hbm [thread:$0]  %s1583, 128, %s3, [#allocation4]
    $region29: #{tpu_custom_call.1} parent=1 // pred_fallthru
      _
    // Predicated region
    $region30: #{tpu_custom_call.1} parent=1 // pred_check
      _
    $region31: #{tpu_custom_call.1} parent=1 // pred_check_branch
      %1587 = sbr.rel (0) target = $region33
    $region32: #{tpu_custom_call.1} parent=1 // pred_region
      %1588 = dma.done [#allocation4], 128
    $region33: #{tpu_custom_call.1} parent=1 // pred_fallthru
      _
    %1589 = vsyncpa [#allocation3], 1
    %1590 = vsyncpa [#allocation7], 1
    %1591 = vsyncpa [#allocation4], 1
    %1592 = vsyncpa [#allocation5], 1

</llo_original>
